<compile_context>
chip_gen: v7x
topology: tpu7x:2x2x1
jax: 0.10.0
libtpu: 0.0.40
codegen_flags: <defaults>
</compile_context>

<pallas_src>
import functools

import jax
import jax.numpy as jnp
from jax.experimental import pallas as pl
from jax.experimental.pallas import tpu as pltpu


# --------------------------------------------------------------------------- #
# Kernels
# --------------------------------------------------------------------------- #
def _up_conv_kernel(x_body, x_top, x_bot, w_ref, b_ref, o_ref, win_ref, lhs_ref,
                    *, tr, wd, c, row_axis):
    """Fused nearest-2x upsample + 3x3 'same' conv for one (batch, row-tile) step.

    x_body : (1, tr, wd, c)   row tile of the (unpadded) input.
    x_top  : (1, 1, wd, c)    row above the tile (clamped at the top edge).
    x_bot  : (1, 1, wd, c)    row below the tile (clamped at the bottom edge).
    w_ref  : (4, 4c, c)       stacked phase weights, w_ref[py*2+px][(a*2+b)*c+ci, co].
    b_ref  : (1, c)           f32 bias.
    o_ref  : (1, tr, 2, wd, 2c)  out[2(r*tr+i)+py, 2j+px, co] lives at [0,i,py,j,px*c+co].
    win_ref: (tr+2, wd+2, c)  zero-padded input window (VMEM scratch).
    lhs_ref: (tr, wd, 4c)     stacked-tap LHS staging buffer (VMEM scratch).
    """
    ri = pl.program_id(row_axis)
    nr = pl.num_programs(row_axis)
    cdt = win_ref.dtype

    # ---- assemble the zero-padded (tr+2, wd+2, c) input window in VMEM ------
    win_ref[1:tr + 1, 1:wd + 1, :] = x_body[0].astype(cdt)
    zrow = jnp.zeros((wd, c), cdt)
    win_ref[0, 1:wd + 1, :] = jnp.where(ri == 0, zrow, x_top[0, 0].astype(cdt))
    win_ref[tr + 1, 1:wd + 1, :] = jnp.where(ri == nr - 1, zrow,
                                             x_bot[0, 0].astype(cdt))
    zcol = jnp.zeros((tr + 2, c), cdt)
    win_ref[:, 0, :] = zcol
    win_ref[:, wd + 1, :] = zcol

    bias = b_ref[...]                                            # (1, c) f32

    # ---- 4 stacked-tap matmuls, one per output phase (py, px) ---------------
    for py in range(2):
        for px in range(2):
            for a in range(2):
                for b in range(2):
                    k = a * 2 + b
                    lhs_ref[:, :, k * c:(k + 1) * c] = (
                        win_ref[py + a:py + a + tr, px + b:px + b + wd, :])
            res = jnp.dot(lhs_ref[...].reshape(tr * wd, 4 * c),
                          w_ref[py * 2 + px],
                          preferred_element_type=jnp.float32) + bias
            # (tr*wd, c) -> (tr, wd, c): leading-axis split, lane dim unchanged.
            o_ref[0, :, py, :, px * c:(px + 1) * c] = (
                res.reshape(tr, wd, c).astype(o_ref.dtype))


def _up_nearest_kernel(x_ref, o_ref, *, c):
    """Nearest-neighbour 2x upsample for one (batch, row-tile) step (no conv)."""
    xt = x_ref[0].astype(o_ref.dtype)                            # (tr, wd, c)
    for py in range(2):
        for px in range(2):
            o_ref[0, :, py, :, px * c:(px + 1) * c] = xt         # 4 slab stores


# --------------------------------------------------------------------------- #
# VMEM sizing helpers (generation-aware)
# --------------------------------------------------------------------------- #
def _vmem_capacity_bytes():
    try:
        return int(pltpu.get_tpu_info().vmem_capacity_bytes)
    except Exception:
        return 64 << 20        # conservative (v7x per-TC) fallback


def _pick_row_tile(h, per_row_bytes, fixed_bytes, budget_bytes, cap=256):
    """Largest row tile (divisor of h, <= cap) whose VMEM estimate fits the budget."""
    divs = [d for d in range(1, h + 1) if h % d == 0 and d <= cap] or [h]
    fitting = [d for d in divs if fixed_bytes + d * per_row_bytes <= budget_bytes]
    return max(fitting) if fitting else min(divs)


def _vmem_limit(est_bytes, cap_bytes):
    lim = est_bytes * 5 // 4 + (4 << 20)
    lim = max(lim, min(32 << 20, cap_bytes))
    return int(min(lim, cap_bytes))


# --------------------------------------------------------------------------- #
# Wrappers
# --------------------------------------------------------------------------- #
def upsample_nhwc(x_nhwc, weight=None, bias=None, *, with_conv=True,
                  use_bf16=False):
    """Nearest 2x upsample (+ optional 3x3 'same' conv). (N,H,W,C) -> (N,2H,2W,C)."""
    n, h, w, c = x_nhwc.shape
    db = x_nhwc.dtype.itemsize
    out5_shape = (n, h, 2, w, 2 * c)

    cap = _vmem_capacity_bytes()
    budget = (cap * 3) // 4        # ~96 MiB on v5e/v6e (128 MiB), ~48 MiB on v7x (64 MiB)

    if with_conv:
        assert weight is not None and bias is not None
        assert weight.shape == (c, c, 3, 3), weight.shape

        compute_dtype = jnp.bfloat16 if use_bf16 else x_nhwc.dtype
        cd = jnp.dtype(compute_dtype).itemsize

        # Collapse the 3x3-on-upsampled conv into per-output-phase 2x2 weights on
        # the zero-padded original input (computed in f32), then stack the 4 taps
        # along the contraction axis -> (4, 4C, C).
        w_khwc = jnp.transpose(weight, (2, 3, 1, 0)).astype(jnp.float32)  # (kH,kW,Ci,Co)
        rm = jnp.array([[[1., 0., 0.], [0., 1., 1.]],                     # phase 0
                        [[1., 1., 0.], [0., 0., 1.]]],                    # phase 1
                       dtype=jnp.float32)
        # Weff[py,px,a,b,ci,co] = sum_{dy,dx} rm[py,a,dy]*rm[px,b,dx]*W[dy,dx,ci,co]
        weff = jnp.einsum('pad,qbe,decf->pqabcf', rm, rm, w_khwc)         # (2,2,2,2,C,C)
        w4 = weff.reshape(4, 4 * c, c).astype(compute_dtype)              # (4, 4C, C)
        b1 = bias.reshape(1, c).astype(jnp.float32)

        # Per-row-of-tile VMEM estimate (double-buffered blocks + scratch + temps).
        per_row = (2 * w * c * db            # body input block (x2 buffers)
                   + 2 * 4 * w * c * db      # output block (x2 buffers)
                   + (w + 2) * c * cd        # window scratch
                   + 4 * w * c * cd          # stacked-tap LHS scratch
                   + 2 * w * c * 4)          # f32 matmul-result temporaries
        fixed = (2 * 2 * w * c * db          # top/bottom halo blocks (x2 buffers)
                 + 2 * (16 * c * c * cd + 4 * c)   # weights + bias (x2 buffers)
                 + 2 * (w + 2) * c * cd      # window halo rows
                 + (2 << 20))                # slack
        tr = _pick_row_tile(h, per_row, fixed, budget)
        r = h // tr

        # Megacore-friendly grid ordering: larger "parallel" axis first.
        if n >= r:
            grid = (n, r)
            row_axis = 1
            gsel = lambda g0, g1: (g0, g1)
        else:
            grid = (r, n)
            row_axis = 0
            gsel = lambda g0, g1: (g1, g0)

        def body_map(g0, g1):
            ni, ri = gsel(g0, g1)
            return (ni, ri, 0, 0)

        def top_map(g0, g1):
            ni, ri = gsel(g0, g1)
            return (ni, jnp.maximum(ri * tr - 1, 0), 0, 0)     # clamped; zeroed in-kernel

        def bot_map(g0, g1):
            ni, ri = gsel(g0, g1)
            return (ni, jnp.minimum(ri * tr + tr, h - 1), 0, 0)

        def out_map(g0, g1):
            ni, ri = gsel(g0, g1)
            return (ni, ri, 0, 0, 0)

        kernel = functools.partial(_up_conv_kernel, tr=tr, wd=w, c=c,
                                   row_axis=row_axis)
        out5 = pl.pallas_call(
            kernel,
            out_shape=jax.ShapeDtypeStruct(out5_shape, x_nhwc.dtype),
            grid=grid,
            in_specs=[
                pl.BlockSpec((1, tr, w, c), body_map),
                pl.BlockSpec((1, 1, w, c), top_map),
                pl.BlockSpec((1, 1, w, c), bot_map),
                pl.BlockSpec((4, 4 * c, c), lambda g0, g1: (0, 0, 0)),
                pl.BlockSpec((1, c), lambda g0, g1: (0, 0)),
            ],
            out_specs=pl.BlockSpec((1, tr, 2, w, 2 * c), out_map),
            scratch_shapes=[
                pltpu.VMEM((tr + 2, w + 2, c), compute_dtype),   # padded window
                pltpu.VMEM((tr, w, 4 * c), compute_dtype),       # stacked-tap LHS
            ],
            compiler_params=pltpu.CompilerParams(
                dimension_semantics=("parallel", "parallel"),
                vmem_limit_bytes=_vmem_limit(fixed + tr * per_row, budget)),
        )(x_nhwc, x_nhwc, x_nhwc, w4, b1)
    else:
        per_row = 2 * w * c * db + 2 * 4 * w * c * db + w * c * db
        fixed = 1 << 20
        tr = _pick_row_tile(h, per_row, fixed, budget)
        r = h // tr

        if n >= r:
            grid = (n, r)
            gsel = lambda g0, g1: (g0, g1)
        else:
            grid = (r, n)
            gsel = lambda g0, g1: (g1, g0)

        def in_map(g0, g1):
            ni, ri = gsel(g0, g1)
            return (ni, ri, 0, 0)

        def out_map(g0, g1):
            ni, ri = gsel(g0, g1)
            return (ni, ri, 0, 0, 0)

        kernel = functools.partial(_up_nearest_kernel, c=c)
        out5 = pl.pallas_call(
            kernel,
            out_shape=jax.ShapeDtypeStruct(out5_shape, x_nhwc.dtype),
            grid=grid,
            in_specs=[pl.BlockSpec((1, tr, w, c), in_map)],
            out_specs=pl.BlockSpec((1, tr, 2, w, 2 * c), out_map),
            compiler_params=pltpu.CompilerParams(
                dimension_semantics=("parallel", "parallel"),
                vmem_limit_bytes=_vmem_limit(fixed + tr * per_row, budget)),
        )(x_nhwc)

    # (N, H, 2, W, 2C) -> (N, 2H, 2W, C): merging (H,2)->2H and splitting
    # 2C->(2,C) next to W is a free row-major reshape (same flat bytes).
    return out5.reshape(n, 2 * h, 2 * w, c)


def upsample(x_nchw, weight=None, bias=None, *, with_conv=True, use_bf16=False):
    """PyTorch-layout wrapper: x (N, C, H, W) -> (N, C, 2H, 2W)."""
    x_nhwc = jnp.transpose(x_nchw, (0, 2, 3, 1))
    out = upsample_nhwc(x_nhwc, weight, bias, with_conv=with_conv,
                        use_bf16=use_bf16)
    return jnp.transpose(out, (0, 3, 1, 2))


# --------------------------------------------------------------------------- #
# Self-test
# --------------------------------------------------------------------------- #
if __name__ == "__main__":
    key = jax.random.PRNGKey(0)
    kx, kw, kb = jax.random.split(key, 3)

    N, C, H, W = 2, 4, 16, 16
    x = jax.random.normal(kx, (N, C, H, W), dtype=jnp.float32)
    # PyTorch Conv2d(C, C, 3) parameter shapes: weight (Cout, Cin, 3, 3), bias (C,).
    weight = jax.random.normal(kw, (C, C, 3, 3), dtype=jnp.float32) * 0.1
    bias = jax.random.normal(kb, (C,), dtype=jnp.float32) * 0.1

    # Reference: nearest 2x upsample (+ conv) in plain XLA.
    x_up = jnp.repeat(jnp.repeat(x, 2, axis=2), 2, axis=3)
    y_ref = jax.lax.conv_general_dilated(
        x_up, weight, window_strides=(1, 1), padding=((1, 1), (1, 1)),
        dimension_numbers=("NCHW", "OIHW", "NCHW"),
    ) + bias[None, :, None, None]

    # --- with_conv=True, exact f32 path ---
    y = jax.block_until_ready(upsample(x, weight, bias, with_conv=True))
    assert y.shape == (N, C, 2 * H, 2 * W), y.shape
    assert jnp.allclose(y, y_ref, atol=1e-4, rtol=1e-4), \
        float(jnp.abs(y - y_ref).max())

    # --- with_conv=True, bf16 MXU path (looser tolerance) ---
    y16 = jax.block_until_ready(upsample(x, weight, bias, with_conv=True,
                                         use_bf16=True))
    assert y16.shape == (N, C, 2 * H, 2 * W), y16.shape
    assert jnp.allclose(y16, y_ref, atol=0.15, rtol=0.1), \
        float(jnp.abs(y16 - y_ref).max())

    # --- with_conv=False path ---
    y2 = jax.block_until_ready(upsample(x, with_conv=False))
    assert y2.shape == (N, C, 2 * H, 2 * W), y2.shape
    assert jnp.allclose(y2, x_up, atol=1e-6, rtol=1e-6)

    print("KERNEL_OK")
</pallas_src>

<mosaic_0001>
module attributes {stable_mosaic.version = 11 : i64} {
  func.func @_up_conv_kernel(%arg0: i32, %arg1: i32, %arg2: memref<1x16x16x4xf32, #tpu.memory_space<vmem>>, %arg3: memref<1x1x16x4xf32, #tpu.memory_space<vmem>>, %arg4: memref<1x1x16x4xf32, #tpu.memory_space<vmem>>, %arg5: memref<4x16x4xf32, #tpu.memory_space<vmem>>, %arg6: memref<1x4xf32, #tpu.memory_space<vmem>>, %arg7: memref<1x16x2x16x8xf32, #tpu.memory_space<vmem>>, %arg8: memref<18x18x4xf32, #tpu.memory_space<vmem>>, %arg9: memref<16x16x16xf32, #tpu.memory_space<vmem>>) attributes {dimension_semantics = [#tpu.dimension_semantics<parallel>, #tpu.dimension_semantics<parallel>], iteration_bounds = array<i64: 2, 1>, scalar_prefetch = 0 : i64, scratch_operands = 2 : i64, tpu.core_type = #tpu.core_type<tc>, window_params = [{transform_indices = @transform_0, window_bounds = array<i64: 1, 16, 16, 4>}, {transform_indices = @transform_1, window_bounds = array<i64: 1, 1, 16, 4>}, {transform_indices = @transform_2, window_bounds = array<i64: 1, 1, 16, 4>}, {pipeline_mode = #tpu.pipeline_mode<synchronous>, transform_indices = @transform_3, window_bounds = array<i64: 4, 16, 4>}, {pipeline_mode = #tpu.pipeline_mode<synchronous>, transform_indices = @transform_4, window_bounds = array<i64: 1, 4>}, {transform_indices = @transform_5, window_bounds = array<i64: 1, 16, 2, 16, 8>}]} {
    %c0 = arith.constant 0 : index
    %c0_0 = arith.constant 0 : index
    %c0_1 = arith.constant 0 : index
    %c0_2 = arith.constant 0 : index
    %0 = vector.load %arg2[%c0, %c0_0, %c0_1, %c0_2] : memref<1x16x16x4xf32, #tpu.memory_space<vmem>>, vector<1x16x16x4xf32>
    %1 = vector.shape_cast %0 : vector<1x16x16x4xf32> to vector<16x16x4xf32>
    %c1 = arith.constant 1 : index
    %c1_3 = arith.constant 1 : index
    %c0_4 = arith.constant 0 : index
    %2 = vector.load %arg8[%c1, %c1_3, %c0_4] : memref<18x18x4xf32, #tpu.memory_space<vmem>>, vector<16x16x4xf32>
    tpu.vector_store %arg8[%c1, %c1_3, %c0_4], %1 {strides = array<i32>} : memref<18x18x4xf32, #tpu.memory_space<vmem>>, vector<16x16x4xf32>,
    %cst = arith.constant 0.000000e+00 : f32
    %3 = vector.broadcast %cst : f32 to vector<16x4xf32>
    %c0_i32 = arith.constant 0 : i32
    %4 = arith.cmpi eq, %arg1, %c0_i32 : i32
    %c0_5 = arith.constant 0 : index
    %c0_6 = arith.constant 0 : index
    %c0_7 = arith.constant 0 : index
    %c0_8 = arith.constant 0 : index
    %5 = vector.load %arg3[%c0_5, %c0_6, %c0_7, %c0_8] : memref<1x1x16x4xf32, #tpu.memory_space<vmem>>, vector<1x1x16x4xf32>
    %6 = vector.shape_cast %5 : vector<1x1x16x4xf32> to vector<16x4xf32>
    %7 = arith.select %4, %3, %6 : vector<16x4xf32>
    %c0_9 = arith.constant 0 : index
    %c1_10 = arith.constant 1 : index
    %c0_11 = arith.constant 0 : index
    %8 = vector.load %arg8[%c0_9, %c1_10, %c0_11] : memref<18x18x4xf32, #tpu.memory_space<vmem>>, vector<1x16x4xf32>
    %9 = vector.shape_cast %8 : vector<1x16x4xf32> to vector<16x4xf32>
    %10 = vector.shape_cast %7 : vector<16x4xf32> to vector<1x16x4xf32>
    tpu.vector_store %arg8[%c0_9, %c1_10, %c0_11], %10 {strides = array<i32>} : memref<18x18x4xf32, #tpu.memory_space<vmem>>, vector<1x16x4xf32>,
    %c0_i32_12 = arith.constant 0 : i32
    %11 = arith.cmpi eq, %arg1, %c0_i32_12 : i32
    %c0_13 = arith.constant 0 : index
    %c0_14 = arith.constant 0 : index
    %c0_15 = arith.constant 0 : index
    %c0_16 = arith.constant 0 : index
    %12 = vector.load %arg4[%c0_13, %c0_14, %c0_15, %c0_16] : memref<1x1x16x4xf32, #tpu.memory_space<vmem>>, vector<1x1x16x4xf32>
    %13 = vector.shape_cast %12 : vector<1x1x16x4xf32> to vector<16x4xf32>
    %14 = arith.select %11, %3, %13 : vector<16x4xf32>
    %c17 = arith.constant 17 : index
    %c1_17 = arith.constant 1 : index
    %c0_18 = arith.constant 0 : index
    %15 = vector.load %arg8[%c17, %c1_17, %c0_18] : memref<18x18x4xf32, #tpu.memory_space<vmem>>, vector<1x16x4xf32>
    %16 = vector.shape_cast %15 : vector<1x16x4xf32> to vector<16x4xf32>
    %17 = vector.shape_cast %14 : vector<16x4xf32> to vector<1x16x4xf32>
    tpu.vector_store %arg8[%c17, %c1_17, %c0_18], %17 {strides = array<i32>} : memref<18x18x4xf32, #tpu.memory_space<vmem>>, vector<1x16x4xf32>,
    %cst_19 = arith.constant 0.000000e+00 : f32
    %18 = vector.broadcast %cst_19 : f32 to vector<18x4xf32>
    %c0_20 = arith.constant 0 : index
    %c0_21 = arith.constant 0 : index
    %c0_22 = arith.constant 0 : index
    %19 = vector.load %arg8[%c0_20, %c0_21, %c0_22] : memref<18x18x4xf32, #tpu.memory_space<vmem>>, vector<18x1x4xf32>
    %20 = vector.shape_cast %19 : vector<18x1x4xf32> to vector<18x4xf32>
    %21 = vector.shape_cast %18 : vector<18x4xf32> to vector<18x1x4xf32>
    tpu.vector_store %arg8[%c0_20, %c0_21, %c0_22], %21 {strides = array<i32>} : memref<18x18x4xf32, #tpu.memory_space<vmem>>, vector<18x1x4xf32>,
    %c0_23 = arith.constant 0 : index
    %c17_24 = arith.constant 17 : index
    %c0_25 = arith.constant 0 : index
    %22 = vector.load %arg8[%c0_23, %c17_24, %c0_25] : memref<18x18x4xf32, #tpu.memory_space<vmem>>, vector<18x1x4xf32>
    %23 = vector.shape_cast %22 : vector<18x1x4xf32> to vector<18x4xf32>
    %24 = vector.shape_cast %18 : vector<18x4xf32> to vector<18x1x4xf32>
    tpu.vector_store %arg8[%c0_23, %c17_24, %c0_25], %24 {strides = array<i32>} : memref<18x18x4xf32, #tpu.memory_space<vmem>>, vector<18x1x4xf32>,
    %c0_26 = arith.constant 0 : index
    %c0_27 = arith.constant 0 : index
    %25 = vector.load %arg6[%c0_26, %c0_27] : memref<1x4xf32, #tpu.memory_space<vmem>>, vector<1x4xf32>
    %c0_28 = arith.constant 0 : index
    %c0_29 = arith.constant 0 : index
    %c0_30 = arith.constant 0 : index
    %26 = vector.load %arg8[%c0_28, %c0_29, %c0_30] : memref<18x18x4xf32, #tpu.memory_space<vmem>>, vector<16x16x4xf32>
    %c0_31 = arith.constant 0 : index
    %c0_32 = arith.constant 0 : index
    %c0_33 = arith.constant 0 : index
    %27 = vector.load %arg9[%c0_31, %c0_32, %c0_33] : memref<16x16x16xf32, #tpu.memory_space<vmem>>, vector<16x16x4xf32>
    tpu.vector_store %arg9[%c0_31, %c0_32, %c0_33], %26 {strides = array<i32>} : memref<16x16x16xf32, #tpu.memory_space<vmem>>, vector<16x16x4xf32>,
    %c0_34 = arith.constant 0 : index
    %c1_35 = arith.constant 1 : index
    %c0_36 = arith.constant 0 : index
    %28 = vector.load %arg8[%c0_34, %c1_35, %c0_36] : memref<18x18x4xf32, #tpu.memory_space<vmem>>, vector<16x16x4xf32>
    %c0_37 = arith.constant 0 : index
    %c0_38 = arith.constant 0 : index
    %c4 = arith.constant 4 : index
    %29 = vector.load %arg9[%c0_37, %c0_38, %c4] : memref<16x16x16xf32, #tpu.memory_space<vmem>>, vector<16x16x4xf32>
    tpu.vector_store %arg9[%c0_37, %c0_38, %c4], %28 {strides = array<i32>} : memref<16x16x16xf32, #tpu.memory_space<vmem>>, vector<16x16x4xf32>,
    %c1_39 = arith.constant 1 : index
    %c0_40 = arith.constant 0 : index
    %c0_41 = arith.constant 0 : index
    %30 = vector.load %arg8[%c1_39, %c0_40, %c0_41] : memref<18x18x4xf32, #tpu.memory_space<vmem>>, vector<16x16x4xf32>
    %c0_42 = arith.constant 0 : index
    %c0_43 = arith.constant 0 : index
    %c8 = arith.constant 8 : index
    %31 = vector.load %arg9[%c0_42, %c0_43, %c8] : memref<16x16x16xf32, #tpu.memory_space<vmem>>, vector<16x16x4xf32>
    tpu.vector_store %arg9[%c0_42, %c0_43, %c8], %30 {strides = array<i32>} : memref<16x16x16xf32, #tpu.memory_space<vmem>>, vector<16x16x4xf32>,
    %c1_44 = arith.constant 1 : index
    %c1_45 = arith.constant 1 : index
    %c0_46 = arith.constant 0 : index
    %32 = vector.load %arg8[%c1_44, %c1_45, %c0_46] : memref<18x18x4xf32, #tpu.memory_space<vmem>>, vector<16x16x4xf32>
    %c0_47 = arith.constant 0 : index
    %c0_48 = arith.constant 0 : index
    %c12 = arith.constant 12 : index
    %33 = vector.load %arg9[%c0_47, %c0_48, %c12] : memref<16x16x16xf32, #tpu.memory_space<vmem>>, vector<16x16x4xf32>
    tpu.vector_store %arg9[%c0_47, %c0_48, %c12], %32 {strides = array<i32>} : memref<16x16x16xf32, #tpu.memory_space<vmem>>, vector<16x16x4xf32>,
    %c0_49 = arith.constant 0 : index
    %c0_50 = arith.constant 0 : index
    %c0_51 = arith.constant 0 : index
    %34 = vector.load %arg9[%c0_49, %c0_50, %c0_51] : memref<16x16x16xf32, #tpu.memory_space<vmem>>, vector<16x16x16xf32>
    %35 = vector.shape_cast %34 : vector<16x16x16xf32> to vector<256x16xf32>
    %c0_52 = arith.constant 0 : index
    %c0_53 = arith.constant 0 : index
    %c0_54 = arith.constant 0 : index
    %36 = vector.load %arg5[%c0_52, %c0_53, %c0_54] : memref<4x16x4xf32, #tpu.memory_space<vmem>>, vector<1x16x4xf32>
    %37 = vector.shape_cast %36 : vector<1x16x4xf32> to vector<16x4xf32>
    %cst_55 = arith.constant dense<0.000000e+00> : vector<256x4xf32>
    %38 = tpu.matmul %35, %37, %cst_55 {dimension_numbers = #tpu.dot_dimension_numbers<[1], [0], [0], [1], [0, 0, 1, 1], [], []>} : vector<256x16xf32>, vector<16x4xf32>, vector<256x4xf32> -> vector<256x4xf32>
    %39 = vector.broadcast %25 : vector<1x4xf32> to vector<256x4xf32>
    %40 = arith.addf %38, %39 : vector<256x4xf32>
    %41 = vector.shape_cast %40 : vector<256x4xf32> to vector<16x16x4xf32>
    %c0_56 = arith.constant 0 : index
    %c0_57 = arith.constant 0 : index
    %c0_58 = arith.constant 0 : index
    %c0_59 = arith.constant 0 : index
    %c0_60 = arith.constant 0 : index
    %42 = vector.load %arg7[%c0_56, %c0_57, %c0_58, %c0_59, %c0_60] : memref<1x16x2x16x8xf32, #tpu.memory_space<vmem>>, vector<1x16x1x16x4xf32>
    %43 = vector.shape_cast %42 : vector<1x16x1x16x4xf32> to vector<16x16x4xf32>
    %44 = vector.shape_cast %41 : vector<16x16x4xf32> to vector<1x16x1x16x4xf32>
    tpu.vector_store %arg7[%c0_56, %c0_57, %c0_58, %c0_59, %c0_60], %44 {strides = array<i32>} : memref<1x16x2x16x8xf32, #tpu.memory_space<vmem>>, vector<1x16x1x16x4xf32>,
    %c0_61 = arith.constant 0 : index
    %c1_62 = arith.constant 1 : index
    %c0_63 = arith.constant 0 : index
    %45 = vector.load %arg8[%c0_61, %c1_62, %c0_63] : memref<18x18x4xf32, #tpu.memory_space<vmem>>, vector<16x16x4xf32>
    %c0_64 = arith.constant 0 : index
    %c0_65 = arith.constant 0 : index
    %c0_66 = arith.constant 0 : index
    %46 = vector.load %arg9[%c0_64, %c0_65, %c0_66] : memref<16x16x16xf32, #tpu.memory_space<vmem>>, vector<16x16x4xf32>
    tpu.vector_store %arg9[%c0_64, %c0_65, %c0_66], %45 {strides = array<i32>} : memref<16x16x16xf32, #tpu.memory_space<vmem>>, vector<16x16x4xf32>,
    %c0_67 = arith.constant 0 : index
    %c2 = arith.constant 2 : index
    %c0_68 = arith.constant 0 : index
    %47 = vector.load %arg8[%c0_67, %c2, %c0_68] : memref<18x18x4xf32, #tpu.memory_space<vmem>>, vector<16x16x4xf32>
    %c0_69 = arith.constant 0 : index
    %c0_70 = arith.constant 0 : index
    %c4_71 = arith.constant 4 : index
    %48 = vector.load %arg9[%c0_69, %c0_70, %c4_71] : memref<16x16x16xf32, #tpu.memory_space<vmem>>, vector<16x16x4xf32>
    tpu.vector_store %arg9[%c0_69, %c0_70, %c4_71], %47 {strides = array<i32>} : memref<16x16x16xf32, #tpu.memory_space<vmem>>, vector<16x16x4xf32>,
    %c1_72 = arith.constant 1 : index
    %c1_73 = arith.constant 1 : index
    %c0_74 = arith.constant 0 : index
    %49 = vector.load %arg8[%c1_72, %c1_73, %c0_74] : memref<18x18x4xf32, #tpu.memory_space<vmem>>, vector<16x16x4xf32>
    %c0_75 = arith.constant 0 : index
    %c0_76 = arith.constant 0 : index
    %c8_77 = arith.constant 8 : index
    %50 = vector.load %arg9[%c0_75, %c0_76, %c8_77] : memref<16x16x16xf32, #tpu.memory_space<vmem>>, vector<16x16x4xf32>
    tpu.vector_store %arg9[%c0_75, %c0_76, %c8_77], %49 {strides = array<i32>} : memref<16x16x16xf32, #tpu.memory_space<vmem>>, vector<16x16x4xf32>,
    %c1_78 = arith.constant 1 : index
    %c2_79 = arith.constant 2 : index
    %c0_80 = arith.constant 0 : index
    %51 = vector.load %arg8[%c1_78, %c2_79, %c0_80] : memref<18x18x4xf32, #tpu.memory_space<vmem>>, vector<16x16x4xf32>
    %c0_81 = arith.constant 0 : index
    %c0_82 = arith.constant 0 : index
    %c12_83 = arith.constant 12 : index
    %52 = vector.load %arg9[%c0_81, %c0_82, %c12_83] : memref<16x16x16xf32, #tpu.memory_space<vmem>>, vector<16x16x4xf32>
    tpu.vector_store %arg9[%c0_81, %c0_82, %c12_83], %51 {strides = array<i32>} : memref<16x16x16xf32, #tpu.memory_space<vmem>>, vector<16x16x4xf32>,
    %c0_84 = arith.constant 0 : index
    %c0_85 = arith.constant 0 : index
    %c0_86 = arith.constant 0 : index
    %53 = vector.load %arg9[%c0_84, %c0_85, %c0_86] : memref<16x16x16xf32, #tpu.memory_space<vmem>>, vector<16x16x16xf32>
    %54 = vector.shape_cast %53 : vector<16x16x16xf32> to vector<256x16xf32>
    %c1_87 = arith.constant 1 : index
    %c0_88 = arith.constant 0 : index
    %c0_89 = arith.constant 0 : index
    %55 = vector.load %arg5[%c1_87, %c0_88, %c0_89] : memref<4x16x4xf32, #tpu.memory_space<vmem>>, vector<1x16x4xf32>
    %56 = vector.shape_cast %55 : vector<1x16x4xf32> to vector<16x4xf32>
    %cst_90 = arith.constant dense<0.000000e+00> : vector<256x4xf32>
    %57 = tpu.matmul %54, %56, %cst_90 {dimension_numbers = #tpu.dot_dimension_numbers<[1], [0], [0], [1], [0, 0, 1, 1], [], []>} : vector<256x16xf32>, vector<16x4xf32>, vector<256x4xf32> -> vector<256x4xf32>
    %58 = vector.broadcast %25 : vector<1x4xf32> to vector<256x4xf32>
    %59 = arith.addf %57, %58 : vector<256x4xf32>
    %60 = vector.shape_cast %59 : vector<256x4xf32> to vector<16x16x4xf32>
    %c0_91 = arith.constant 0 : index
    %c0_92 = arith.constant 0 : index
    %c0_93 = arith.constant 0 : index
    %c0_94 = arith.constant 0 : index
    %c4_95 = arith.constant 4 : index
    %61 = vector.load %arg7[%c0_91, %c0_92, %c0_93, %c0_94, %c4_95] : memref<1x16x2x16x8xf32, #tpu.memory_space<vmem>>, vector<1x16x1x16x4xf32>
    %62 = vector.shape_cast %61 : vector<1x16x1x16x4xf32> to vector<16x16x4xf32>
    %63 = vector.shape_cast %60 : vector<16x16x4xf32> to vector<1x16x1x16x4xf32>
    tpu.vector_store %arg7[%c0_91, %c0_92, %c0_93, %c0_94, %c4_95], %63 {strides = array<i32>} : memref<1x16x2x16x8xf32, #tpu.memory_space<vmem>>, vector<1x16x1x16x4xf32>,
    %c1_96 = arith.constant 1 : index
    %c0_97 = arith.constant 0 : index
    %c0_98 = arith.constant 0 : index
    %64 = vector.load %arg8[%c1_96, %c0_97, %c0_98] : memref<18x18x4xf32, #tpu.memory_space<vmem>>, vector<16x16x4xf32>
    %c0_99 = arith.constant 0 : index
    %c0_100 = arith.constant 0 : index
    %c0_101 = arith.constant 0 : index
    %65 = vector.load %arg9[%c0_99, %c0_100, %c0_101] : memref<16x16x16xf32, #tpu.memory_space<vmem>>, vector<16x16x4xf32>
    tpu.vector_store %arg9[%c0_99, %c0_100, %c0_101], %64 {strides = array<i32>} : memref<16x16x16xf32, #tpu.memory_space<vmem>>, vector<16x16x4xf32>,
    %c1_102 = arith.constant 1 : index
    %c1_103 = arith.constant 1 : index
    %c0_104 = arith.constant 0 : index
    %66 = vector.load %arg8[%c1_102, %c1_103, %c0_104] : memref<18x18x4xf32, #tpu.memory_space<vmem>>, vector<16x16x4xf32>
    %c0_105 = arith.constant 0 : index
    %c0_106 = arith.constant 0 : index
    %c4_107 = arith.constant 4 : index
    %67 = vector.load %arg9[%c0_105, %c0_106, %c4_107] : memref<16x16x16xf32, #tpu.memory_space<vmem>>, vector<16x16x4xf32>
    tpu.vector_store %arg9[%c0_105, %c0_106, %c4_107], %66 {strides = array<i32>} : memref<16x16x16xf32, #tpu.memory_space<vmem>>, vector<16x16x4xf32>,
    %c2_108 = arith.constant 2 : index
    %c0_109 = arith.constant 0 : index
    %c0_110 = arith.constant 0 : index
    %68 = vector.load %arg8[%c2_108, %c0_109, %c0_110] : memref<18x18x4xf32, #tpu.memory_space<vmem>>, vector<16x16x4xf32>
    %c0_111 = arith.constant 0 : index
    %c0_112 = arith.constant 0 : index
    %c8_113 = arith.constant 8 : index
    %69 = vector.load %arg9[%c0_111, %c0_112, %c8_113] : memref<16x16x16xf32, #tpu.memory_space<vmem>>, vector<16x16x4xf32>
    tpu.vector_store %arg9[%c0_111, %c0_112, %c8_113], %68 {strides = array<i32>} : memref<16x16x16xf32, #tpu.memory_space<vmem>>, vector<16x16x4xf32>,
    %c2_114 = arith.constant 2 : index
    %c1_115 = arith.constant 1 : index
    %c0_116 = arith.constant 0 : index
    %70 = vector.load %arg8[%c2_114, %c1_115, %c0_116] : memref<18x18x4xf32, #tpu.memory_space<vmem>>, vector<16x16x4xf32>
    %c0_117 = arith.constant 0 : index
    %c0_118 = arith.constant 0 : index
    %c12_119 = arith.constant 12 : index
    %71 = vector.load %arg9[%c0_117, %c0_118, %c12_119] : memref<16x16x16xf32, #tpu.memory_space<vmem>>, vector<16x16x4xf32>
    tpu.vector_store %arg9[%c0_117, %c0_118, %c12_119], %70 {strides = array<i32>} : memref<16x16x16xf32, #tpu.memory_space<vmem>>, vector<16x16x4xf32>,
    %c0_120 = arith.constant 0 : index
    %c0_121 = arith.constant 0 : index
    %c0_122 = arith.constant 0 : index
    %72 = vector.load %arg9[%c0_120, %c0_121, %c0_122] : memref<16x16x16xf32, #tpu.memory_space<vmem>>, vector<16x16x16xf32>
    %73 = vector.shape_cast %72 : vector<16x16x16xf32> to vector<256x16xf32>
    %c2_123 = arith.constant 2 : index
    %c0_124 = arith.constant 0 : index
    %c0_125 = arith.constant 0 : index
    %74 = vector.load %arg5[%c2_123, %c0_124, %c0_125] : memref<4x16x4xf32, #tpu.memory_space<vmem>>, vector<1x16x4xf32>
    %75 = vector.shape_cast %74 : vector<1x16x4xf32> to vector<16x4xf32>
    %cst_126 = arith.constant dense<0.000000e+00> : vector<256x4xf32>
    %76 = tpu.matmul %73, %75, %cst_126 {dimension_numbers = #tpu.dot_dimension_numbers<[1], [0], [0], [1], [0, 0, 1, 1], [], []>} : vector<256x16xf32>, vector<16x4xf32>, vector<256x4xf32> -> vector<256x4xf32>
    %77 = vector.broadcast %25 : vector<1x4xf32> to vector<256x4xf32>
    %78 = arith.addf %76, %77 : vector<256x4xf32>
    %79 = vector.shape_cast %78 : vector<256x4xf32> to vector<16x16x4xf32>
    %c0_127 = arith.constant 0 : index
    %c0_128 = arith.constant 0 : index
    %c1_129 = arith.constant 1 : index
    %c0_130 = arith.constant 0 : index
    %c0_131 = arith.constant 0 : index
    %80 = vector.load %arg7[%c0_127, %c0_128, %c1_129, %c0_130, %c0_131] : memref<1x16x2x16x8xf32, #tpu.memory_space<vmem>>, vector<1x16x1x16x4xf32>
    %81 = vector.shape_cast %80 : vector<1x16x1x16x4xf32> to vector<16x16x4xf32>
    %82 = vector.shape_cast %79 : vector<16x16x4xf32> to vector<1x16x1x16x4xf32>
    tpu.vector_store %arg7[%c0_127, %c0_128, %c1_129, %c0_130, %c0_131], %82 {strides = array<i32>} : memref<1x16x2x16x8xf32, #tpu.memory_space<vmem>>, vector<1x16x1x16x4xf32>,
    %c1_132 = arith.constant 1 : index
    %c1_133 = arith.constant 1 : index
    %c0_134 = arith.constant 0 : index
    %83 = vector.load %arg8[%c1_132, %c1_133, %c0_134] : memref<18x18x4xf32, #tpu.memory_space<vmem>>, vector<16x16x4xf32>
    %c0_135 = arith.constant 0 : index
    %c0_136 = arith.constant 0 : index
    %c0_137 = arith.constant 0 : index
    %84 = vector.load %arg9[%c0_135, %c0_136, %c0_137] : memref<16x16x16xf32, #tpu.memory_space<vmem>>, vector<16x16x4xf32>
    tpu.vector_store %arg9[%c0_135, %c0_136, %c0_137], %83 {strides = array<i32>} : memref<16x16x16xf32, #tpu.memory_space<vmem>>, vector<16x16x4xf32>,
    %c1_138 = arith.constant 1 : index
    %c2_139 = arith.constant 2 : index
    %c0_140 = arith.constant 0 : index
    %85 = vector.load %arg8[%c1_138, %c2_139, %c0_140] : memref<18x18x4xf32, #tpu.memory_space<vmem>>, vector<16x16x4xf32>
    %c0_141 = arith.constant 0 : index
    %c0_142 = arith.constant 0 : index
    %c4_143 = arith.constant 4 : index
    %86 = vector.load %arg9[%c0_141, %c0_142, %c4_143] : memref<16x16x16xf32, #tpu.memory_space<vmem>>, vector<16x16x4xf32>
    tpu.vector_store %arg9[%c0_141, %c0_142, %c4_143], %85 {strides = array<i32>} : memref<16x16x16xf32, #tpu.memory_space<vmem>>, vector<16x16x4xf32>,
    %c2_144 = arith.constant 2 : index
    %c1_145 = arith.constant 1 : index
    %c0_146 = arith.constant 0 : index
    %87 = vector.load %arg8[%c2_144, %c1_145, %c0_146] : memref<18x18x4xf32, #tpu.memory_space<vmem>>, vector<16x16x4xf32>
    %c0_147 = arith.constant 0 : index
    %c0_148 = arith.constant 0 : index
    %c8_149 = arith.constant 8 : index
    %88 = vector.load %arg9[%c0_147, %c0_148, %c8_149] : memref<16x16x16xf32, #tpu.memory_space<vmem>>, vector<16x16x4xf32>
    tpu.vector_store %arg9[%c0_147, %c0_148, %c8_149], %87 {strides = array<i32>} : memref<16x16x16xf32, #tpu.memory_space<vmem>>, vector<16x16x4xf32>,
    %c2_150 = arith.constant 2 : index
    %c2_151 = arith.constant 2 : index
    %c0_152 = arith.constant 0 : index
    %89 = vector.load %arg8[%c2_150, %c2_151, %c0_152] : memref<18x18x4xf32, #tpu.memory_space<vmem>>, vector<16x16x4xf32>
    %c0_153 = arith.constant 0 : index
    %c0_154 = arith.constant 0 : index
    %c12_155 = arith.constant 12 : index
    %90 = vector.load %arg9[%c0_153, %c0_154, %c12_155] : memref<16x16x16xf32, #tpu.memory_space<vmem>>, vector<16x16x4xf32>
    tpu.vector_store %arg9[%c0_153, %c0_154, %c12_155], %89 {strides = array<i32>} : memref<16x16x16xf32, #tpu.memory_space<vmem>>, vector<16x16x4xf32>,
    %c0_156 = arith.constant 0 : index
    %c0_157 = arith.constant 0 : index
    %c0_158 = arith.constant 0 : index
    %91 = vector.load %arg9[%c0_156, %c0_157, %c0_158] : memref<16x16x16xf32, #tpu.memory_space<vmem>>, vector<16x16x16xf32>
    %92 = vector.shape_cast %91 : vector<16x16x16xf32> to vector<256x16xf32>
    %c3 = arith.constant 3 : index
    %c0_159 = arith.constant 0 : index
    %c0_160 = arith.constant 0 : index
    %93 = vector.load %arg5[%c3, %c0_159, %c0_160] : memref<4x16x4xf32, #tpu.memory_space<vmem>>, vector<1x16x4xf32>
    %94 = vector.shape_cast %93 : vector<1x16x4xf32> to vector<16x4xf32>
    %cst_161 = arith.constant dense<0.000000e+00> : vector<256x4xf32>
    %95 = tpu.matmul %92, %94, %cst_161 {dimension_numbers = #tpu.dot_dimension_numbers<[1], [0], [0], [1], [0, 0, 1, 1], [], []>} : vector<256x16xf32>, vector<16x4xf32>, vector<256x4xf32> -> vector<256x4xf32>
    %96 = vector.broadcast %25 : vector<1x4xf32> to vector<256x4xf32>
    %97 = arith.addf %95, %96 : vector<256x4xf32>
    %98 = vector.shape_cast %97 : vector<256x4xf32> to vector<16x16x4xf32>
    %c0_162 = arith.constant 0 : index
    %c0_163 = arith.constant 0 : index
    %c1_164 = arith.constant 1 : index
    %c0_165 = arith.constant 0 : index
    %c4_166 = arith.constant 4 : index
    %99 = vector.load %arg7[%c0_162, %c0_163, %c1_164, %c0_165, %c4_166] : memref<1x16x2x16x8xf32, #tpu.memory_space<vmem>>, vector<1x16x1x16x4xf32>
    %100 = vector.shape_cast %99 : vector<1x16x1x16x4xf32> to vector<16x16x4xf32>
    %101 = vector.shape_cast %98 : vector<16x16x4xf32> to vector<1x16x1x16x4xf32>
    tpu.vector_store %arg7[%c0_162, %c0_163, %c1_164, %c0_165, %c4_166], %101 {strides = array<i32>} : memref<1x16x2x16x8xf32, #tpu.memory_space<vmem>>, vector<1x16x1x16x4xf32>,
    return
  }
  func.func @transform_0(%arg0: i32, %arg1: i32) -> (i32, i32, i32, i32) {
    %c0_i32 = arith.constant 0 : i32
    %c0_i32_0 = arith.constant 0 : i32
    %c0_i32_1 = arith.constant 0 : i32
    return %arg0, %arg1, %c0_i32, %c0_i32_0 : i32, i32, i32, i32
  }
  func.func @transform_1(%arg0: i32, %arg1: i32) -> (i32, i32, i32, i32) {
    %c16_i32 = arith.constant 16 : i32
    %0 = arith.muli %arg1, %c16_i32 : i32
    %c1_i32 = arith.constant 1 : i32
    %1 = arith.subi %0, %c1_i32 : i32
    %c0_i32 = arith.constant 0 : i32
    %2 = arith.maxsi %1, %c0_i32 : i32
    %c0_i32_0 = arith.constant 0 : i32
    %c0_i32_1 = arith.constant 0 : i32
    %c0_i32_2 = arith.constant 0 : i32
    return %arg0, %2, %c0_i32_0, %c0_i32_1 : i32, i32, i32, i32
  }
  func.func @transform_2(%arg0: i32, %arg1: i32) -> (i32, i32, i32, i32) {
    %c16_i32 = arith.constant 16 : i32
    %0 = arith.muli %arg1, %c16_i32 : i32
    %c16_i32_0 = arith.constant 16 : i32
    %1 = arith.addi %0, %c16_i32_0 : i32
    %c15_i32 = arith.constant 15 : i32
    %2 = arith.minsi %1, %c15_i32 : i32
    %c0_i32 = arith.constant 0 : i32
    %c0_i32_1 = arith.constant 0 : i32
    %c0_i32_2 = arith.constant 0 : i32
    return %arg0, %2, %c0_i32, %c0_i32_1 : i32, i32, i32, i32
  }
  func.func @transform_3(%arg0: i32, %arg1: i32) -> (i32, i32, i32) {
    %c0_i32 = arith.constant 0 : i32
    %c0_i32_0 = arith.constant 0 : i32
    %c0_i32_1 = arith.constant 0 : i32
    %c0_i32_2 = arith.constant 0 : i32
    return %c0_i32, %c0_i32_0, %c0_i32_1 : i32, i32, i32
  }
  func.func @transform_4(%arg0: i32, %arg1: i32) -> (i32, i32) {
    %c0_i32 = arith.constant 0 : i32
    %c0_i32_0 = arith.constant 0 : i32
    %c0_i32_1 = arith.constant 0 : i32
    return %c0_i32, %c0_i32_0 : i32, i32
  }
  func.func @transform_5(%arg0: i32, %arg1: i32) -> (i32, i32, i32, i32, i32) {
    %c0_i32 = arith.constant 0 : i32
    %c0_i32_0 = arith.constant 0 : i32
    %c0_i32_1 = arith.constant 0 : i32
    %c0_i32_2 = arith.constant 0 : i32
    return %arg0, %arg1, %c0_i32, %c0_i32_0, %c0_i32_1 : i32, i32, i32, i32, i32
  }
}

</mosaic_0001>

<llo_original>
// kernel: tpu_custom_call.1
$region0: #{tpu_custom_call.1}
  #allocation0 [shape = 'u32[]', space=smem, size = 0x4, offset = 0x4, fixed_abs, tag = 'smem constant byte address 0x4 - core index']
  #allocation1 [shape = 'u32[144,128]{1,0:T(1,128)}', space=vmem, size = 0x12000, scoped, tag = 'internal scratch']
  #allocation2 [shape = 'f32[18,18,4]{2,1,0:T(8,128)}', space=vmem, size = 0x36000, scoped, tag = 'scratch operand']
  #allocation3 [shape = 'f32[16,16,16]{2,1,0:T(8,128)}', space=vmem, size = 0x20000, scoped, tag = 'scratch operand']
  %s0 = inlined_call_operand.vmem [shape: f32[2,16,16,4], index: 0, kind: input, shape index: {}]
  %s1 = inlined_call_operand.vmem [shape: f32[2,16,16,4], index: 1, kind: input, shape index: {}]
  %s2 = inlined_call_operand.vmem [shape: f32[2,16,16,4], index: 2, kind: input, shape index: {}]
  %s3 = inlined_call_operand.vmem [shape: f32[4,16,4], index: 3, kind: input, shape index: {}]
  %s4 = inlined_call_operand.vmem [shape: f32[1,4], index: 4, kind: input, shape index: {}]
  %s5 = inlined_call_operand.vmem [shape: f32[2,16,2,16,8], index: 5, kind: output, shape index: {}]
  %s6 = sld [smem:[#allocation0]]
  $region53: #{tpu_custom_call.1} parent=0
    _
  %s8 = ssub.s32 1, %s6
  %s9 = scalar_select 0, %s8, %s6
  loop: start=0, step=1, limit=4
  $region2: #{tpu_custom_call.1} parent=0 // loop_pre_header
    _
  $region3: #{tpu_custom_call.1} parent=0 // loop_header
    %s11 = sphi 0, %s15
    %p12 = scmp.ge.s32.totalorder %s11, 4
    %s18 = sphi 0, %s30
    %s19 = sphi 0, %s26
    %s20 = sphi 0, %s18
    %s21 = sphi 0, %s19
    %s22 = sphi 0, %s20
    %s23 = sphi 0, %s21
    %s35 = sphi 0, %s37
    %s38 = sphi 0, %s35
    %s39 = sphi 0, %s38
    %s55 = sphi 0, %s39
    %s71 = sphi 0, %s73
    %s74 = sphi 0, %s71
    %s75 = sphi 0, %s74
    %s91 = sphi 0, %s75
    %s107 = sphi 0, %s109
    %s110 = sphi 0, %s107
    %s111 = sphi 0, %s110
    %s127 = sphi 0, %s111
    %s131 = sphi 0, %s131
    %s133 = sphi 0, %s131
    %s134 = sphi 0, %s133
    %s148 = sphi 0, %s134
    %s152 = sphi 0, %s152
    %s154 = sphi 0, %s152
    %s155 = sphi 0, %s154
    %s169 = sphi 0, %s155
    %s177 = sphi 0, %s179
    %s180 = sphi 0, %s177
    %s181 = sphi 0, %s180
    %s197 = sphi 0, %s181
  $region4: #{tpu_custom_call.1} parent=0 // loop_header_branch
    %14 = sbr.rel (%p12) target = $region8
  $region5: #{tpu_custom_call.1} parent=0 // loop_body
    %s16 = ssub.s32 %s11, 1
    %s17 = ssub.s32 %s11, 2
    %s24 = sadd.s32 1, %s19
    %p25 = scmp.ge.s32.totalorder %s24, 1
    %s26 = scalar_select %p25, 0, %s24
    %s27 = sadd.s32 1, %s18
    %s28 = scalar_select %p25, %s27, %s18
    %p29 = scmp.ge.s32.totalorder %s28, 2
    %s30 = scalar_select %p29, 0, %s28
    %s31 = ssub.s32 %s18, %s30
    %s32 = ssub.s32 %s19, %s26
    %s33 = sor.u32 %s31, %s32
    %p34 = scmp.eq.s32.totalorder %s33, 0
    %s36 = sadd.s32 %s35, 1
    %s37 = scalar_select %p34, %s35, %s36
    %p40 = pneg %p34
    %p41 = scmp.eq.s32.totalorder %s11, 1
    %p42 = por %p40, %p41
    %p43 = scmp.ne.s32.totalorder %s35, %s38
    %p44 = scmp.eq.s32.totalorder %s11, 0
    %p45 = por %p43, %p44
    %p46 = scmp.ne.s32.totalorder %s35, %s38
    %p47 = scmp.eq.s32.totalorder %s16, 1
    %p48 = por %p46, %p47
    %p49 = scmp.ne.s32.totalorder %s38, %s39
    %p50 = scmp.eq.s32.totalorder %s16, 0
    %p51 = por %p49, %p50
    %p52 = scmp.ne.s32.totalorder %s38, %s39
    %p53 = scmp.eq.s32.totalorder %s17, 1
    %p54 = por %p52, %p53
    %p56 = scmp.ne.s32.totalorder %s39, %s55
    %p57 = scmp.eq.s32.totalorder %s17, 0
    %p58 = por %p56, %p57
    %s59 = smul.u32 %s19, 16
    %s60 = ssub.s32 %s59, 1
    %p61 = scmp.gt.s32.totalorder %s60, 0
    %s62 = scalar_select %p61, %s60, 0
    %s63 = smul.u32 %s26, 16
    %s64 = ssub.s32 %s63, 1
    %p65 = scmp.gt.s32.totalorder %s64, 0
    %s66 = scalar_select %p65, %s64, 0
    %s67 = ssub.s32 %s18, %s30
    %s68 = ssub.s32 %s62, %s66
    %s69 = sor.u32 %s67, %s68
    %p70 = scmp.eq.s32.totalorder %s69, 0
    %s72 = sadd.s32 %s71, 1
    %s73 = scalar_select %p70, %s71, %s72
    %p76 = pneg %p70
    %p77 = scmp.eq.s32.totalorder %s11, 1
    %p78 = por %p76, %p77
    %p79 = scmp.ne.s32.totalorder %s71, %s74
    %p80 = scmp.eq.s32.totalorder %s11, 0
    %p81 = por %p79, %p80
    %p82 = scmp.ne.s32.totalorder %s71, %s74
    %p83 = scmp.eq.s32.totalorder %s16, 1
    %p84 = por %p82, %p83
    %p85 = scmp.ne.s32.totalorder %s74, %s75
    %p86 = scmp.eq.s32.totalorder %s16, 0
    %p87 = por %p85, %p86
    %p88 = scmp.ne.s32.totalorder %s74, %s75
    %p89 = scmp.eq.s32.totalorder %s17, 1
    %p90 = por %p88, %p89
    %p92 = scmp.ne.s32.totalorder %s75, %s91
    %p93 = scmp.eq.s32.totalorder %s17, 0
    %p94 = por %p92, %p93
    %s95 = smul.u32 %s19, 16
    %s96 = sadd.s32 %s95, 16
    %p97 = scmp.lt.s32.totalorder %s96, 15
    %s98 = scalar_select %p97, %s96, 15
    %s99 = smul.u32 %s26, 16
    %s100 = sadd.s32 %s99, 16
    %p101 = scmp.lt.s32.totalorder %s100, 15
    %s102 = scalar_select %p101, %s100, 15
    %s103 = ssub.s32 %s18, %s30
    %s104 = ssub.s32 %s98, %s102
    %s105 = sor.u32 %s103, %s104
    %p106 = scmp.eq.s32.totalorder %s105, 0
    %s108 = sadd.s32 %s107, 1
    %s109 = scalar_select %p106, %s107, %s108
    %p112 = pneg %p106
    %p113 = scmp.eq.s32.totalorder %s11, 1
    %p114 = por %p112, %p113
    %p115 = scmp.ne.s32.totalorder %s107, %s110
    %p116 = scmp.eq.s32.totalorder %s11, 0
    %p117 = por %p115, %p116
    %p118 = scmp.ne.s32.totalorder %s107, %s110
    %p119 = scmp.eq.s32.totalorder %s16, 1
    %p120 = por %p118, %p119
    %p121 = scmp.ne.s32.totalorder %s110, %s111
    %p122 = scmp.eq.s32.totalorder %s16, 0
    %p123 = por %p121, %p122
    %p124 = scmp.ne.s32.totalorder %s110, %s111
    %p125 = scmp.eq.s32.totalorder %s17, 1
    %p126 = por %p124, %p125
    %p128 = scmp.ne.s32.totalorder %s111, %s127
    %p129 = scmp.eq.s32.totalorder %s17, 0
    %p130 = por %p128, %p129
    %s132 = sadd.s32 %s131, 1
    %p135 = scmp.eq.s32.totalorder %s11, 1
    %p136 = scmp.ne.s32.totalorder %s131, %s133
    %p137 = scmp.eq.s32.totalorder %s11, 0
    %p138 = por %p136, %p137
    %p139 = scmp.ne.s32.totalorder %s131, %s133
    %p140 = scmp.eq.s32.totalorder %s16, 1
    %p141 = por %p139, %p140
    %p142 = scmp.ne.s32.totalorder %s133, %s134
    %p143 = scmp.eq.s32.totalorder %s16, 0
    %p144 = por %p142, %p143
    %p145 = scmp.ne.s32.totalorder %s133, %s134
    %p146 = scmp.eq.s32.totalorder %s17, 1
    %p147 = por %p145, %p146
    %p149 = scmp.ne.s32.totalorder %s134, %s148
    %p150 = scmp.eq.s32.totalorder %s17, 0
    %p151 = por %p149, %p150
    %s153 = sadd.s32 %s152, 1
    %p156 = scmp.eq.s32.totalorder %s11, 1
    %p157 = scmp.ne.s32.totalorder %s152, %s154
    %p158 = scmp.eq.s32.totalorder %s11, 0
    %p159 = por %p157, %p158
    %p160 = scmp.ne.s32.totalorder %s152, %s154
    %p161 = scmp.eq.s32.totalorder %s16, 1
    %p162 = por %p160, %p161
    %p163 = scmp.ne.s32.totalorder %s154, %s155
    %p164 = scmp.eq.s32.totalorder %s16, 0
    %p165 = por %p163, %p164
    %p166 = scmp.ne.s32.totalorder %s154, %s155
    %p167 = scmp.eq.s32.totalorder %s17, 1
    %p168 = por %p166, %p167
    %p170 = scmp.ne.s32.totalorder %s155, %s169
    %p171 = scmp.eq.s32.totalorder %s17, 0
    %p172 = por %p170, %p171
    %s173 = ssub.s32 %s18, %s30
    %s174 = ssub.s32 %s19, %s26
    %s175 = sor.u32 %s173, %s174
    %p176 = scmp.eq.s32.totalorder %s175, 0
    %s178 = sadd.s32 %s177, 1
    %s179 = scalar_select %p176, %s177, %s178
    %p182 = pneg %p176
    %p183 = scmp.eq.s32.totalorder %s11, 1
    %p184 = por %p182, %p183
    %p185 = scmp.ne.s32.totalorder %s177, %s180
    %p186 = scmp.eq.s32.totalorder %s11, 0
    %p187 = por %p185, %p186
    %p188 = scmp.ne.s32.totalorder %s177, %s180
    %p189 = scmp.eq.s32.totalorder %s16, 1
    %p190 = por %p188, %p189
    %p191 = scmp.ne.s32.totalorder %s180, %s181
    %p192 = scmp.eq.s32.totalorder %s16, 0
    %p193 = por %p191, %p192
    %p194 = scmp.ne.s32.totalorder %s180, %s181
    %p195 = scmp.eq.s32.totalorder %s17, 1
    %p196 = por %p194, %p195
    %p198 = scmp.ne.s32.totalorder %s181, %s197
    %p199 = scmp.eq.s32.totalorder %s17, 0
    %p200 = por %p198, %p199
    %p201 = scmp.le.s32.totalorder 1, %s11
    %p202 = scmp.lt.s32.totalorder %s11, 3
    %p203 = pnand %p201, %p202
    %p204 = pneg %p203
    // Predicated region
    $region9: #{tpu_custom_call.1} parent=5 // pred_check
      _
    $region10: #{tpu_custom_call.1} parent=5 // pred_check_branch
      %206 = sbr.rel (%p203) target = $region12
    $region11: #{tpu_custom_call.1} parent=5 // pred_region
      %s207 = ssub.s32 %s11, 1
      // Predicated region
      $region13: #{tpu_custom_call.1} parent=11 // pred_check
        %p208 = pneg %p144
      $region14: #{tpu_custom_call.1} parent=11 // pred_check_branch
        %210 = sbr.rel (%p208) target = $region16
      $region15: #{tpu_custom_call.1} parent=11 // pred_region
        _
      $region16: #{tpu_custom_call.1} parent=11 // pred_fallthru
        _
      // Predicated region
      $region17: #{tpu_custom_call.1} parent=11 // pred_check
        %p211 = pneg %p165
      $region18: #{tpu_custom_call.1} parent=11 // pred_check_branch
        %213 = sbr.rel (%p211) target = $region20
      $region19: #{tpu_custom_call.1} parent=11 // pred_region
        _
      $region20: #{tpu_custom_call.1} parent=11 // pred_fallthru
        _
    $region12: #{tpu_custom_call.1} parent=5 // pred_fallthru
      _
    %p214 = scmp.lt.s32.totalorder %s11, 2
    // Predicated region
    $region21: #{tpu_custom_call.1} parent=5 // pred_check
      %p215 = pneg %p214
    $region22: #{tpu_custom_call.1} parent=5 // pred_check_branch
      %217 = sbr.rel (%p215) target = $region24
    $region23: #{tpu_custom_call.1} parent=5 // pred_region
      // Predicated region
      $region25: #{tpu_custom_call.1} parent=23 // pred_check
        %p218 = pneg %p45
      $region26: #{tpu_custom_call.1} parent=23 // pred_check_branch
        %220 = sbr.rel (%p218) target = $region28
      $region27: #{tpu_custom_call.1} parent=23 // pred_region
        %s221 = smul.u32 16, %s19
        %p222 = scmp.lt.s32.totalorder %s18, 1
        %s223 = scalar_select %p222, %s18, 1
        %p224 = scmp.lt.s32.totalorder %s221, 15
        %s225 = scalar_select %p224, %s221, 15
        %s226 = smul.addr %s225, 2
        %s227 = smul.addr %s223, 32
        %s228 = sadd.s32 %s226, %s227
        %s229 = smul.addr %s228, 8
        %s230 = scalar_lea.vmem %s0, %s229
        %s231 = smul.u32 16, %s19
      $region28: #{tpu_custom_call.1} parent=23 // pred_fallthru
        _
      // Predicated region
      $region29: #{tpu_custom_call.1} parent=23 // pred_check
        %p232 = pneg %p81
      $region30: #{tpu_custom_call.1} parent=23 // pred_check_branch
        %234 = sbr.rel (%p232) target = $region32
      $region31: #{tpu_custom_call.1} parent=23 // pred_region
        %s235 = smul.u32 %s19, 16
        %s236 = ssub.s32 %s235, 1
        %p237 = scmp.gt.s32.totalorder %s236, 0
        %s238 = scalar_select %p237, %s236, 0
        %p239 = scmp.lt.s32.totalorder %s18, 1
        %s240 = scalar_select %p239, %s18, 1
        %p241 = scmp.lt.s32.totalorder %s238, 15
        %s242 = scalar_select %p241, %s238, 15
        %s243 = smul.addr %s242, 2
        %s244 = smul.addr %s240, 32
        %s245 = sadd.s32 %s243, %s244
        %s246 = smul.addr %s245, 8
        %s247 = scalar_lea.vmem %s1, %s246
        %s248 = smul.u32 %s19, 16
        %s249 = ssub.s32 %s248, 1
        %p250 = scmp.gt.s32.totalorder %s249, 0
        %s251 = scalar_select %p250, %s249, 0
      $region32: #{tpu_custom_call.1} parent=23 // pred_fallthru
        _
      // Predicated region
      $region33: #{tpu_custom_call.1} parent=23 // pred_check
        %p252 = pneg %p117
      $region34: #{tpu_custom_call.1} parent=23 // pred_check_branch
        %254 = sbr.rel (%p252) target = $region36
      $region35: #{tpu_custom_call.1} parent=23 // pred_region
        %s255 = smul.u32 %s19, 16
        %s256 = sadd.s32 %s255, 16
        %p257 = scmp.lt.s32.totalorder %s256, 15
        %s258 = scalar_select %p257, %s256, 15
        %p259 = scmp.lt.s32.totalorder %s18, 1
        %s260 = scalar_select %p259, %s18, 1
        %p261 = scmp.lt.s32.totalorder %s258, 15
        %s262 = scalar_select %p261, %s258, 15
        %s263 = smul.addr %s262, 2
        %s264 = smul.addr %s260, 32
        %s265 = sadd.s32 %s263, %s264
        %s266 = smul.addr %s265, 8
        %s267 = scalar_lea.vmem %s2, %s266
        %s268 = smul.u32 %s19, 16
        %s269 = sadd.s32 %s268, 16
        %p270 = scmp.lt.s32.totalorder %s269, 15
        %s271 = scalar_select %p270, %s269, 15
      $region36: #{tpu_custom_call.1} parent=23 // pred_fallthru
        _
    $region24: #{tpu_custom_call.1} parent=5 // pred_fallthru
      _
    %p272 = scmp.le.s32.totalorder 1, %s11
    %p273 = scmp.lt.s32.totalorder %s11, 3
    %p274 = pnand %p272, %p273
    %p275 = pneg %p274
    // Predicated region
    $region37: #{tpu_custom_call.1} parent=5 // pred_check
      _
    $region38: #{tpu_custom_call.1} parent=5 // pred_check_branch
      %277 = sbr.rel (%p274) target = $region40
    $region39: #{tpu_custom_call.1} parent=5 // pred_region
      %s278 = ssub.s32 %s11, 1
      %s279 = smul.u32 16, %s21
      %p280 = scmp.lt.s32.totalorder %s20, 1
      %s281 = scalar_select %p280, %s20, 1
      %p282 = scmp.lt.s32.totalorder %s279, 15
      %s283 = scalar_select %p282, %s279, 15
      %s284 = smul.addr %s283, 2
      %s285 = smul.addr %s281, 32
      %s286 = sadd.s32 %s284, %s285
      %s287 = smul.addr %s286, 8
      %s288 = scalar_lea.vmem %s0, %s287
      %p289 = pneg %p51
      %p290 = pneg %p48
      %s291 = smul.u32 %s21, 16
      %s292 = ssub.s32 %s291, 1
      %p293 = scmp.gt.s32.totalorder %s292, 0
      %s294 = scalar_select %p293, %s292, 0
      %p295 = scmp.lt.s32.totalorder %s20, 1
      %s296 = scalar_select %p295, %s20, 1
      %p297 = scmp.lt.s32.totalorder %s294, 15
      %s298 = scalar_select %p297, %s294, 15
      %s299 = smul.addr %s298, 2
      %s300 = smul.addr %s296, 32
      %s301 = sadd.s32 %s299, %s300
      %s302 = smul.addr %s301, 8
      %s303 = scalar_lea.vmem %s1, %s302
      %p304 = pneg %p87
      %p305 = pneg %p84
      %s306 = smul.u32 %s21, 16
      %s307 = sadd.s32 %s306, 16
      %p308 = scmp.lt.s32.totalorder %s307, 15
      %s309 = scalar_select %p308, %s307, 15
      %p310 = scmp.lt.s32.totalorder %s20, 1
      %s311 = scalar_select %p310, %s20, 1
      %p312 = scmp.lt.s32.totalorder %s309, 15
      %s313 = scalar_select %p312, %s309, 15
      %s314 = smul.addr %s313, 2
      %s315 = smul.addr %s311, 32
      %s316 = sadd.s32 %s314, %s315
      %s317 = smul.addr %s316, 8
      %s318 = scalar_lea.vmem %s2, %s317
      %p319 = pneg %p123
      %p320 = pneg %p120
      %p321 = pneg %p144
      %p322 = pneg %p141
      %p323 = pneg %p165
      %p324 = pneg %p162
      %p325 = pneg %p193
      %p326 = pneg %p190
      %s327 = smul.u32 16, %s21
      %p328 = scmp.lt.s32.totalorder %s20, 1
      %s329 = scalar_select %p328, %s20, 1
      %p330 = scmp.lt.s32.totalorder %s327, 15
      %s331 = scalar_select %p330, %s327, 15
      %s332 = smul.addr %s331, 4
      %s333 = smul.addr %s329, 64
      %s334 = sadd.s32 %s332, %s333
      %s335 = smul.addr %s334, 8
      %s336 = scalar_lea.vmem %s5, %s335
      %s337 = smul.u32 16, %s21
      %p338 = scmp.lt.s32.totalorder %s20, 1
      %s339 = scalar_select %p338, %s20, 1
      %p340 = scmp.lt.s32.totalorder %s337, 15
      %s341 = scalar_select %p340, %s337, 15
      %s342 = smul.addr %s341, 2
      %s343 = smul.addr %s339, 32
      %s344 = sadd.s32 %s342, %s343
      %s345 = smul.addr %s344, 8
      %s346 = scalar_lea.vmem %s0, %s345
      %s347 = smul.u32 16, %s21
      %s348 = smul.u32 %s21, 16
      %s349 = ssub.s32 %s348, 1
      %p350 = scmp.gt.s32.totalorder %s349, 0
      %s351 = scalar_select %p350, %s349, 0
      %p352 = scmp.lt.s32.totalorder %s20, 1
      %s353 = scalar_select %p352, %s20, 1
      %p354 = scmp.lt.s32.totalorder %s351, 15
      %s355 = scalar_select %p354, %s351, 15
      %s356 = smul.addr %s355, 2
      %s357 = smul.addr %s353, 32
      %s358 = sadd.s32 %s356, %s357
      %s359 = smul.addr %s358, 8
      %s360 = scalar_lea.vmem %s1, %s359
      %s361 = smul.u32 %s21, 16
      %s362 = ssub.s32 %s361, 1
      %p363 = scmp.gt.s32.totalorder %s362, 0
      %s364 = scalar_select %p363, %s362, 0
      %s365 = smul.u32 %s21, 16
      %s366 = sadd.s32 %s365, 16
      %p367 = scmp.lt.s32.totalorder %s366, 15
      %s368 = scalar_select %p367, %s366, 15
      %p369 = scmp.lt.s32.totalorder %s20, 1
      %s370 = scalar_select %p369, %s20, 1
      %p371 = scmp.lt.s32.totalorder %s368, 15
      %s372 = scalar_select %p371, %s368, 15
      %s373 = smul.addr %s372, 2
      %s374 = smul.addr %s370, 32
      %s375 = sadd.s32 %s373, %s374
      %s376 = smul.addr %s375, 8
      %s377 = scalar_lea.vmem %s2, %s376
      %s378 = smul.u32 %s21, 16
      %s379 = sadd.s32 %s378, 16
      %p380 = scmp.lt.s32.totalorder %s379, 15
      %s381 = scalar_select %p380, %s379, 15
      %s382 = smul.u32 16, %s21
      %p383 = scmp.lt.s32.totalorder %s20, 1
      %s384 = scalar_select %p383, %s20, 1
      %p385 = scmp.lt.s32.totalorder %s382, 15
      %s386 = scalar_select %p385, %s382, 15
      %s387 = smul.addr %s386, 4
      %s388 = smul.addr %s384, 64
      %s389 = sadd.s32 %s387, %s388
      %s390 = smul.addr %s389, 8
      %s391 = scalar_lea.vmem %s5, %s390
      %s392 = smul.u32 16, %s21
      %v393 = vld [vmem:[%s346] sm:$0xff]
      %v394 = vld [vmem:[%s346 + $0x8] sm:$0xff]
      %v395 = vld [vmem:[%s346 + $0x10] sm:$0xff]
      %v396 = vld [vmem:[%s346 + $0x18] sm:$0xff]
      %v397 = vld [vmem:[%s346 + $0x20] sm:$0xff]
      %v398 = vld [vmem:[%s346 + $0x28] sm:$0xff]
      %v399 = vld [vmem:[%s346 + $0x30] sm:$0xff]
      %v400 = vld [vmem:[%s346 + $0x38] sm:$0xff]
      %v401 = vld [vmem:[%s346 + $0x40] sm:$0xff]
      %v402 = vld [vmem:[%s346 + $0x48] sm:$0xff]
      %v403 = vld [vmem:[%s346 + $0x50] sm:$0xff]
      %v404 = vld [vmem:[%s346 + $0x58] sm:$0xff]
      %v405 = vld [vmem:[%s346 + $0x60] sm:$0xff]
      %v406 = vld [vmem:[%s346 + $0x68] sm:$0xff]
      %v407 = vld [vmem:[%s346 + $0x70] sm:$0xff]
      %v408 = vld [vmem:[%s346 + $0x78] sm:$0xff]
      %v409 = vld [vmem:[%s346 + $0x80] sm:$0xff]
      %v410 = vld [vmem:[%s346 + $0x88] sm:$0xff]
      %v411 = vld [vmem:[%s346 + $0x90] sm:$0xff]
      %v412 = vld [vmem:[%s346 + $0x98] sm:$0xff]
      %v413 = vld [vmem:[%s346 + $0xa0] sm:$0xff]
      %v414 = vld [vmem:[%s346 + $0xa8] sm:$0xff]
      %v415 = vld [vmem:[%s346 + $0xb0] sm:$0xff]
      %v416 = vld [vmem:[%s346 + $0xb8] sm:$0xff]
      %v417 = vld [vmem:[%s346 + $0xc0] sm:$0xff]
      %v418 = vld [vmem:[%s346 + $0xc8] sm:$0xff]
      %v419 = vld [vmem:[%s346 + $0xd0] sm:$0xff]
      %v420 = vld [vmem:[%s346 + $0xd8] sm:$0xff]
      %v421 = vld [vmem:[%s346 + $0xe0] sm:$0xff]
      %v422 = vld [vmem:[%s346 + $0xe8] sm:$0xff]
      %v423 = vld [vmem:[%s346 + $0xf0] sm:$0xff]
      %v424 = vld [vmem:[%s346 + $0xf8] sm:$0xff]
      %s425 = scalar_lea.vmem [#allocation2], 24
      %vm426 = vcmask 31744
      %427 = vst.msk [vmem:[%s425 + $0x1] sm:$0xff] %vm426, %v393
      %428 = vst.msk [vmem:[%s425 + $0x9] sm:$0xff] %vm426, %v394
      %429 = vst.msk [vmem:[%s425 + $0x19] sm:$0xff] %vm426, %v395
      %430 = vst.msk [vmem:[%s425 + $0x21] sm:$0xff] %vm426, %v396
      %431 = vst.msk [vmem:[%s425 + $0x31] sm:$0xff] %vm426, %v397
      %432 = vst.msk [vmem:[%s425 + $0x39] sm:$0xff] %vm426, %v398
      %433 = vst.msk [vmem:[%s425 + $0x49] sm:$0xff] %vm426, %v399
      %434 = vst.msk [vmem:[%s425 + $0x51] sm:$0xff] %vm426, %v400
      %435 = vst.msk [vmem:[%s425 + $0x61] sm:$0xff] %vm426, %v401
      %436 = vst.msk [vmem:[%s425 + $0x69] sm:$0xff] %vm426, %v402
      %437 = vst.msk [vmem:[%s425 + $0x79] sm:$0xff] %vm426, %v403
      %438 = vst.msk [vmem:[%s425 + $0x81] sm:$0xff] %vm426, %v404
      %439 = vst.msk [vmem:[%s425 + $0x91] sm:$0xff] %vm426, %v405
      %440 = vst.msk [vmem:[%s425 + $0x99] sm:$0xff] %vm426, %v406
      %441 = vst.msk [vmem:[%s425 + $0xa9] sm:$0xff] %vm426, %v407
      %442 = vst.msk [vmem:[%s425 + $0xb1] sm:$0xff] %vm426, %v408
      %443 = vst.msk [vmem:[%s425 + $0xc1] sm:$0xff] %vm426, %v409
      %444 = vst.msk [vmem:[%s425 + $0xc9] sm:$0xff] %vm426, %v410
      %445 = vst.msk [vmem:[%s425 + $0xd9] sm:$0xff] %vm426, %v411
      %446 = vst.msk [vmem:[%s425 + $0xe1] sm:$0xff] %vm426, %v412
      %447 = vst.msk [vmem:[%s425 + $0xf1] sm:$0xff] %vm426, %v413
      %448 = vst.msk [vmem:[%s425 + $0xf9] sm:$0xff] %vm426, %v414
      %449 = vst.msk [vmem:[%s425 + $0x109] sm:$0xff] %vm426, %v415
      %450 = vst.msk [vmem:[%s425 + $0x111] sm:$0xff] %vm426, %v416
      %451 = vst.msk [vmem:[%s425 + $0x121] sm:$0xff] %vm426, %v417
      %452 = vst.msk [vmem:[%s425 + $0x129] sm:$0xff] %vm426, %v418
      %453 = vst.msk [vmem:[%s425 + $0x139] sm:$0xff] %vm426, %v419
      %454 = vst.msk [vmem:[%s425 + $0x141] sm:$0xff] %vm426, %v420
      %455 = vst.msk [vmem:[%s425 + $0x151] sm:$0xff] %vm426, %v421
      %456 = vst.msk [vmem:[%s425 + $0x159] sm:$0xff] %vm426, %v422
      %457 = vst.msk [vmem:[%s425 + $0x169] sm:$0xff] %vm426, %v423
      %458 = vst.msk [vmem:[%s425 + $0x171] sm:$0xff] %vm426, %v424
      %p459 = scmp.eq.s32.totalorder %s21, 0
      %v460 = vld [vmem:[%s360] sm:$0xff]
      %v461 = vld [vmem:[%s360 + $0x8] sm:$0xff]
      %s462 = scalar_select %p459, 1, 0
      %v463 = vstv %s462
      %vm464 = vcmp.eq.s32.totalorder %v463, 1
      %v465 = vsel %vm464, 0.0, %v460
      %v466 = vsel %vm464, 0.0, %v461
      %467 = vst.msk [vmem:[#allocation2 + $0x1] sm:$0xff] %vm426, %v465
      %468 = vst.msk [vmem:[#allocation2 + $0x9] sm:$0xff] %vm426, %v466
      %v469 = vld [vmem:[%s377] sm:$0xff]
      %v470 = vld [vmem:[%s377 + $0x8] sm:$0xff]
      %v471 = vsel %vm464, 0.0, %v469
      %v472 = vsel %vm464, 0.0, %v470
      %s473 = scalar_lea.vmem [#allocation2], 408
      %474 = vst.msk [vmem:[%s473 + $0x1] sm:$0xff] %vm426, %v471
      %475 = vst.msk [vmem:[%s473 + $0x9] sm:$0xff] %vm426, %v472
      %vm476 = vcmask 24576
      %477 = vst.msk [vmem:[#allocation2] sm:$0x1] %vm476, 0.0
      %478 = vst.msk [vmem:[#allocation2 + $0x18] sm:$0x1] %vm476, 0.0
      %479 = vst.msk [vmem:[#allocation2 + $0x30] sm:$0x1] %vm476, 0.0
      %480 = vst.msk [vmem:[#allocation2 + $0x48] sm:$0x1] %vm476, 0.0
      %481 = vst.msk [vmem:[#allocation2 + $0x60] sm:$0x1] %vm476, 0.0
      %482 = vst.msk [vmem:[#allocation2 + $0x78] sm:$0x1] %vm476, 0.0
      %483 = vst.msk [vmem:[#allocation2 + $0x90] sm:$0x1] %vm476, 0.0
      %484 = vst.msk [vmem:[#allocation2 + $0xa8] sm:$0x1] %vm476, 0.0
      %485 = vst.msk [vmem:[#allocation2 + $0xc0] sm:$0x1] %vm476, 0.0
      %486 = vst.msk [vmem:[#allocation2 + $0xd8] sm:$0x1] %vm476, 0.0
      %487 = vst.msk [vmem:[#allocation2 + $0xf0] sm:$0x1] %vm476, 0.0
      %488 = vst.msk [vmem:[#allocation2 + $0x108] sm:$0x1] %vm476, 0.0
      %489 = vst.msk [vmem:[#allocation2 + $0x120] sm:$0x1] %vm476, 0.0
      %490 = vst.msk [vmem:[#allocation2 + $0x138] sm:$0x1] %vm476, 0.0
      %491 = vst.msk [vmem:[#allocation2 + $0x150] sm:$0x1] %vm476, 0.0
      %492 = vst.msk [vmem:[#allocation2 + $0x168] sm:$0x1] %vm476, 0.0
      %493 = vst.msk [vmem:[#allocation2 + $0x180] sm:$0x1] %vm476, 0.0
      %494 = vst.msk [vmem:[#allocation2 + $0x198] sm:$0x1] %vm476, 0.0
      %495 = vst.msk [vmem:[#allocation2 + $0x11] sm:$0x1] %vm476, 0.0
      %496 = vst.msk [vmem:[#allocation2 + $0x29] sm:$0x1] %vm476, 0.0
      %497 = vst.msk [vmem:[#allocation2 + $0x41] sm:$0x1] %vm476, 0.0
      %498 = vst.msk [vmem:[#allocation2 + $0x59] sm:$0x1] %vm476, 0.0
      %499 = vst.msk [vmem:[#allocation2 + $0x71] sm:$0x1] %vm476, 0.0
      %500 = vst.msk [vmem:[#allocation2 + $0x89] sm:$0x1] %vm476, 0.0
      %501 = vst.msk [vmem:[#allocation2 + $0xa1] sm:$0x1] %vm476, 0.0
      %502 = vst.msk [vmem:[#allocation2 + $0xb9] sm:$0x1] %vm476, 0.0
      %503 = vst.msk [vmem:[#allocation2 + $0xd1] sm:$0x1] %vm476, 0.0
      %504 = vst.msk [vmem:[#allocation2 + $0xe9] sm:$0x1] %vm476, 0.0
      %505 = vst.msk [vmem:[#allocation2 + $0x101] sm:$0x1] %vm476, 0.0
      %506 = vst.msk [vmem:[#allocation2 + $0x119] sm:$0x1] %vm476, 0.0
      %507 = vst.msk [vmem:[#allocation2 + $0x131] sm:$0x1] %vm476, 0.0
      %508 = vst.msk [vmem:[#allocation2 + $0x149] sm:$0x1] %vm476, 0.0
      %509 = vst.msk [vmem:[#allocation2 + $0x161] sm:$0x1] %vm476, 0.0
      %510 = vst.msk [vmem:[#allocation2 + $0x179] sm:$0x1] %vm476, 0.0
      %511 = vst.msk [vmem:[#allocation2 + $0x191] sm:$0x1] %vm476, 0.0
      %512 = vst.msk [vmem:[#allocation2 + $0x1a9] sm:$0x1] %vm476, 0.0
      %v513 = vld [vmem:[%s4] sm:$0x1]
      %v514 = vld [vmem:[#allocation2] sm:$0xff]
      %v515 = vld [vmem:[#allocation2 + $0x8] sm:$0xff]
      %v516 = vld [vmem:[#allocation2 + $0x18] sm:$0xff]
      %v517 = vld [vmem:[#allocation2 + $0x20] sm:$0xff]
      %v518 = vld [vmem:[#allocation2 + $0x30] sm:$0xff]
      %v519 = vld [vmem:[#allocation2 + $0x38] sm:$0xff]
      %v520 = vld [vmem:[#allocation2 + $0x48] sm:$0xff]
      %v521 = vld [vmem:[#allocation2 + $0x50] sm:$0xff]
      %v522 = vld [vmem:[#allocation2 + $0x60] sm:$0xff]
      %v523 = vld [vmem:[#allocation2 + $0x68] sm:$0xff]
      %v524 = vld [vmem:[#allocation2 + $0x78] sm:$0xff]
      %v525 = vld [vmem:[#allocation2 + $0x80] sm:$0xff]
      %v526 = vld [vmem:[#allocation2 + $0x90] sm:$0xff]
      %v527 = vld [vmem:[#allocation2 + $0x98] sm:$0xff]
      %v528 = vld [vmem:[#allocation2 + $0xa8] sm:$0xff]
      %v529 = vld [vmem:[#allocation2 + $0xb0] sm:$0xff]
      %v530 = vld [vmem:[#allocation2 + $0xc0] sm:$0xff]
      %v531 = vld [vmem:[#allocation2 + $0xc8] sm:$0xff]
      %v532 = vld [vmem:[#allocation2 + $0xd8] sm:$0xff]
      %v533 = vld [vmem:[#allocation2 + $0xe0] sm:$0xff]
      %v534 = vld [vmem:[#allocation2 + $0xf0] sm:$0xff]
      %v535 = vld [vmem:[#allocation2 + $0xf8] sm:$0xff]
      %v536 = vld [vmem:[#allocation2 + $0x108] sm:$0xff]
      %v537 = vld [vmem:[#allocation2 + $0x110] sm:$0xff]
      %v538 = vld [vmem:[#allocation2 + $0x120] sm:$0xff]
      %v539 = vld [vmem:[#allocation2 + $0x128] sm:$0xff]
      %v540 = vld [vmem:[#allocation2 + $0x138] sm:$0xff]
      %v541 = vld [vmem:[#allocation2 + $0x140] sm:$0xff]
      %v542 = vld [vmem:[#allocation2 + $0x150] sm:$0xff]
      %v543 = vld [vmem:[#allocation2 + $0x158] sm:$0xff]
      %v544 = vld [vmem:[#allocation2 + $0x168] sm:$0xff]
      %v545 = vld [vmem:[#allocation2 + $0x170] sm:$0xff]
      %546 = vst.msk [vmem:[#allocation3] sm:$0xff] %vm426, %v514
      %547 = vst.msk [vmem:[#allocation3 + $0x8] sm:$0xff] %vm426, %v515
      %548 = vst.msk [vmem:[#allocation3 + $0x10] sm:$0xff] %vm426, %v516
      %549 = vst.msk [vmem:[#allocation3 + $0x18] sm:$0xff] %vm426, %v517
      %550 = vst.msk [vmem:[#allocation3 + $0x20] sm:$0xff] %vm426, %v518
      %551 = vst.msk [vmem:[#allocation3 + $0x28] sm:$0xff] %vm426, %v519
      %552 = vst.msk [vmem:[#allocation3 + $0x30] sm:$0xff] %vm426, %v520
      %553 = vst.msk [vmem:[#allocation3 + $0x38] sm:$0xff] %vm426, %v521
      %554 = vst.msk [vmem:[#allocation3 + $0x40] sm:$0xff] %vm426, %v522
      %555 = vst.msk [vmem:[#allocation3 + $0x48] sm:$0xff] %vm426, %v523
      %556 = vst.msk [vmem:[#allocation3 + $0x50] sm:$0xff] %vm426, %v524
      %557 = vst.msk [vmem:[#allocation3 + $0x58] sm:$0xff] %vm426, %v525
      %558 = vst.msk [vmem:[#allocation3 + $0x60] sm:$0xff] %vm426, %v526
      %559 = vst.msk [vmem:[#allocation3 + $0x68] sm:$0xff] %vm426, %v527
      %560 = vst.msk [vmem:[#allocation3 + $0x70] sm:$0xff] %vm426, %v528
      %561 = vst.msk [vmem:[#allocation3 + $0x78] sm:$0xff] %vm426, %v529
      %562 = vst.msk [vmem:[#allocation3 + $0x80] sm:$0xff] %vm426, %v530
      %563 = vst.msk [vmem:[#allocation3 + $0x88] sm:$0xff] %vm426, %v531
      %564 = vst.msk [vmem:[#allocation3 + $0x90] sm:$0xff] %vm426, %v532
      %565 = vst.msk [vmem:[#allocation3 + $0x98] sm:$0xff] %vm426, %v533
      %566 = vst.msk [vmem:[#allocation3 + $0xa0] sm:$0xff] %vm426, %v534
      %567 = vst.msk [vmem:[#allocation3 + $0xa8] sm:$0xff] %vm426, %v535
      %568 = vst.msk [vmem:[#allocation3 + $0xb0] sm:$0xff] %vm426, %v536
      %569 = vst.msk [vmem:[#allocation3 + $0xb8] sm:$0xff] %vm426, %v537
      %570 = vst.msk [vmem:[#allocation3 + $0xc0] sm:$0xff] %vm426, %v538
      %571 = vst.msk [vmem:[#allocation3 + $0xc8] sm:$0xff] %vm426, %v539
      %572 = vst.msk [vmem:[#allocation3 + $0xd0] sm:$0xff] %vm426, %v540
      %573 = vst.msk [vmem:[#allocation3 + $0xd8] sm:$0xff] %vm426, %v541
      %574 = vst.msk [vmem:[#allocation3 + $0xe0] sm:$0xff] %vm426, %v542
      %575 = vst.msk [vmem:[#allocation3 + $0xe8] sm:$0xff] %vm426, %v543
      %576 = vst.msk [vmem:[#allocation3 + $0xf0] sm:$0xff] %vm426, %v544
      %577 = vst.msk [vmem:[#allocation3 + $0xf8] sm:$0xff] %vm426, %v545
      %v578 = vld [vmem:[#allocation2 + $0x1] sm:$0xff]
      %v579 = vld [vmem:[#allocation2 + $0x9] sm:$0xff]
      %v580 = vld [vmem:[#allocation2 + $0x19] sm:$0xff]
      %v581 = vld [vmem:[#allocation2 + $0x21] sm:$0xff]
      %v582 = vld [vmem:[#allocation2 + $0x31] sm:$0xff]
      %v583 = vld [vmem:[#allocation2 + $0x39] sm:$0xff]
      %v584 = vld [vmem:[#allocation2 + $0x49] sm:$0xff]
      %v585 = vld [vmem:[#allocation2 + $0x51] sm:$0xff]
      %v586 = vld [vmem:[#allocation2 + $0x61] sm:$0xff]
      %v587 = vld [vmem:[#allocation2 + $0x69] sm:$0xff]
      %v588 = vld [vmem:[#allocation2 + $0x79] sm:$0xff]
      %v589 = vld [vmem:[#allocation2 + $0x81] sm:$0xff]
      %v590 = vld [vmem:[#allocation2 + $0x91] sm:$0xff]
      %v591 = vld [vmem:[#allocation2 + $0x99] sm:$0xff]
      %v592 = vld [vmem:[#allocation2 + $0xa9] sm:$0xff]
      %v593 = vld [vmem:[#allocation2 + $0xb1] sm:$0xff]
      %v594 = vld [vmem:[#allocation2 + $0xc1] sm:$0xff]
      %v595 = vld [vmem:[#allocation2 + $0xc9] sm:$0xff]
      %v596 = vld [vmem:[#allocation2 + $0xd9] sm:$0xff]
      %v597 = vld [vmem:[#allocation2 + $0xe1] sm:$0xff]
      %v598 = vld [vmem:[#allocation2 + $0xf1] sm:$0xff]
      %v599 = vld [vmem:[#allocation2 + $0xf9] sm:$0xff]
      %v600 = vld [vmem:[#allocation2 + $0x109] sm:$0xff]
      %v601 = vld [vmem:[#allocation2 + $0x111] sm:$0xff]
      %v602 = vld [vmem:[#allocation2 + $0x121] sm:$0xff]
      %v603 = vld [vmem:[#allocation2 + $0x129] sm:$0xff]
      %v604 = vld [vmem:[#allocation2 + $0x139] sm:$0xff]
      %v605 = vld [vmem:[#allocation2 + $0x141] sm:$0xff]
      %v606 = vld [vmem:[#allocation2 + $0x151] sm:$0xff]
      %v607 = vld [vmem:[#allocation2 + $0x159] sm:$0xff]
      %v608 = vld [vmem:[#allocation2 + $0x169] sm:$0xff]
      %v609 = vld [vmem:[#allocation2 + $0x171] sm:$0xff]
      %642 = vrot.lane.b32.xlu0 %v578, 4
      %v643 = vpop.permute.xlu0 %642
      %644 = vrot.lane.b32.xlu0 %v579, 4
      %v645 = vpop.permute.xlu0 %644
      %646 = vrot.lane.b32.xlu0 %v580, 4
      %v647 = vpop.permute.xlu0 %646
      %648 = vrot.lane.b32.xlu0 %v581, 4
      %v649 = vpop.permute.xlu0 %648
      %650 = vrot.lane.b32.xlu0 %v582, 4
      %v651 = vpop.permute.xlu0 %650
      %652 = vrot.lane.b32.xlu0 %v583, 4
      %v653 = vpop.permute.xlu0 %652
      %654 = vrot.lane.b32.xlu0 %v584, 4
      %v655 = vpop.permute.xlu0 %654
      %656 = vrot.lane.b32.xlu0 %v585, 4
      %v657 = vpop.permute.xlu0 %656
      %658 = vrot.lane.b32.xlu0 %v586, 4
      %v659 = vpop.permute.xlu0 %658
      %660 = vrot.lane.b32.xlu0 %v587, 4
      %v661 = vpop.permute.xlu0 %660
      %662 = vrot.lane.b32.xlu0 %v588, 4
      %v663 = vpop.permute.xlu0 %662
      %664 = vrot.lane.b32.xlu0 %v589, 4
      %v665 = vpop.permute.xlu0 %664
      %666 = vrot.lane.b32.xlu0 %v590, 4
      %v667 = vpop.permute.xlu0 %666
      %668 = vrot.lane.b32.xlu0 %v591, 4
      %v669 = vpop.permute.xlu0 %668
      %670 = vrot.lane.b32.xlu0 %v592, 4
      %v671 = vpop.permute.xlu0 %670
      %672 = vrot.lane.b32.xlu0 %v593, 4
      %v673 = vpop.permute.xlu0 %672
      %674 = vrot.lane.b32.xlu0 %v594, 4
      %v675 = vpop.permute.xlu0 %674
      %676 = vrot.lane.b32.xlu0 %v595, 4
      %v677 = vpop.permute.xlu0 %676
      %678 = vrot.lane.b32.xlu0 %v596, 4
      %v679 = vpop.permute.xlu0 %678
      %680 = vrot.lane.b32.xlu0 %v597, 4
      %v681 = vpop.permute.xlu0 %680
      %682 = vrot.lane.b32.xlu0 %v598, 4
      %v683 = vpop.permute.xlu0 %682
      %684 = vrot.lane.b32.xlu0 %v599, 4
      %v685 = vpop.permute.xlu0 %684
      %686 = vrot.lane.b32.xlu0 %v600, 4
      %v687 = vpop.permute.xlu0 %686
      %688 = vrot.lane.b32.xlu0 %v601, 4
      %v689 = vpop.permute.xlu0 %688
      %690 = vrot.lane.b32.xlu0 %v602, 4
      %v691 = vpop.permute.xlu0 %690
      %692 = vrot.lane.b32.xlu0 %v603, 4
      %v693 = vpop.permute.xlu0 %692
      %694 = vrot.lane.b32.xlu0 %v604, 4
      %v695 = vpop.permute.xlu0 %694
      %696 = vrot.lane.b32.xlu0 %v605, 4
      %v697 = vpop.permute.xlu0 %696
      %698 = vrot.lane.b32.xlu0 %v606, 4
      %v699 = vpop.permute.xlu0 %698
      %700 = vrot.lane.b32.xlu0 %v607, 4
      %v701 = vpop.permute.xlu0 %700
      %702 = vrot.lane.b32.xlu0 %v608, 4
      %v703 = vpop.permute.xlu0 %702
      %704 = vrot.lane.b32.xlu0 %v609, 4
      %v705 = vpop.permute.xlu0 %704
      %vm738 = vcmask 64544
      %739 = vst.msk [vmem:[#allocation3] sm:$0xff] %vm738, %v643
      %740 = vst.msk [vmem:[#allocation3 + $0x8] sm:$0xff] %vm738, %v645
      %741 = vst.msk [vmem:[#allocation3 + $0x10] sm:$0xff] %vm738, %v647
      %742 = vst.msk [vmem:[#allocation3 + $0x18] sm:$0xff] %vm738, %v649
      %743 = vst.msk [vmem:[#allocation3 + $0x20] sm:$0xff] %vm738, %v651
      %744 = vst.msk [vmem:[#allocation3 + $0x28] sm:$0xff] %vm738, %v653
      %745 = vst.msk [vmem:[#allocation3 + $0x30] sm:$0xff] %vm738, %v655
      %746 = vst.msk [vmem:[#allocation3 + $0x38] sm:$0xff] %vm738, %v657
      %747 = vst.msk [vmem:[#allocation3 + $0x40] sm:$0xff] %vm738, %v659
      %748 = vst.msk [vmem:[#allocation3 + $0x48] sm:$0xff] %vm738, %v661
      %749 = vst.msk [vmem:[#allocation3 + $0x50] sm:$0xff] %vm738, %v663
      %750 = vst.msk [vmem:[#allocation3 + $0x58] sm:$0xff] %vm738, %v665
      %751 = vst.msk [vmem:[#allocation3 + $0x60] sm:$0xff] %vm738, %v667
      %752 = vst.msk [vmem:[#allocation3 + $0x68] sm:$0xff] %vm738, %v669
      %753 = vst.msk [vmem:[#allocation3 + $0x70] sm:$0xff] %vm738, %v671
      %754 = vst.msk [vmem:[#allocation3 + $0x78] sm:$0xff] %vm738, %v673
      %755 = vst.msk [vmem:[#allocation3 + $0x80] sm:$0xff] %vm738, %v675
      %756 = vst.msk [vmem:[#allocation3 + $0x88] sm:$0xff] %vm738, %v677
      %757 = vst.msk [vmem:[#allocation3 + $0x90] sm:$0xff] %vm738, %v679
      %758 = vst.msk [vmem:[#allocation3 + $0x98] sm:$0xff] %vm738, %v681
      %759 = vst.msk [vmem:[#allocation3 + $0xa0] sm:$0xff] %vm738, %v683
      %760 = vst.msk [vmem:[#allocation3 + $0xa8] sm:$0xff] %vm738, %v685
      %761 = vst.msk [vmem:[#allocation3 + $0xb0] sm:$0xff] %vm738, %v687
      %762 = vst.msk [vmem:[#allocation3 + $0xb8] sm:$0xff] %vm738, %v689
      %763 = vst.msk [vmem:[#allocation3 + $0xc0] sm:$0xff] %vm738, %v691
      %764 = vst.msk [vmem:[#allocation3 + $0xc8] sm:$0xff] %vm738, %v693
      %765 = vst.msk [vmem:[#allocation3 + $0xd0] sm:$0xff] %vm738, %v695
      %766 = vst.msk [vmem:[#allocation3 + $0xd8] sm:$0xff] %vm738, %v697
      %767 = vst.msk [vmem:[#allocation3 + $0xe0] sm:$0xff] %vm738, %v699
      %768 = vst.msk [vmem:[#allocation3 + $0xe8] sm:$0xff] %vm738, %v701
      %769 = vst.msk [vmem:[#allocation3 + $0xf0] sm:$0xff] %vm738, %v703
      %770 = vst.msk [vmem:[#allocation3 + $0xf8] sm:$0xff] %vm738, %v705
      %v771 = vld [vmem:[%s425] sm:$0xff]
      %v772 = vld [vmem:[%s425 + $0x8] sm:$0xff]
      %v773 = vld [vmem:[%s425 + $0x18] sm:$0xff]
      %v774 = vld [vmem:[%s425 + $0x20] sm:$0xff]
      %v775 = vld [vmem:[%s425 + $0x30] sm:$0xff]
      %v776 = vld [vmem:[%s425 + $0x38] sm:$0xff]
      %v777 = vld [vmem:[%s425 + $0x48] sm:$0xff]
      %v778 = vld [vmem:[%s425 + $0x50] sm:$0xff]
      %v779 = vld [vmem:[%s425 + $0x60] sm:$0xff]
      %v780 = vld [vmem:[%s425 + $0x68] sm:$0xff]
      %v781 = vld [vmem:[%s425 + $0x78] sm:$0xff]
      %v782 = vld [vmem:[%s425 + $0x80] sm:$0xff]
      %v783 = vld [vmem:[%s425 + $0x90] sm:$0xff]
      %v784 = vld [vmem:[%s425 + $0x98] sm:$0xff]
      %v785 = vld [vmem:[%s425 + $0xa8] sm:$0xff]
      %v786 = vld [vmem:[%s425 + $0xb0] sm:$0xff]
      %v787 = vld [vmem:[%s425 + $0xc0] sm:$0xff]
      %v788 = vld [vmem:[%s425 + $0xc8] sm:$0xff]
      %v789 = vld [vmem:[%s425 + $0xd8] sm:$0xff]
      %v790 = vld [vmem:[%s425 + $0xe0] sm:$0xff]
      %v791 = vld [vmem:[%s425 + $0xf0] sm:$0xff]
      %v792 = vld [vmem:[%s425 + $0xf8] sm:$0xff]
      %v793 = vld [vmem:[%s425 + $0x108] sm:$0xff]
      %v794 = vld [vmem:[%s425 + $0x110] sm:$0xff]
      %v795 = vld [vmem:[%s425 + $0x120] sm:$0xff]
      %v796 = vld [vmem:[%s425 + $0x128] sm:$0xff]
      %v797 = vld [vmem:[%s425 + $0x138] sm:$0xff]
      %v798 = vld [vmem:[%s425 + $0x140] sm:$0xff]
      %v799 = vld [vmem:[%s425 + $0x150] sm:$0xff]
      %v800 = vld [vmem:[%s425 + $0x158] sm:$0xff]
      %v801 = vld [vmem:[%s425 + $0x168] sm:$0xff]
      %v802 = vld [vmem:[%s425 + $0x170] sm:$0xff]
      %835 = vrot.lane.b32.xlu0 %v771, 8
      %v836 = vpop.permute.xlu0 %835
      %837 = vrot.lane.b32.xlu0 %v772, 8
      %v838 = vpop.permute.xlu0 %837
      %839 = vrot.lane.b32.xlu0 %v773, 8
      %v840 = vpop.permute.xlu0 %839
      %841 = vrot.lane.b32.xlu0 %v774, 8
      %v842 = vpop.permute.xlu0 %841
      %843 = vrot.lane.b32.xlu0 %v775, 8
      %v844 = vpop.permute.xlu0 %843
      %845 = vrot.lane.b32.xlu0 %v776, 8
      %v846 = vpop.permute.xlu0 %845
      %847 = vrot.lane.b32.xlu0 %v777, 8
      %v848 = vpop.permute.xlu0 %847
      %849 = vrot.lane.b32.xlu0 %v778, 8
      %v850 = vpop.permute.xlu0 %849
      %851 = vrot.lane.b32.xlu0 %v779, 8
      %v852 = vpop.permute.xlu0 %851
      %853 = vrot.lane.b32.xlu0 %v780, 8
      %v854 = vpop.permute.xlu0 %853
      %855 = vrot.lane.b32.xlu0 %v781, 8
      %v856 = vpop.permute.xlu0 %855
      %857 = vrot.lane.b32.xlu0 %v782, 8
      %v858 = vpop.permute.xlu0 %857
      %859 = vrot.lane.b32.xlu0 %v783, 8
      %v860 = vpop.permute.xlu0 %859
      %861 = vrot.lane.b32.xlu0 %v784, 8
      %v862 = vpop.permute.xlu0 %861
      %863 = vrot.lane.b32.xlu0 %v785, 8
      %v864 = vpop.permute.xlu0 %863
      %865 = vrot.lane.b32.xlu0 %v786, 8
      %v866 = vpop.permute.xlu0 %865
      %867 = vrot.lane.b32.xlu0 %v787, 8
      %v868 = vpop.permute.xlu0 %867
      %869 = vrot.lane.b32.xlu0 %v788, 8
      %v870 = vpop.permute.xlu0 %869
      %871 = vrot.lane.b32.xlu0 %v789, 8
      %v872 = vpop.permute.xlu0 %871
      %873 = vrot.lane.b32.xlu0 %v790, 8
      %v874 = vpop.permute.xlu0 %873
      %875 = vrot.lane.b32.xlu0 %v791, 8
      %v876 = vpop.permute.xlu0 %875
      %877 = vrot.lane.b32.xlu0 %v792, 8
      %v878 = vpop.permute.xlu0 %877
      %879 = vrot.lane.b32.xlu0 %v793, 8
      %v880 = vpop.permute.xlu0 %879
      %881 = vrot.lane.b32.xlu0 %v794, 8
      %v882 = vpop.permute.xlu0 %881
      %883 = vrot.lane.b32.xlu0 %v795, 8
      %v884 = vpop.permute.xlu0 %883
      %885 = vrot.lane.b32.xlu0 %v796, 8
      %v886 = vpop.permute.xlu0 %885
      %887 = vrot.lane.b32.xlu0 %v797, 8
      %v888 = vpop.permute.xlu0 %887
      %889 = vrot.lane.b32.xlu0 %v798, 8
      %v890 = vpop.permute.xlu0 %889
      %891 = vrot.lane.b32.xlu0 %v799, 8
      %v892 = vpop.permute.xlu0 %891
      %893 = vrot.lane.b32.xlu0 %v800, 8
      %v894 = vpop.permute.xlu0 %893
      %895 = vrot.lane.b32.xlu0 %v801, 8
      %v896 = vpop.permute.xlu0 %895
      %897 = vrot.lane.b32.xlu0 %v802, 8
      %v898 = vpop.permute.xlu0 %897
      %vm931 = vcmask 97344
      %932 = vst.msk [vmem:[#allocation3] sm:$0xff] %vm931, %v836
      %933 = vst.msk [vmem:[#allocation3 + $0x8] sm:$0xff] %vm931, %v838
      %934 = vst.msk [vmem:[#allocation3 + $0x10] sm:$0xff] %vm931, %v840
      %935 = vst.msk [vmem:[#allocation3 + $0x18] sm:$0xff] %vm931, %v842
      %936 = vst.msk [vmem:[#allocation3 + $0x20] sm:$0xff] %vm931, %v844
      %937 = vst.msk [vmem:[#allocation3 + $0x28] sm:$0xff] %vm931, %v846
      %938 = vst.msk [vmem:[#allocation3 + $0x30] sm:$0xff] %vm931, %v848
      %939 = vst.msk [vmem:[#allocation3 + $0x38] sm:$0xff] %vm931, %v850
      %940 = vst.msk [vmem:[#allocation3 + $0x40] sm:$0xff] %vm931, %v852
      %941 = vst.msk [vmem:[#allocation3 + $0x48] sm:$0xff] %vm931, %v854
      %942 = vst.msk [vmem:[#allocation3 + $0x50] sm:$0xff] %vm931, %v856
      %943 = vst.msk [vmem:[#allocation3 + $0x58] sm:$0xff] %vm931, %v858
      %944 = vst.msk [vmem:[#allocation3 + $0x60] sm:$0xff] %vm931, %v860
      %945 = vst.msk [vmem:[#allocation3 + $0x68] sm:$0xff] %vm931, %v862
      %946 = vst.msk [vmem:[#allocation3 + $0x70] sm:$0xff] %vm931, %v864
      %947 = vst.msk [vmem:[#allocation3 + $0x78] sm:$0xff] %vm931, %v866
      %948 = vst.msk [vmem:[#allocation3 + $0x80] sm:$0xff] %vm931, %v868
      %949 = vst.msk [vmem:[#allocation3 + $0x88] sm:$0xff] %vm931, %v870
      %950 = vst.msk [vmem:[#allocation3 + $0x90] sm:$0xff] %vm931, %v872
      %951 = vst.msk [vmem:[#allocation3 + $0x98] sm:$0xff] %vm931, %v874
      %952 = vst.msk [vmem:[#allocation3 + $0xa0] sm:$0xff] %vm931, %v876
      %953 = vst.msk [vmem:[#allocation3 + $0xa8] sm:$0xff] %vm931, %v878
      %954 = vst.msk [vmem:[#allocation3 + $0xb0] sm:$0xff] %vm931, %v880
      %955 = vst.msk [vmem:[#allocation3 + $0xb8] sm:$0xff] %vm931, %v882
      %956 = vst.msk [vmem:[#allocation3 + $0xc0] sm:$0xff] %vm931, %v884
      %957 = vst.msk [vmem:[#allocation3 + $0xc8] sm:$0xff] %vm931, %v886
      %958 = vst.msk [vmem:[#allocation3 + $0xd0] sm:$0xff] %vm931, %v888
      %959 = vst.msk [vmem:[#allocation3 + $0xd8] sm:$0xff] %vm931, %v890
      %960 = vst.msk [vmem:[#allocation3 + $0xe0] sm:$0xff] %vm931, %v892
      %961 = vst.msk [vmem:[#allocation3 + $0xe8] sm:$0xff] %vm931, %v894
      %962 = vst.msk [vmem:[#allocation3 + $0xf0] sm:$0xff] %vm931, %v896
      %963 = vst.msk [vmem:[#allocation3 + $0xf8] sm:$0xff] %vm931, %v898
      %v964 = vld [vmem:[%s425 + $0x1] sm:$0xff]
      %v965 = vld [vmem:[%s425 + $0x9] sm:$0xff]
      %v966 = vld [vmem:[%s425 + $0x19] sm:$0xff]
      %v967 = vld [vmem:[%s425 + $0x21] sm:$0xff]
      %v968 = vld [vmem:[%s425 + $0x31] sm:$0xff]
      %v969 = vld [vmem:[%s425 + $0x39] sm:$0xff]
      %v970 = vld [vmem:[%s425 + $0x49] sm:$0xff]
      %v971 = vld [vmem:[%s425 + $0x51] sm:$0xff]
      %v972 = vld [vmem:[%s425 + $0x61] sm:$0xff]
      %v973 = vld [vmem:[%s425 + $0x69] sm:$0xff]
      %v974 = vld [vmem:[%s425 + $0x79] sm:$0xff]
      %v975 = vld [vmem:[%s425 + $0x81] sm:$0xff]
      %v976 = vld [vmem:[%s425 + $0x91] sm:$0xff]
      %v977 = vld [vmem:[%s425 + $0x99] sm:$0xff]
      %v978 = vld [vmem:[%s425 + $0xa9] sm:$0xff]
      %v979 = vld [vmem:[%s425 + $0xb1] sm:$0xff]
      %v980 = vld [vmem:[%s425 + $0xc1] sm:$0xff]
      %v981 = vld [vmem:[%s425 + $0xc9] sm:$0xff]
      %v982 = vld [vmem:[%s425 + $0xd9] sm:$0xff]
      %v983 = vld [vmem:[%s425 + $0xe1] sm:$0xff]
      %v984 = vld [vmem:[%s425 + $0xf1] sm:$0xff]
      %v985 = vld [vmem:[%s425 + $0xf9] sm:$0xff]
      %v986 = vld [vmem:[%s425 + $0x109] sm:$0xff]
      %v987 = vld [vmem:[%s425 + $0x111] sm:$0xff]
      %v988 = vld [vmem:[%s425 + $0x121] sm:$0xff]
      %v989 = vld [vmem:[%s425 + $0x129] sm:$0xff]
      %v990 = vld [vmem:[%s425 + $0x139] sm:$0xff]
      %v991 = vld [vmem:[%s425 + $0x141] sm:$0xff]
      %v992 = vld [vmem:[%s425 + $0x151] sm:$0xff]
      %v993 = vld [vmem:[%s425 + $0x159] sm:$0xff]
      %v994 = vld [vmem:[%s425 + $0x169] sm:$0xff]
      %v995 = vld [vmem:[%s425 + $0x171] sm:$0xff]
      %1028 = vrot.lane.b32.xlu0 %v964, 12
      %v1029 = vpop.permute.xlu0 %1028
      %1030 = vrot.lane.b32.xlu0 %v965, 12
      %v1031 = vpop.permute.xlu0 %1030
      %1032 = vrot.lane.b32.xlu0 %v966, 12
      %v1033 = vpop.permute.xlu0 %1032
      %1034 = vrot.lane.b32.xlu0 %v967, 12
      %v1035 = vpop.permute.xlu0 %1034
      %1036 = vrot.lane.b32.xlu0 %v968, 12
      %v1037 = vpop.permute.xlu0 %1036
      %1038 = vrot.lane.b32.xlu0 %v969, 12
      %v1039 = vpop.permute.xlu0 %1038
      %1040 = vrot.lane.b32.xlu0 %v970, 12
      %v1041 = vpop.permute.xlu0 %1040
      %1042 = vrot.lane.b32.xlu0 %v971, 12
      %v1043 = vpop.permute.xlu0 %1042
      %1044 = vrot.lane.b32.xlu0 %v972, 12
      %v1045 = vpop.permute.xlu0 %1044
      %1046 = vrot.lane.b32.xlu0 %v973, 12
      %v1047 = vpop.permute.xlu0 %1046
      %1048 = vrot.lane.b32.xlu0 %v974, 12
      %v1049 = vpop.permute.xlu0 %1048
      %1050 = vrot.lane.b32.xlu0 %v975, 12
      %v1051 = vpop.permute.xlu0 %1050
      %1052 = vrot.lane.b32.xlu0 %v976, 12
      %v1053 = vpop.permute.xlu0 %1052
      %1054 = vrot.lane.b32.xlu0 %v977, 12
      %v1055 = vpop.permute.xlu0 %1054
      %1056 = vrot.lane.b32.xlu0 %v978, 12
      %v1057 = vpop.permute.xlu0 %1056
      %1058 = vrot.lane.b32.xlu0 %v979, 12
      %v1059 = vpop.permute.xlu0 %1058
      %1060 = vrot.lane.b32.xlu0 %v980, 12
      %v1061 = vpop.permute.xlu0 %1060
      %1062 = vrot.lane.b32.xlu0 %v981, 12
      %v1063 = vpop.permute.xlu0 %1062
      %1064 = vrot.lane.b32.xlu0 %v982, 12
      %v1065 = vpop.permute.xlu0 %1064
      %1066 = vrot.lane.b32.xlu0 %v983, 12
      %v1067 = vpop.permute.xlu0 %1066
      %1068 = vrot.lane.b32.xlu0 %v984, 12
      %v1069 = vpop.permute.xlu0 %1068
      %1070 = vrot.lane.b32.xlu0 %v985, 12
      %v1071 = vpop.permute.xlu0 %1070
      %1072 = vrot.lane.b32.xlu0 %v986, 12
      %v1073 = vpop.permute.xlu0 %1072
      %1074 = vrot.lane.b32.xlu0 %v987, 12
      %v1075 = vpop.permute.xlu0 %1074
      %1076 = vrot.lane.b32.xlu0 %v988, 12
      %v1077 = vpop.permute.xlu0 %1076
      %1078 = vrot.lane.b32.xlu0 %v989, 12
      %v1079 = vpop.permute.xlu0 %1078
      %1080 = vrot.lane.b32.xlu0 %v990, 12
      %v1081 = vpop.permute.xlu0 %1080
      %1082 = vrot.lane.b32.xlu0 %v991, 12
      %v1083 = vpop.permute.xlu0 %1082
      %1084 = vrot.lane.b32.xlu0 %v992, 12
      %v1085 = vpop.permute.xlu0 %1084
      %1086 = vrot.lane.b32.xlu0 %v993, 12
      %v1087 = vpop.permute.xlu0 %1086
      %1088 = vrot.lane.b32.xlu0 %v994, 12
      %v1089 = vpop.permute.xlu0 %1088
      %1090 = vrot.lane.b32.xlu0 %v995, 12
      %v1091 = vpop.permute.xlu0 %1090
      %vm1124 = vcmask 130144
      %1125 = vst.msk [vmem:[#allocation3] sm:$0xff] %vm1124, %v1029
      %1126 = vst.msk [vmem:[#allocation3 + $0x8] sm:$0xff] %vm1124, %v1031
      %1127 = vst.msk [vmem:[#allocation3 + $0x10] sm:$0xff] %vm1124, %v1033
      %1128 = vst.msk [vmem:[#allocation3 + $0x18] sm:$0xff] %vm1124, %v1035
      %1129 = vst.msk [vmem:[#allocation3 + $0x20] sm:$0xff] %vm1124, %v1037
      %1130 = vst.msk [vmem:[#allocation3 + $0x28] sm:$0xff] %vm1124, %v1039
      %1131 = vst.msk [vmem:[#allocation3 + $0x30] sm:$0xff] %vm1124, %v1041
      %1132 = vst.msk [vmem:[#allocation3 + $0x38] sm:$0xff] %vm1124, %v1043
      %1133 = vst.msk [vmem:[#allocation3 + $0x40] sm:$0xff] %vm1124, %v1045
      %1134 = vst.msk [vmem:[#allocation3 + $0x48] sm:$0xff] %vm1124, %v1047
      %1135 = vst.msk [vmem:[#allocation3 + $0x50] sm:$0xff] %vm1124, %v1049
      %1136 = vst.msk [vmem:[#allocation3 + $0x58] sm:$0xff] %vm1124, %v1051
      %1137 = vst.msk [vmem:[#allocation3 + $0x60] sm:$0xff] %vm1124, %v1053
      %1138 = vst.msk [vmem:[#allocation3 + $0x68] sm:$0xff] %vm1124, %v1055
      %1139 = vst.msk [vmem:[#allocation3 + $0x70] sm:$0xff] %vm1124, %v1057
      %1140 = vst.msk [vmem:[#allocation3 + $0x78] sm:$0xff] %vm1124, %v1059
      %1141 = vst.msk [vmem:[#allocation3 + $0x80] sm:$0xff] %vm1124, %v1061
      %1142 = vst.msk [vmem:[#allocation3 + $0x88] sm:$0xff] %vm1124, %v1063
      %1143 = vst.msk [vmem:[#allocation3 + $0x90] sm:$0xff] %vm1124, %v1065
      %1144 = vst.msk [vmem:[#allocation3 + $0x98] sm:$0xff] %vm1124, %v1067
      %1145 = vst.msk [vmem:[#allocation3 + $0xa0] sm:$0xff] %vm1124, %v1069
      %1146 = vst.msk [vmem:[#allocation3 + $0xa8] sm:$0xff] %vm1124, %v1071
      %1147 = vst.msk [vmem:[#allocation3 + $0xb0] sm:$0xff] %vm1124, %v1073
      %1148 = vst.msk [vmem:[#allocation3 + $0xb8] sm:$0xff] %vm1124, %v1075
      %1149 = vst.msk [vmem:[#allocation3 + $0xc0] sm:$0xff] %vm1124, %v1077
      %1150 = vst.msk [vmem:[#allocation3 + $0xc8] sm:$0xff] %vm1124, %v1079
      %1151 = vst.msk [vmem:[#allocation3 + $0xd0] sm:$0xff] %vm1124, %v1081
      %1152 = vst.msk [vmem:[#allocation3 + $0xd8] sm:$0xff] %vm1124, %v1083
      %1153 = vst.msk [vmem:[#allocation3 + $0xe0] sm:$0xff] %vm1124, %v1085
      %1154 = vst.msk [vmem:[#allocation3 + $0xe8] sm:$0xff] %vm1124, %v1087
      %1155 = vst.msk [vmem:[#allocation3 + $0xf0] sm:$0xff] %vm1124, %v1089
      %1156 = vst.msk [vmem:[#allocation3 + $0xf8] sm:$0xff] %vm1124, %v1091
      %v1157 = vld [vmem:[#allocation3] sm:$0xff]
      %v1158 = vld [vmem:[#allocation3 + $0x8] sm:$0xff]
      %v1159 = vld [vmem:[#allocation3 + $0x10] sm:$0xff]
      %v1160 = vld [vmem:[#allocation3 + $0x18] sm:$0xff]
      %v1161 = vld [vmem:[#allocation3 + $0x20] sm:$0xff]
      %v1162 = vld [vmem:[#allocation3 + $0x28] sm:$0xff]
      %v1163 = vld [vmem:[#allocation3 + $0x30] sm:$0xff]
      %v1164 = vld [vmem:[#allocation3 + $0x38] sm:$0xff]
      %v1165 = vld [vmem:[#allocation3 + $0x40] sm:$0xff]
      %v1166 = vld [vmem:[#allocation3 + $0x48] sm:$0xff]
      %v1167 = vld [vmem:[#allocation3 + $0x50] sm:$0xff]
      %v1168 = vld [vmem:[#allocation3 + $0x58] sm:$0xff]
      %v1169 = vld [vmem:[#allocation3 + $0x60] sm:$0xff]
      %v1170 = vld [vmem:[#allocation3 + $0x68] sm:$0xff]
      %v1171 = vld [vmem:[#allocation3 + $0x70] sm:$0xff]
      %v1172 = vld [vmem:[#allocation3 + $0x78] sm:$0xff]
      %v1173 = vld [vmem:[#allocation3 + $0x80] sm:$0xff]
      %v1174 = vld [vmem:[#allocation3 + $0x88] sm:$0xff]
      %v1175 = vld [vmem:[#allocation3 + $0x90] sm:$0xff]
      %v1176 = vld [vmem:[#allocation3 + $0x98] sm:$0xff]
      %v1177 = vld [vmem:[#allocation3 + $0xa0] sm:$0xff]
      %v1178 = vld [vmem:[#allocation3 + $0xa8] sm:$0xff]
      %v1179 = vld [vmem:[#allocation3 + $0xb0] sm:$0xff]
      %v1180 = vld [vmem:[#allocation3 + $0xb8] sm:$0xff]
      %v1181 = vld [vmem:[#allocation3 + $0xc0] sm:$0xff]
      %v1182 = vld [vmem:[#allocation3 + $0xc8] sm:$0xff]
      %v1183 = vld [vmem:[#allocation3 + $0xd0] sm:$0xff]
      %v1184 = vld [vmem:[#allocation3 + $0xd8] sm:$0xff]
      %v1185 = vld [vmem:[#allocation3 + $0xe0] sm:$0xff]
      %v1186 = vld [vmem:[#allocation3 + $0xe8] sm:$0xff]
      %v1187 = vld [vmem:[#allocation3 + $0xf0] sm:$0xff]
      %v1188 = vld [vmem:[#allocation3 + $0xf8] sm:$0xff]
      %v1189 = vld [vmem:[%s3] sm:$0xff]
      %v1190 = vld [vmem:[%s3 + $0x8] sm:$0xff]
      %v1192 = vlaneseq
      %v1193 = vshrl.u32 %v1192, 7
      %v1194 = vsub.s32 0, %v1193
      %v1195 = vrot.slane %v513, %v1194
      %vm1197 = vcmask 130048
      %v1199 = vsel %vm1197, %v1157, 0
      %v1202 = vsel %vm1197, %v1158, 0
      %v1205 = vsel %vm1197, %v1159, 0
      %v1208 = vsel %vm1197, %v1160, 0
      %v1211 = vsel %vm1197, %v1161, 0
      %v1214 = vsel %vm1197, %v1162, 0
      %v1217 = vsel %vm1197, %v1163, 0
      %v1220 = vsel %vm1197, %v1164, 0
      %v1223 = vsel %vm1197, %v1165, 0
      %v1226 = vsel %vm1197, %v1166, 0
      %v1229 = vsel %vm1197, %v1167, 0
      %v1232 = vsel %vm1197, %v1168, 0
      %v1235 = vsel %vm1197, %v1169, 0
      %v1238 = vsel %vm1197, %v1170, 0
      %v1241 = vsel %vm1197, %v1171, 0
      %v1244 = vsel %vm1197, %v1172, 0
      %v1247 = vsel %vm1197, %v1173, 0
      %v1250 = vsel %vm1197, %v1174, 0
      %v1253 = vsel %vm1197, %v1175, 0
      %v1256 = vsel %vm1197, %v1176, 0
      %v1259 = vsel %vm1197, %v1177, 0
      %v1262 = vsel %vm1197, %v1178, 0
      %v1265 = vsel %vm1197, %v1179, 0
      %v1268 = vsel %vm1197, %v1180, 0
      %v1271 = vsel %vm1197, %v1181, 0
      %v1274 = vsel %vm1197, %v1182, 0
      %v1277 = vsel %vm1197, %v1183, 0
      %v1280 = vsel %vm1197, %v1184, 0
      %v1283 = vsel %vm1197, %v1185, 0
      %v1286 = vsel %vm1197, %v1186, 0
      %v1289 = vsel %vm1197, %v1187, 0
      %v1292 = vsel %vm1197, %v1188, 0
      %1294 = vmatprep.subr.mxu0 0.0
      %1295 = vmatpush1.msra.mxu0 %v1189
      %1296 = vmatprep.subr.mxu0 0.0
      %1297 = vmatpush1.msra.mxu0 %v1190
      %1298 = vmatprep.subr.mxu0 0.0
      %1299 = vmatpush1.msra.mxu0 0.0
      %1300 = vmatprep.subr.mxu0 0.0
      %1301 = vmatpush1.msra.mxu0 0.0
      %1302 = vmatprep.subr.mxu0 0.0
      %1303 = vmatpush1.msra.mxu0 0.0
      %1304 = vmatprep.subr.mxu0 0.0
      %1305 = vmatpush1.msra.mxu0 0.0
      %1306 = vmatprep.subr.mxu0 0.0
      %1307 = vmatpush1.msra.mxu0 0.0
      %1308 = vmatprep.subr.mxu0 0.0
      %1309 = vmatpush1.msra.mxu0 0.0
      %1310 = vmatprep.subr.mxu0 0.0
      %1311 = vmatpush1.msra.mxu0 0.0
      %1312 = vmatprep.subr.mxu0 0.0
      %1313 = vmatpush1.msra.mxu0 0.0
      %1314 = vmatprep.subr.mxu0 0.0
      %1315 = vmatpush1.msra.mxu0 0.0
      %1316 = vmatprep.subr.mxu0 0.0
      %1317 = vmatpush1.msra.mxu0 0.0
      %1318 = vmatprep.subr.mxu0 0.0
      %1319 = vmatpush1.msra.mxu0 0.0
      %1320 = vmatprep.subr.mxu0 0.0
      %1321 = vmatpush1.msra.mxu0 0.0
      %1322 = vmatprep.subr.mxu0 0.0
      %1323 = vmatpush1.msra.mxu0 0.0
      %1324 = vmatprep.subr.mxu0 0.0
      %1325 = vmatpush1.msra.mxu0 0.0
      %1326 = vmatprep.subr.mxu0 0.0
      %1327 = vmatpush1.msra.mxu0 0.0
      %1328 = vmatprep.subr.mxu0 0.0
      %1329 = vmatpush1.msra.mxu0 0.0
      %1330 = vmatprep.subr.mxu0 0.0
      %1331 = vmatpush1.msra.mxu0 0.0
      %1332 = vmatprep.subr.mxu0 0.0
      %1333 = vmatpush1.msra.mxu0 0.0
      %1334 = vmatprep.subr.mxu0 0.0
      %1335 = vmatpush1.msra.mxu0 0.0
      %1336 = vmatprep.subr.mxu0 0.0
      %1337 = vmatpush1.msra.mxu0 0.0
      %1338 = vmatprep.subr.mxu0 0.0
      %1339 = vmatpush1.msra.mxu0 0.0
      %1340 = vmatprep.subr.mxu0 0.0
      %1341 = vmatpush1.msra.mxu0 0.0
      %1342 = vmatprep.subr.mxu0 0.0
      %1343 = vmatpush1.msra.mxu0 0.0
      %1344 = vmatprep.subr.mxu0 0.0
      %1345 = vmatpush1.msra.mxu0 0.0
      %1346 = vmatprep.subr.mxu0 0.0
      %1347 = vmatpush1.msra.mxu0 0.0
      %1348 = vmatprep.subr.mxu0 0.0
      %1349 = vmatpush1.msra.mxu0 0.0
      %1350 = vmatprep.subr.mxu0 0.0
      %1351 = vmatpush1.msra.mxu0 0.0
      %1352 = vmatprep.subr.mxu0 0.0
      %1353 = vmatpush1.msra.mxu0 0.0
      %1354 = vmatprep.subr.mxu0 0.0
      %1355 = vmatpush1.msra.mxu0 0.0
      %1356 = vmatprep.subr.mxu0 0.0
      %1357 = vmatpush1.msra.mxu0 0.0
      %1358 = vmatprep.mubr.f32.mxu0 0.0
      %1359 = vmatmul.mubr.f32.gmra.mrb[0].mxu0 %v1199
      %v1360 = vpop.f32.mrb[0].mxu0
      %v1361 = vadd.f32 %v1195, %v1360
      %v1362 = vpop.f32.mrb[0].mxu0
      %1363 = vmatprep.mubr.f32.mxu0 0.0
      %1364 = vmatmul.mubr.f32.gmra.mrb[0].mxu0 %v1202
      %v1365 = vpop.f32.mrb[0].mxu0
      %v1366 = vadd.f32 %v1195, %v1365
      %v1367 = vpop.f32.mrb[0].mxu0
      %1368 = vmatprep.mubr.f32.mxu0 0.0
      %1369 = vmatmul.mubr.f32.gmra.mrb[0].mxu0 %v1205
      %v1370 = vpop.f32.mrb[0].mxu0
      %v1371 = vadd.f32 %v1195, %v1370
      %v1372 = vpop.f32.mrb[0].mxu0
      %1373 = vmatprep.mubr.f32.mxu0 0.0
      %1374 = vmatmul.mubr.f32.gmra.mrb[0].mxu0 %v1208
      %v1375 = vpop.f32.mrb[0].mxu0
      %v1376 = vadd.f32 %v1195, %v1375
      %v1377 = vpop.f32.mrb[0].mxu0
      %1378 = vmatprep.mubr.f32.mxu0 0.0
      %1379 = vmatmul.mubr.f32.gmra.mrb[0].mxu0 %v1211
      %v1380 = vpop.f32.mrb[0].mxu0
      %v1381 = vadd.f32 %v1195, %v1380
      %v1382 = vpop.f32.mrb[0].mxu0
      %1383 = vmatprep.mubr.f32.mxu0 0.0
      %1384 = vmatmul.mubr.f32.gmra.mrb[0].mxu0 %v1214
      %v1385 = vpop.f32.mrb[0].mxu0
      %v1386 = vadd.f32 %v1195, %v1385
      %v1387 = vpop.f32.mrb[0].mxu0
      %1388 = vmatprep.mubr.f32.mxu0 0.0
      %1389 = vmatmul.mubr.f32.gmra.mrb[0].mxu0 %v1217
      %v1390 = vpop.f32.mrb[0].mxu0
      %v1391 = vadd.f32 %v1195, %v1390
      %v1392 = vpop.f32.mrb[0].mxu0
      %1393 = vmatprep.mubr.f32.mxu0 0.0
      %1394 = vmatmul.mubr.f32.gmra.mrb[0].mxu0 %v1220
      %v1395 = vpop.f32.mrb[0].mxu0
      %v1396 = vadd.f32 %v1195, %v1395
      %v1397 = vpop.f32.mrb[0].mxu0
      %1398 = vmatprep.mubr.f32.mxu0 0.0
      %1399 = vmatmul.mubr.f32.gmra.mrb[0].mxu0 %v1223
      %v1400 = vpop.f32.mrb[0].mxu0
      %v1401 = vadd.f32 %v1195, %v1400
      %v1402 = vpop.f32.mrb[0].mxu0
      %1403 = vmatprep.mubr.f32.mxu0 0.0
      %1404 = vmatmul.mubr.f32.gmra.mrb[0].mxu0 %v1226
      %v1405 = vpop.f32.mrb[0].mxu0
      %v1406 = vadd.f32 %v1195, %v1405
      %v1407 = vpop.f32.mrb[0].mxu0
      %1408 = vmatprep.mubr.f32.mxu0 0.0
      %1409 = vmatmul.mubr.f32.gmra.mrb[0].mxu0 %v1229
      %v1410 = vpop.f32.mrb[0].mxu0
      %v1411 = vadd.f32 %v1195, %v1410
      %v1412 = vpop.f32.mrb[0].mxu0
      %1413 = vmatprep.mubr.f32.mxu0 0.0
      %1414 = vmatmul.mubr.f32.gmra.mrb[0].mxu0 %v1232
      %v1415 = vpop.f32.mrb[0].mxu0
      %v1416 = vadd.f32 %v1195, %v1415
      %v1417 = vpop.f32.mrb[0].mxu0
      %1418 = vmatprep.mubr.f32.mxu0 0.0
      %1419 = vmatmul.mubr.f32.gmra.mrb[0].mxu0 %v1235
      %v1420 = vpop.f32.mrb[0].mxu0
      %v1421 = vadd.f32 %v1195, %v1420
      %v1422 = vpop.f32.mrb[0].mxu0
      %1423 = vmatprep.mubr.f32.mxu0 0.0
      %1424 = vmatmul.mubr.f32.gmra.mrb[0].mxu0 %v1238
      %v1425 = vpop.f32.mrb[0].mxu0
      %v1426 = vadd.f32 %v1195, %v1425
      %v1427 = vpop.f32.mrb[0].mxu0
      %1428 = vmatprep.mubr.f32.mxu0 0.0
      %1429 = vmatmul.mubr.f32.gmra.mrb[0].mxu0 %v1241
      %v1430 = vpop.f32.mrb[0].mxu0
      %v1431 = vadd.f32 %v1195, %v1430
      %v1432 = vpop.f32.mrb[0].mxu0
      %1433 = vmatprep.mubr.f32.mxu0 0.0
      %1434 = vmatmul.mubr.f32.gmra.mrb[0].mxu0 %v1244
      %v1435 = vpop.f32.mrb[0].mxu0
      %v1436 = vadd.f32 %v1195, %v1435
      %v1437 = vpop.f32.mrb[0].mxu0
      %1438 = vmatprep.mubr.f32.mxu0 0.0
      %1439 = vmatmul.mubr.f32.gmra.mrb[0].mxu0 %v1247
      %v1440 = vpop.f32.mrb[0].mxu0
      %v1441 = vadd.f32 %v1195, %v1440
      %v1442 = vpop.f32.mrb[0].mxu0
      %1443 = vmatprep.mubr.f32.mxu0 0.0
      %1444 = vmatmul.mubr.f32.gmra.mrb[0].mxu0 %v1250
      %v1445 = vpop.f32.mrb[0].mxu0
      %v1446 = vadd.f32 %v1195, %v1445
      %v1447 = vpop.f32.mrb[0].mxu0
      %1448 = vmatprep.mubr.f32.mxu0 0.0
      %1449 = vmatmul.mubr.f32.gmra.mrb[0].mxu0 %v1253
      %v1450 = vpop.f32.mrb[0].mxu0
      %v1451 = vadd.f32 %v1195, %v1450
      %v1452 = vpop.f32.mrb[0].mxu0
      %1453 = vmatprep.mubr.f32.mxu0 0.0
      %1454 = vmatmul.mubr.f32.gmra.mrb[0].mxu0 %v1256
      %v1455 = vpop.f32.mrb[0].mxu0
      %v1456 = vadd.f32 %v1195, %v1455
      %v1457 = vpop.f32.mrb[0].mxu0
      %1458 = vmatprep.mubr.f32.mxu0 0.0
      %1459 = vmatmul.mubr.f32.gmra.mrb[0].mxu0 %v1259
      %v1460 = vpop.f32.mrb[0].mxu0
      %v1461 = vadd.f32 %v1195, %v1460
      %v1462 = vpop.f32.mrb[0].mxu0
      %1463 = vmatprep.mubr.f32.mxu0 0.0
      %1464 = vmatmul.mubr.f32.gmra.mrb[0].mxu0 %v1262
      %v1465 = vpop.f32.mrb[0].mxu0
      %v1466 = vadd.f32 %v1195, %v1465
      %v1467 = vpop.f32.mrb[0].mxu0
      %1468 = vmatprep.mubr.f32.mxu0 0.0
      %1469 = vmatmul.mubr.f32.gmra.mrb[0].mxu0 %v1265
      %v1470 = vpop.f32.mrb[0].mxu0
      %v1471 = vadd.f32 %v1195, %v1470
      %v1472 = vpop.f32.mrb[0].mxu0
      %1473 = vmatprep.mubr.f32.mxu0 0.0
      %1474 = vmatmul.mubr.f32.gmra.mrb[0].mxu0 %v1268
      %v1475 = vpop.f32.mrb[0].mxu0
      %v1476 = vadd.f32 %v1195, %v1475
      %v1477 = vpop.f32.mrb[0].mxu0
      %1478 = vmatprep.mubr.f32.mxu0 0.0
      %1479 = vmatmul.mubr.f32.gmra.mrb[0].mxu0 %v1271
      %v1480 = vpop.f32.mrb[0].mxu0
      %v1481 = vadd.f32 %v1195, %v1480
      %v1482 = vpop.f32.mrb[0].mxu0
      %1483 = vmatprep.mubr.f32.mxu0 0.0
      %1484 = vmatmul.mubr.f32.gmra.mrb[0].mxu0 %v1274
      %v1485 = vpop.f32.mrb[0].mxu0
      %v1486 = vadd.f32 %v1195, %v1485
      %v1487 = vpop.f32.mrb[0].mxu0
      %1488 = vmatprep.mubr.f32.mxu0 0.0
      %1489 = vmatmul.mubr.f32.gmra.mrb[0].mxu0 %v1277
      %v1490 = vpop.f32.mrb[0].mxu0
      %v1491 = vadd.f32 %v1195, %v1490
      %v1492 = vpop.f32.mrb[0].mxu0
      %1493 = vmatprep.mubr.f32.mxu0 0.0
      %1494 = vmatmul.mubr.f32.gmra.mrb[0].mxu0 %v1280
      %v1495 = vpop.f32.mrb[0].mxu0
      %v1496 = vadd.f32 %v1195, %v1495
      %v1497 = vpop.f32.mrb[0].mxu0
      %1498 = vmatprep.mubr.f32.mxu0 0.0
      %1499 = vmatmul.mubr.f32.gmra.mrb[0].mxu0 %v1283
      %v1500 = vpop.f32.mrb[0].mxu0
      %v1501 = vadd.f32 %v1195, %v1500
      %v1502 = vpop.f32.mrb[0].mxu0
      %1503 = vmatprep.mubr.f32.mxu0 0.0
      %1504 = vmatmul.mubr.f32.gmra.mrb[0].mxu0 %v1286
      %v1505 = vpop.f32.mrb[0].mxu0
      %v1506 = vadd.f32 %v1195, %v1505
      %v1507 = vpop.f32.mrb[0].mxu0
      %1508 = vmatprep.mubr.f32.mxu0 0.0
      %1509 = vmatmul.mubr.f32.gmra.mrb[0].mxu0 %v1289
      %v1510 = vpop.f32.mrb[0].mxu0
      %v1511 = vadd.f32 %v1195, %v1510
      %v1512 = vpop.f32.mrb[0].mxu0
      %1513 = vmatprep.mubr.f32.mxu0 0.0
      %1514 = vmatmul.mubr.f32.gmra.mrb[0].mxu0 %v1292
      %v1515 = vpop.f32.mrb[0].mxu0
      %v1516 = vadd.f32 %v1195, %v1515
      %v1517 = vpop.f32.mrb[0].mxu0
      %1518 = vdwg.mxu0
      %1519 = vst.msk [vmem:[%s391] sm:$0xff] %vm426, %v1361
      %1520 = vst.msk [vmem:[%s391 + $0x8] sm:$0xff] %vm426, %v1366
      %1521 = vst.msk [vmem:[%s391 + $0x20] sm:$0xff] %vm426, %v1371
      %1522 = vst.msk [vmem:[%s391 + $0x28] sm:$0xff] %vm426, %v1376
      %1523 = vst.msk [vmem:[%s391 + $0x40] sm:$0xff] %vm426, %v1381
      %1524 = vst.msk [vmem:[%s391 + $0x48] sm:$0xff] %vm426, %v1386
      %1525 = vst.msk [vmem:[%s391 + $0x60] sm:$0xff] %vm426, %v1391
      %1526 = vst.msk [vmem:[%s391 + $0x68] sm:$0xff] %vm426, %v1396
      %1527 = vst.msk [vmem:[%s391 + $0x80] sm:$0xff] %vm426, %v1401
      %1528 = vst.msk [vmem:[%s391 + $0x88] sm:$0xff] %vm426, %v1406
      %1529 = vst.msk [vmem:[%s391 + $0xa0] sm:$0xff] %vm426, %v1411
      %1530 = vst.msk [vmem:[%s391 + $0xa8] sm:$0xff] %vm426, %v1416
      %1531 = vst.msk [vmem:[%s391 + $0xc0] sm:$0xff] %vm426, %v1421
      %1532 = vst.msk [vmem:[%s391 + $0xc8] sm:$0xff] %vm426, %v1426
      %1533 = vst.msk [vmem:[%s391 + $0xe0] sm:$0xff] %vm426, %v1431
      %1534 = vst.msk [vmem:[%s391 + $0xe8] sm:$0xff] %vm426, %v1436
      %1535 = vst.msk [vmem:[%s391 + $0x100] sm:$0xff] %vm426, %v1441
      %1536 = vst.msk [vmem:[%s391 + $0x108] sm:$0xff] %vm426, %v1446
      %1537 = vst.msk [vmem:[%s391 + $0x120] sm:$0xff] %vm426, %v1451
      %1538 = vst.msk [vmem:[%s391 + $0x128] sm:$0xff] %vm426, %v1456
      %1539 = vst.msk [vmem:[%s391 + $0x140] sm:$0xff] %vm426, %v1461
      %1540 = vst.msk [vmem:[%s391 + $0x148] sm:$0xff] %vm426, %v1466
      %1541 = vst.msk [vmem:[%s391 + $0x160] sm:$0xff] %vm426, %v1471
      %1542 = vst.msk [vmem:[%s391 + $0x168] sm:$0xff] %vm426, %v1476
      %1543 = vst.msk [vmem:[%s391 + $0x180] sm:$0xff] %vm426, %v1481
      %1544 = vst.msk [vmem:[%s391 + $0x188] sm:$0xff] %vm426, %v1486
      %1545 = vst.msk [vmem:[%s391 + $0x1a0] sm:$0xff] %vm426, %v1491
      %1546 = vst.msk [vmem:[%s391 + $0x1a8] sm:$0xff] %vm426, %v1496
      %1547 = vst.msk [vmem:[%s391 + $0x1c0] sm:$0xff] %vm426, %v1501
      %1548 = vst.msk [vmem:[%s391 + $0x1c8] sm:$0xff] %vm426, %v1506
      %1549 = vst.msk [vmem:[%s391 + $0x1e0] sm:$0xff] %vm426, %v1511
      %1550 = vst.msk [vmem:[%s391 + $0x1e8] sm:$0xff] %vm426, %v1516
      %v1551 = vld [vmem:[#allocation2 + $0x1] sm:$0xff]
      %v1552 = vld [vmem:[#allocation2 + $0x9] sm:$0xff]
      %v1553 = vld [vmem:[#allocation2 + $0x19] sm:$0xff]
      %v1554 = vld [vmem:[#allocation2 + $0x21] sm:$0xff]
      %v1555 = vld [vmem:[#allocation2 + $0x31] sm:$0xff]
      %v1556 = vld [vmem:[#allocation2 + $0x39] sm:$0xff]
      %v1557 = vld [vmem:[#allocation2 + $0x49] sm:$0xff]
      %v1558 = vld [vmem:[#allocation2 + $0x51] sm:$0xff]
      %v1559 = vld [vmem:[#allocation2 + $0x61] sm:$0xff]
      %v1560 = vld [vmem:[#allocation2 + $0x69] sm:$0xff]
      %v1561 = vld [vmem:[#allocation2 + $0x79] sm:$0xff]
      %v1562 = vld [vmem:[#allocation2 + $0x81] sm:$0xff]
      %v1563 = vld [vmem:[#allocation2 + $0x91] sm:$0xff]
      %v1564 = vld [vmem:[#allocation2 + $0x99] sm:$0xff]
      %v1565 = vld [vmem:[#allocation2 + $0xa9] sm:$0xff]
      %v1566 = vld [vmem:[#allocation2 + $0xb1] sm:$0xff]
      %v1567 = vld [vmem:[#allocation2 + $0xc1] sm:$0xff]
      %v1568 = vld [vmem:[#allocation2 + $0xc9] sm:$0xff]
      %v1569 = vld [vmem:[#allocation2 + $0xd9] sm:$0xff]
      %v1570 = vld [vmem:[#allocation2 + $0xe1] sm:$0xff]
      %v1571 = vld [vmem:[#allocation2 + $0xf1] sm:$0xff]
      %v1572 = vld [vmem:[#allocation2 + $0xf9] sm:$0xff]
      %v1573 = vld [vmem:[#allocation2 + $0x109] sm:$0xff]
      %v1574 = vld [vmem:[#allocation2 + $0x111] sm:$0xff]
      %v1575 = vld [vmem:[#allocation2 + $0x121] sm:$0xff]
      %v1576 = vld [vmem:[#allocation2 + $0x129] sm:$0xff]
      %v1577 = vld [vmem:[#allocation2 + $0x139] sm:$0xff]
      %v1578 = vld [vmem:[#allocation2 + $0x141] sm:$0xff]
      %v1579 = vld [vmem:[#allocation2 + $0x151] sm:$0xff]
      %v1580 = vld [vmem:[#allocation2 + $0x159] sm:$0xff]
      %v1581 = vld [vmem:[#allocation2 + $0x169] sm:$0xff]
      %v1582 = vld [vmem:[#allocation2 + $0x171] sm:$0xff]
      %1583 = vst.msk [vmem:[#allocation3] sm:$0xff] %vm426, %v1551
      %1584 = vst.msk [vmem:[#allocation3 + $0x8] sm:$0xff] %vm426, %v1552
      %1585 = vst.msk [vmem:[#allocation3 + $0x10] sm:$0xff] %vm426, %v1553
      %1586 = vst.msk [vmem:[#allocation3 + $0x18] sm:$0xff] %vm426, %v1554
      %1587 = vst.msk [vmem:[#allocation3 + $0x20] sm:$0xff] %vm426, %v1555
      %1588 = vst.msk [vmem:[#allocation3 + $0x28] sm:$0xff] %vm426, %v1556
      %1589 = vst.msk [vmem:[#allocation3 + $0x30] sm:$0xff] %vm426, %v1557
      %1590 = vst.msk [vmem:[#allocation3 + $0x38] sm:$0xff] %vm426, %v1558
      %1591 = vst.msk [vmem:[#allocation3 + $0x40] sm:$0xff] %vm426, %v1559
      %1592 = vst.msk [vmem:[#allocation3 + $0x48] sm:$0xff] %vm426, %v1560
      %1593 = vst.msk [vmem:[#allocation3 + $0x50] sm:$0xff] %vm426, %v1561
      %1594 = vst.msk [vmem:[#allocation3 + $0x58] sm:$0xff] %vm426, %v1562
      %1595 = vst.msk [vmem:[#allocation3 + $0x60] sm:$0xff] %vm426, %v1563
      %1596 = vst.msk [vmem:[#allocation3 + $0x68] sm:$0xff] %vm426, %v1564
      %1597 = vst.msk [vmem:[#allocation3 + $0x70] sm:$0xff] %vm426, %v1565
      %1598 = vst.msk [vmem:[#allocation3 + $0x78] sm:$0xff] %vm426, %v1566
      %1599 = vst.msk [vmem:[#allocation3 + $0x80] sm:$0xff] %vm426, %v1567
      %1600 = vst.msk [vmem:[#allocation3 + $0x88] sm:$0xff] %vm426, %v1568
      %1601 = vst.msk [vmem:[#allocation3 + $0x90] sm:$0xff] %vm426, %v1569
      %1602 = vst.msk [vmem:[#allocation3 + $0x98] sm:$0xff] %vm426, %v1570
      %1603 = vst.msk [vmem:[#allocation3 + $0xa0] sm:$0xff] %vm426, %v1571
      %1604 = vst.msk [vmem:[#allocation3 + $0xa8] sm:$0xff] %vm426, %v1572
      %1605 = vst.msk [vmem:[#allocation3 + $0xb0] sm:$0xff] %vm426, %v1573
      %1606 = vst.msk [vmem:[#allocation3 + $0xb8] sm:$0xff] %vm426, %v1574
      %1607 = vst.msk [vmem:[#allocation3 + $0xc0] sm:$0xff] %vm426, %v1575
      %1608 = vst.msk [vmem:[#allocation3 + $0xc8] sm:$0xff] %vm426, %v1576
      %1609 = vst.msk [vmem:[#allocation3 + $0xd0] sm:$0xff] %vm426, %v1577
      %1610 = vst.msk [vmem:[#allocation3 + $0xd8] sm:$0xff] %vm426, %v1578
      %1611 = vst.msk [vmem:[#allocation3 + $0xe0] sm:$0xff] %vm426, %v1579
      %1612 = vst.msk [vmem:[#allocation3 + $0xe8] sm:$0xff] %vm426, %v1580
      %1613 = vst.msk [vmem:[#allocation3 + $0xf0] sm:$0xff] %vm426, %v1581
      %1614 = vst.msk [vmem:[#allocation3 + $0xf8] sm:$0xff] %vm426, %v1582
      %v1615 = vld [vmem:[#allocation2 + $0x2] sm:$0xff]
      %v1616 = vld [vmem:[#allocation2 + $0xa] sm:$0xff]
      %v1617 = vld [vmem:[#allocation2 + $0x1a] sm:$0xff]
      %v1618 = vld [vmem:[#allocation2 + $0x22] sm:$0xff]
      %v1619 = vld [vmem:[#allocation2 + $0x32] sm:$0xff]
      %v1620 = vld [vmem:[#allocation2 + $0x3a] sm:$0xff]
      %v1621 = vld [vmem:[#allocation2 + $0x4a] sm:$0xff]
      %v1622 = vld [vmem:[#allocation2 + $0x52] sm:$0xff]
      %v1623 = vld [vmem:[#allocation2 + $0x62] sm:$0xff]
      %v1624 = vld [vmem:[#allocation2 + $0x6a] sm:$0xff]
      %v1625 = vld [vmem:[#allocation2 + $0x7a] sm:$0xff]
      %v1626 = vld [vmem:[#allocation2 + $0x82] sm:$0xff]
      %v1627 = vld [vmem:[#allocation2 + $0x92] sm:$0xff]
      %v1628 = vld [vmem:[#allocation2 + $0x9a] sm:$0xff]
      %v1629 = vld [vmem:[#allocation2 + $0xaa] sm:$0xff]
      %v1630 = vld [vmem:[#allocation2 + $0xb2] sm:$0xff]
      %v1631 = vld [vmem:[#allocation2 + $0xc2] sm:$0xff]
      %v1632 = vld [vmem:[#allocation2 + $0xca] sm:$0xff]
      %v1633 = vld [vmem:[#allocation2 + $0xda] sm:$0xff]
      %v1634 = vld [vmem:[#allocation2 + $0xe2] sm:$0xff]
      %v1635 = vld [vmem:[#allocation2 + $0xf2] sm:$0xff]
      %v1636 = vld [vmem:[#allocation2 + $0xfa] sm:$0xff]
      %v1637 = vld [vmem:[#allocation2 + $0x10a] sm:$0xff]
      %v1638 = vld [vmem:[#allocation2 + $0x112] sm:$0xff]
      %v1639 = vld [vmem:[#allocation2 + $0x122] sm:$0xff]
      %v1640 = vld [vmem:[#allocation2 + $0x12a] sm:$0xff]
      %v1641 = vld [vmem:[#allocation2 + $0x13a] sm:$0xff]
      %v1642 = vld [vmem:[#allocation2 + $0x142] sm:$0xff]
      %v1643 = vld [vmem:[#allocation2 + $0x152] sm:$0xff]
      %v1644 = vld [vmem:[#allocation2 + $0x15a] sm:$0xff]
      %v1645 = vld [vmem:[#allocation2 + $0x16a] sm:$0xff]
      %v1646 = vld [vmem:[#allocation2 + $0x172] sm:$0xff]
      %1679 = vrot.lane.b32.xlu0 %v1615, 4
      %v1680 = vpop.permute.xlu0 %1679
      %1681 = vrot.lane.b32.xlu0 %v1616, 4
      %v1682 = vpop.permute.xlu0 %1681
      %1683 = vrot.lane.b32.xlu0 %v1617, 4
      %v1684 = vpop.permute.xlu0 %1683
      %1685 = vrot.lane.b32.xlu0 %v1618, 4
      %v1686 = vpop.permute.xlu0 %1685
      %1687 = vrot.lane.b32.xlu0 %v1619, 4
      %v1688 = vpop.permute.xlu0 %1687
      %1689 = vrot.lane.b32.xlu0 %v1620, 4
      %v1690 = vpop.permute.xlu0 %1689
      %1691 = vrot.lane.b32.xlu0 %v1621, 4
      %v1692 = vpop.permute.xlu0 %1691
      %1693 = vrot.lane.b32.xlu0 %v1622, 4
      %v1694 = vpop.permute.xlu0 %1693
      %1695 = vrot.lane.b32.xlu0 %v1623, 4
      %v1696 = vpop.permute.xlu0 %1695
      %1697 = vrot.lane.b32.xlu0 %v1624, 4
      %v1698 = vpop.permute.xlu0 %1697
      %1699 = vrot.lane.b32.xlu0 %v1625, 4
      %v1700 = vpop.permute.xlu0 %1699
      %1701 = vrot.lane.b32.xlu0 %v1626, 4
      %v1702 = vpop.permute.xlu0 %1701
      %1703 = vrot.lane.b32.xlu0 %v1627, 4
      %v1704 = vpop.permute.xlu0 %1703
      %1705 = vrot.lane.b32.xlu0 %v1628, 4
      %v1706 = vpop.permute.xlu0 %1705
      %1707 = vrot.lane.b32.xlu0 %v1629, 4
      %v1708 = vpop.permute.xlu0 %1707
      %1709 = vrot.lane.b32.xlu0 %v1630, 4
      %v1710 = vpop.permute.xlu0 %1709
      %1711 = vrot.lane.b32.xlu0 %v1631, 4
      %v1712 = vpop.permute.xlu0 %1711
      %1713 = vrot.lane.b32.xlu0 %v1632, 4
      %v1714 = vpop.permute.xlu0 %1713
      %1715 = vrot.lane.b32.xlu0 %v1633, 4
      %v1716 = vpop.permute.xlu0 %1715
      %1717 = vrot.lane.b32.xlu0 %v1634, 4
      %v1718 = vpop.permute.xlu0 %1717
      %1719 = vrot.lane.b32.xlu0 %v1635, 4
      %v1720 = vpop.permute.xlu0 %1719
      %1721 = vrot.lane.b32.xlu0 %v1636, 4
      %v1722 = vpop.permute.xlu0 %1721
      %1723 = vrot.lane.b32.xlu0 %v1637, 4
      %v1724 = vpop.permute.xlu0 %1723
      %1725 = vrot.lane.b32.xlu0 %v1638, 4
      %v1726 = vpop.permute.xlu0 %1725
      %1727 = vrot.lane.b32.xlu0 %v1639, 4
      %v1728 = vpop.permute.xlu0 %1727
      %1729 = vrot.lane.b32.xlu0 %v1640, 4
      %v1730 = vpop.permute.xlu0 %1729
      %1731 = vrot.lane.b32.xlu0 %v1641, 4
      %v1732 = vpop.permute.xlu0 %1731
      %1733 = vrot.lane.b32.xlu0 %v1642, 4
      %v1734 = vpop.permute.xlu0 %1733
      %1735 = vrot.lane.b32.xlu0 %v1643, 4
      %v1736 = vpop.permute.xlu0 %1735
      %1737 = vrot.lane.b32.xlu0 %v1644, 4
      %v1738 = vpop.permute.xlu0 %1737
      %1739 = vrot.lane.b32.xlu0 %v1645, 4
      %v1740 = vpop.permute.xlu0 %1739
      %1741 = vrot.lane.b32.xlu0 %v1646, 4
      %v1742 = vpop.permute.xlu0 %1741
      %1775 = vst.msk [vmem:[#allocation3] sm:$0xff] %vm738, %v1680
      %1776 = vst.msk [vmem:[#allocation3 + $0x8] sm:$0xff] %vm738, %v1682
      %1777 = vst.msk [vmem:[#allocation3 + $0x10] sm:$0xff] %vm738, %v1684
      %1778 = vst.msk [vmem:[#allocation3 + $0x18] sm:$0xff] %vm738, %v1686
      %1779 = vst.msk [vmem:[#allocation3 + $0x20] sm:$0xff] %vm738, %v1688
      %1780 = vst.msk [vmem:[#allocation3 + $0x28] sm:$0xff] %vm738, %v1690
      %1781 = vst.msk [vmem:[#allocation3 + $0x30] sm:$0xff] %vm738, %v1692
      %1782 = vst.msk [vmem:[#allocation3 + $0x38] sm:$0xff] %vm738, %v1694
      %1783 = vst.msk [vmem:[#allocation3 + $0x40] sm:$0xff] %vm738, %v1696
      %1784 = vst.msk [vmem:[#allocation3 + $0x48] sm:$0xff] %vm738, %v1698
      %1785 = vst.msk [vmem:[#allocation3 + $0x50] sm:$0xff] %vm738, %v1700
      %1786 = vst.msk [vmem:[#allocation3 + $0x58] sm:$0xff] %vm738, %v1702
      %1787 = vst.msk [vmem:[#allocation3 + $0x60] sm:$0xff] %vm738, %v1704
      %1788 = vst.msk [vmem:[#allocation3 + $0x68] sm:$0xff] %vm738, %v1706
      %1789 = vst.msk [vmem:[#allocation3 + $0x70] sm:$0xff] %vm738, %v1708
      %1790 = vst.msk [vmem:[#allocation3 + $0x78] sm:$0xff] %vm738, %v1710
      %1791 = vst.msk [vmem:[#allocation3 + $0x80] sm:$0xff] %vm738, %v1712
      %1792 = vst.msk [vmem:[#allocation3 + $0x88] sm:$0xff] %vm738, %v1714
      %1793 = vst.msk [vmem:[#allocation3 + $0x90] sm:$0xff] %vm738, %v1716
      %1794 = vst.msk [vmem:[#allocation3 + $0x98] sm:$0xff] %vm738, %v1718
      %1795 = vst.msk [vmem:[#allocation3 + $0xa0] sm:$0xff] %vm738, %v1720
      %1796 = vst.msk [vmem:[#allocation3 + $0xa8] sm:$0xff] %vm738, %v1722
      %1797 = vst.msk [vmem:[#allocation3 + $0xb0] sm:$0xff] %vm738, %v1724
      %1798 = vst.msk [vmem:[#allocation3 + $0xb8] sm:$0xff] %vm738, %v1726
      %1799 = vst.msk [vmem:[#allocation3 + $0xc0] sm:$0xff] %vm738, %v1728
      %1800 = vst.msk [vmem:[#allocation3 + $0xc8] sm:$0xff] %vm738, %v1730
      %1801 = vst.msk [vmem:[#allocation3 + $0xd0] sm:$0xff] %vm738, %v1732
      %1802 = vst.msk [vmem:[#allocation3 + $0xd8] sm:$0xff] %vm738, %v1734
      %1803 = vst.msk [vmem:[#allocation3 + $0xe0] sm:$0xff] %vm738, %v1736
      %1804 = vst.msk [vmem:[#allocation3 + $0xe8] sm:$0xff] %vm738, %v1738
      %1805 = vst.msk [vmem:[#allocation3 + $0xf0] sm:$0xff] %vm738, %v1740
      %1806 = vst.msk [vmem:[#allocation3 + $0xf8] sm:$0xff] %vm738, %v1742
      %v1807 = vld [vmem:[%s425 + $0x1] sm:$0xff]
      %v1808 = vld [vmem:[%s425 + $0x9] sm:$0xff]
      %v1809 = vld [vmem:[%s425 + $0x19] sm:$0xff]
      %v1810 = vld [vmem:[%s425 + $0x21] sm:$0xff]
      %v1811 = vld [vmem:[%s425 + $0x31] sm:$0xff]
      %v1812 = vld [vmem:[%s425 + $0x39] sm:$0xff]
      %v1813 = vld [vmem:[%s425 + $0x49] sm:$0xff]
      %v1814 = vld [vmem:[%s425 + $0x51] sm:$0xff]
      %v1815 = vld [vmem:[%s425 + $0x61] sm:$0xff]
      %v1816 = vld [vmem:[%s425 + $0x69] sm:$0xff]
      %v1817 = vld [vmem:[%s425 + $0x79] sm:$0xff]
      %v1818 = vld [vmem:[%s425 + $0x81] sm:$0xff]
      %v1819 = vld [vmem:[%s425 + $0x91] sm:$0xff]
      %v1820 = vld [vmem:[%s425 + $0x99] sm:$0xff]
      %v1821 = vld [vmem:[%s425 + $0xa9] sm:$0xff]
      %v1822 = vld [vmem:[%s425 + $0xb1] sm:$0xff]
      %v1823 = vld [vmem:[%s425 + $0xc1] sm:$0xff]
      %v1824 = vld [vmem:[%s425 + $0xc9] sm:$0xff]
      %v1825 = vld [vmem:[%s425 + $0xd9] sm:$0xff]
      %v1826 = vld [vmem:[%s425 + $0xe1] sm:$0xff]
      %v1827 = vld [vmem:[%s425 + $0xf1] sm:$0xff]
      %v1828 = vld [vmem:[%s425 + $0xf9] sm:$0xff]
      %v1829 = vld [vmem:[%s425 + $0x109] sm:$0xff]
      %v1830 = vld [vmem:[%s425 + $0x111] sm:$0xff]
      %v1831 = vld [vmem:[%s425 + $0x121] sm:$0xff]
      %v1832 = vld [vmem:[%s425 + $0x129] sm:$0xff]
      %v1833 = vld [vmem:[%s425 + $0x139] sm:$0xff]
      %v1834 = vld [vmem:[%s425 + $0x141] sm:$0xff]
      %v1835 = vld [vmem:[%s425 + $0x151] sm:$0xff]
      %v1836 = vld [vmem:[%s425 + $0x159] sm:$0xff]
      %v1837 = vld [vmem:[%s425 + $0x169] sm:$0xff]
      %v1838 = vld [vmem:[%s425 + $0x171] sm:$0xff]
      %1871 = vrot.lane.b32.xlu0 %v1807, 8
      %v1872 = vpop.permute.xlu0 %1871
      %1873 = vrot.lane.b32.xlu0 %v1808, 8
      %v1874 = vpop.permute.xlu0 %1873
      %1875 = vrot.lane.b32.xlu0 %v1809, 8
      %v1876 = vpop.permute.xlu0 %1875
      %1877 = vrot.lane.b32.xlu0 %v1810, 8
      %v1878 = vpop.permute.xlu0 %1877
      %1879 = vrot.lane.b32.xlu0 %v1811, 8
      %v1880 = vpop.permute.xlu0 %1879
      %1881 = vrot.lane.b32.xlu0 %v1812, 8
      %v1882 = vpop.permute.xlu0 %1881
      %1883 = vrot.lane.b32.xlu0 %v1813, 8
      %v1884 = vpop.permute.xlu0 %1883
      %1885 = vrot.lane.b32.xlu0 %v1814, 8
      %v1886 = vpop.permute.xlu0 %1885
      %1887 = vrot.lane.b32.xlu0 %v1815, 8
      %v1888 = vpop.permute.xlu0 %1887
      %1889 = vrot.lane.b32.xlu0 %v1816, 8
      %v1890 = vpop.permute.xlu0 %1889
      %1891 = vrot.lane.b32.xlu0 %v1817, 8
      %v1892 = vpop.permute.xlu0 %1891
      %1893 = vrot.lane.b32.xlu0 %v1818, 8
      %v1894 = vpop.permute.xlu0 %1893
      %1895 = vrot.lane.b32.xlu0 %v1819, 8
      %v1896 = vpop.permute.xlu0 %1895
      %1897 = vrot.lane.b32.xlu0 %v1820, 8
      %v1898 = vpop.permute.xlu0 %1897
      %1899 = vrot.lane.b32.xlu0 %v1821, 8
      %v1900 = vpop.permute.xlu0 %1899
      %1901 = vrot.lane.b32.xlu0 %v1822, 8
      %v1902 = vpop.permute.xlu0 %1901
      %1903 = vrot.lane.b32.xlu0 %v1823, 8
      %v1904 = vpop.permute.xlu0 %1903
      %1905 = vrot.lane.b32.xlu0 %v1824, 8
      %v1906 = vpop.permute.xlu0 %1905
      %1907 = vrot.lane.b32.xlu0 %v1825, 8
      %v1908 = vpop.permute.xlu0 %1907
      %1909 = vrot.lane.b32.xlu0 %v1826, 8
      %v1910 = vpop.permute.xlu0 %1909
      %1911 = vrot.lane.b32.xlu0 %v1827, 8
      %v1912 = vpop.permute.xlu0 %1911
      %1913 = vrot.lane.b32.xlu0 %v1828, 8
      %v1914 = vpop.permute.xlu0 %1913
      %1915 = vrot.lane.b32.xlu0 %v1829, 8
      %v1916 = vpop.permute.xlu0 %1915
      %1917 = vrot.lane.b32.xlu0 %v1830, 8
      %v1918 = vpop.permute.xlu0 %1917
      %1919 = vrot.lane.b32.xlu0 %v1831, 8
      %v1920 = vpop.permute.xlu0 %1919
      %1921 = vrot.lane.b32.xlu0 %v1832, 8
      %v1922 = vpop.permute.xlu0 %1921
      %1923 = vrot.lane.b32.xlu0 %v1833, 8
      %v1924 = vpop.permute.xlu0 %1923
      %1925 = vrot.lane.b32.xlu0 %v1834, 8
      %v1926 = vpop.permute.xlu0 %1925
      %1927 = vrot.lane.b32.xlu0 %v1835, 8
      %v1928 = vpop.permute.xlu0 %1927
      %1929 = vrot.lane.b32.xlu0 %v1836, 8
      %v1930 = vpop.permute.xlu0 %1929
      %1931 = vrot.lane.b32.xlu0 %v1837, 8
      %v1932 = vpop.permute.xlu0 %1931
      %1933 = vrot.lane.b32.xlu0 %v1838, 8
      %v1934 = vpop.permute.xlu0 %1933
      %1967 = vst.msk [vmem:[#allocation3] sm:$0xff] %vm931, %v1872
      %1968 = vst.msk [vmem:[#allocation3 + $0x8] sm:$0xff] %vm931, %v1874
      %1969 = vst.msk [vmem:[#allocation3 + $0x10] sm:$0xff] %vm931, %v1876
      %1970 = vst.msk [vmem:[#allocation3 + $0x18] sm:$0xff] %vm931, %v1878
      %1971 = vst.msk [vmem:[#allocation3 + $0x20] sm:$0xff] %vm931, %v1880
      %1972 = vst.msk [vmem:[#allocation3 + $0x28] sm:$0xff] %vm931, %v1882
      %1973 = vst.msk [vmem:[#allocation3 + $0x30] sm:$0xff] %vm931, %v1884
      %1974 = vst.msk [vmem:[#allocation3 + $0x38] sm:$0xff] %vm931, %v1886
      %1975 = vst.msk [vmem:[#allocation3 + $0x40] sm:$0xff] %vm931, %v1888
      %1976 = vst.msk [vmem:[#allocation3 + $0x48] sm:$0xff] %vm931, %v1890
      %1977 = vst.msk [vmem:[#allocation3 + $0x50] sm:$0xff] %vm931, %v1892
      %1978 = vst.msk [vmem:[#allocation3 + $0x58] sm:$0xff] %vm931, %v1894
      %1979 = vst.msk [vmem:[#allocation3 + $0x60] sm:$0xff] %vm931, %v1896
      %1980 = vst.msk [vmem:[#allocation3 + $0x68] sm:$0xff] %vm931, %v1898
      %1981 = vst.msk [vmem:[#allocation3 + $0x70] sm:$0xff] %vm931, %v1900
      %1982 = vst.msk [vmem:[#allocation3 + $0x78] sm:$0xff] %vm931, %v1902
      %1983 = vst.msk [vmem:[#allocation3 + $0x80] sm:$0xff] %vm931, %v1904
      %1984 = vst.msk [vmem:[#allocation3 + $0x88] sm:$0xff] %vm931, %v1906
      %1985 = vst.msk [vmem:[#allocation3 + $0x90] sm:$0xff] %vm931, %v1908
      %1986 = vst.msk [vmem:[#allocation3 + $0x98] sm:$0xff] %vm931, %v1910
      %1987 = vst.msk [vmem:[#allocation3 + $0xa0] sm:$0xff] %vm931, %v1912
      %1988 = vst.msk [vmem:[#allocation3 + $0xa8] sm:$0xff] %vm931, %v1914
      %1989 = vst.msk [vmem:[#allocation3 + $0xb0] sm:$0xff] %vm931, %v1916
      %1990 = vst.msk [vmem:[#allocation3 + $0xb8] sm:$0xff] %vm931, %v1918
      %1991 = vst.msk [vmem:[#allocation3 + $0xc0] sm:$0xff] %vm931, %v1920
      %1992 = vst.msk [vmem:[#allocation3 + $0xc8] sm:$0xff] %vm931, %v1922
      %1993 = vst.msk [vmem:[#allocation3 + $0xd0] sm:$0xff] %vm931, %v1924
      %1994 = vst.msk [vmem:[#allocation3 + $0xd8] sm:$0xff] %vm931, %v1926
      %1995 = vst.msk [vmem:[#allocation3 + $0xe0] sm:$0xff] %vm931, %v1928
      %1996 = vst.msk [vmem:[#allocation3 + $0xe8] sm:$0xff] %vm931, %v1930
      %1997 = vst.msk [vmem:[#allocation3 + $0xf0] sm:$0xff] %vm931, %v1932
      %1998 = vst.msk [vmem:[#allocation3 + $0xf8] sm:$0xff] %vm931, %v1934
      %v1999 = vld [vmem:[%s425 + $0x2] sm:$0xff]
      %v2000 = vld [vmem:[%s425 + $0xa] sm:$0xff]
      %v2001 = vld [vmem:[%s425 + $0x1a] sm:$0xff]
      %v2002 = vld [vmem:[%s425 + $0x22] sm:$0xff]
      %v2003 = vld [vmem:[%s425 + $0x32] sm:$0xff]
      %v2004 = vld [vmem:[%s425 + $0x3a] sm:$0xff]
      %v2005 = vld [vmem:[%s425 + $0x4a] sm:$0xff]
      %v2006 = vld [vmem:[%s425 + $0x52] sm:$0xff]
      %v2007 = vld [vmem:[%s425 + $0x62] sm:$0xff]
      %v2008 = vld [vmem:[%s425 + $0x6a] sm:$0xff]
      %v2009 = vld [vmem:[%s425 + $0x7a] sm:$0xff]
      %v2010 = vld [vmem:[%s425 + $0x82] sm:$0xff]
      %v2011 = vld [vmem:[%s425 + $0x92] sm:$0xff]
      %v2012 = vld [vmem:[%s425 + $0x9a] sm:$0xff]
      %v2013 = vld [vmem:[%s425 + $0xaa] sm:$0xff]
      %v2014 = vld [vmem:[%s425 + $0xb2] sm:$0xff]
      %v2015 = vld [vmem:[%s425 + $0xc2] sm:$0xff]
      %v2016 = vld [vmem:[%s425 + $0xca] sm:$0xff]
      %v2017 = vld [vmem:[%s425 + $0xda] sm:$0xff]
      %v2018 = vld [vmem:[%s425 + $0xe2] sm:$0xff]
      %v2019 = vld [vmem:[%s425 + $0xf2] sm:$0xff]
      %v2020 = vld [vmem:[%s425 + $0xfa] sm:$0xff]
      %v2021 = vld [vmem:[%s425 + $0x10a] sm:$0xff]
      %v2022 = vld [vmem:[%s425 + $0x112] sm:$0xff]
      %v2023 = vld [vmem:[%s425 + $0x122] sm:$0xff]
      %v2024 = vld [vmem:[%s425 + $0x12a] sm:$0xff]
      %v2025 = vld [vmem:[%s425 + $0x13a] sm:$0xff]
      %v2026 = vld [vmem:[%s425 + $0x142] sm:$0xff]
      %v2027 = vld [vmem:[%s425 + $0x152] sm:$0xff]
      %v2028 = vld [vmem:[%s425 + $0x15a] sm:$0xff]
      %v2029 = vld [vmem:[%s425 + $0x16a] sm:$0xff]
      %v2030 = vld [vmem:[%s425 + $0x172] sm:$0xff]
      %2063 = vrot.lane.b32.xlu0 %v1999, 12
      %v2064 = vpop.permute.xlu0 %2063
      %2065 = vrot.lane.b32.xlu0 %v2000, 12
      %v2066 = vpop.permute.xlu0 %2065
      %2067 = vrot.lane.b32.xlu0 %v2001, 12
      %v2068 = vpop.permute.xlu0 %2067
      %2069 = vrot.lane.b32.xlu0 %v2002, 12
      %v2070 = vpop.permute.xlu0 %2069
      %2071 = vrot.lane.b32.xlu0 %v2003, 12
      %v2072 = vpop.permute.xlu0 %2071
      %2073 = vrot.lane.b32.xlu0 %v2004, 12
      %v2074 = vpop.permute.xlu0 %2073
      %2075 = vrot.lane.b32.xlu0 %v2005, 12
      %v2076 = vpop.permute.xlu0 %2075
      %2077 = vrot.lane.b32.xlu0 %v2006, 12
      %v2078 = vpop.permute.xlu0 %2077
      %2079 = vrot.lane.b32.xlu0 %v2007, 12
      %v2080 = vpop.permute.xlu0 %2079
      %2081 = vrot.lane.b32.xlu0 %v2008, 12
      %v2082 = vpop.permute.xlu0 %2081
      %2083 = vrot.lane.b32.xlu0 %v2009, 12
      %v2084 = vpop.permute.xlu0 %2083
      %2085 = vrot.lane.b32.xlu0 %v2010, 12
      %v2086 = vpop.permute.xlu0 %2085
      %2087 = vrot.lane.b32.xlu0 %v2011, 12
      %v2088 = vpop.permute.xlu0 %2087
      %2089 = vrot.lane.b32.xlu0 %v2012, 12
      %v2090 = vpop.permute.xlu0 %2089
      %2091 = vrot.lane.b32.xlu0 %v2013, 12
      %v2092 = vpop.permute.xlu0 %2091
      %2093 = vrot.lane.b32.xlu0 %v2014, 12
      %v2094 = vpop.permute.xlu0 %2093
      %2095 = vrot.lane.b32.xlu0 %v2015, 12
      %v2096 = vpop.permute.xlu0 %2095
      %2097 = vrot.lane.b32.xlu0 %v2016, 12
      %v2098 = vpop.permute.xlu0 %2097
      %2099 = vrot.lane.b32.xlu0 %v2017, 12
      %v2100 = vpop.permute.xlu0 %2099
      %2101 = vrot.lane.b32.xlu0 %v2018, 12
      %v2102 = vpop.permute.xlu0 %2101
      %2103 = vrot.lane.b32.xlu0 %v2019, 12
      %v2104 = vpop.permute.xlu0 %2103
      %2105 = vrot.lane.b32.xlu0 %v2020, 12
      %v2106 = vpop.permute.xlu0 %2105
      %2107 = vrot.lane.b32.xlu0 %v2021, 12
      %v2108 = vpop.permute.xlu0 %2107
      %2109 = vrot.lane.b32.xlu0 %v2022, 12
      %v2110 = vpop.permute.xlu0 %2109
      %2111 = vrot.lane.b32.xlu0 %v2023, 12
      %v2112 = vpop.permute.xlu0 %2111
      %2113 = vrot.lane.b32.xlu0 %v2024, 12
      %v2114 = vpop.permute.xlu0 %2113
      %2115 = vrot.lane.b32.xlu0 %v2025, 12
      %v2116 = vpop.permute.xlu0 %2115
      %2117 = vrot.lane.b32.xlu0 %v2026, 12
      %v2118 = vpop.permute.xlu0 %2117
      %2119 = vrot.lane.b32.xlu0 %v2027, 12
      %v2120 = vpop.permute.xlu0 %2119
      %2121 = vrot.lane.b32.xlu0 %v2028, 12
      %v2122 = vpop.permute.xlu0 %2121
      %2123 = vrot.lane.b32.xlu0 %v2029, 12
      %v2124 = vpop.permute.xlu0 %2123
      %2125 = vrot.lane.b32.xlu0 %v2030, 12
      %v2126 = vpop.permute.xlu0 %2125
      %2159 = vst.msk [vmem:[#allocation3] sm:$0xff] %vm1124, %v2064
      %2160 = vst.msk [vmem:[#allocation3 + $0x8] sm:$0xff] %vm1124, %v2066
      %2161 = vst.msk [vmem:[#allocation3 + $0x10] sm:$0xff] %vm1124, %v2068
      %2162 = vst.msk [vmem:[#allocation3 + $0x18] sm:$0xff] %vm1124, %v2070
      %2163 = vst.msk [vmem:[#allocation3 + $0x20] sm:$0xff] %vm1124, %v2072
      %2164 = vst.msk [vmem:[#allocation3 + $0x28] sm:$0xff] %vm1124, %v2074
      %2165 = vst.msk [vmem:[#allocation3 + $0x30] sm:$0xff] %vm1124, %v2076
      %2166 = vst.msk [vmem:[#allocation3 + $0x38] sm:$0xff] %vm1124, %v2078
      %2167 = vst.msk [vmem:[#allocation3 + $0x40] sm:$0xff] %vm1124, %v2080
      %2168 = vst.msk [vmem:[#allocation3 + $0x48] sm:$0xff] %vm1124, %v2082
      %2169 = vst.msk [vmem:[#allocation3 + $0x50] sm:$0xff] %vm1124, %v2084
      %2170 = vst.msk [vmem:[#allocation3 + $0x58] sm:$0xff] %vm1124, %v2086
      %2171 = vst.msk [vmem:[#allocation3 + $0x60] sm:$0xff] %vm1124, %v2088
      %2172 = vst.msk [vmem:[#allocation3 + $0x68] sm:$0xff] %vm1124, %v2090
      %2173 = vst.msk [vmem:[#allocation3 + $0x70] sm:$0xff] %vm1124, %v2092
      %2174 = vst.msk [vmem:[#allocation3 + $0x78] sm:$0xff] %vm1124, %v2094
      %2175 = vst.msk [vmem:[#allocation3 + $0x80] sm:$0xff] %vm1124, %v2096
      %2176 = vst.msk [vmem:[#allocation3 + $0x88] sm:$0xff] %vm1124, %v2098
      %2177 = vst.msk [vmem:[#allocation3 + $0x90] sm:$0xff] %vm1124, %v2100
      %2178 = vst.msk [vmem:[#allocation3 + $0x98] sm:$0xff] %vm1124, %v2102
      %2179 = vst.msk [vmem:[#allocation3 + $0xa0] sm:$0xff] %vm1124, %v2104
      %2180 = vst.msk [vmem:[#allocation3 + $0xa8] sm:$0xff] %vm1124, %v2106
      %2181 = vst.msk [vmem:[#allocation3 + $0xb0] sm:$0xff] %vm1124, %v2108
      %2182 = vst.msk [vmem:[#allocation3 + $0xb8] sm:$0xff] %vm1124, %v2110
      %2183 = vst.msk [vmem:[#allocation3 + $0xc0] sm:$0xff] %vm1124, %v2112
      %2184 = vst.msk [vmem:[#allocation3 + $0xc8] sm:$0xff] %vm1124, %v2114
      %2185 = vst.msk [vmem:[#allocation3 + $0xd0] sm:$0xff] %vm1124, %v2116
      %2186 = vst.msk [vmem:[#allocation3 + $0xd8] sm:$0xff] %vm1124, %v2118
      %2187 = vst.msk [vmem:[#allocation3 + $0xe0] sm:$0xff] %vm1124, %v2120
      %2188 = vst.msk [vmem:[#allocation3 + $0xe8] sm:$0xff] %vm1124, %v2122
      %2189 = vst.msk [vmem:[#allocation3 + $0xf0] sm:$0xff] %vm1124, %v2124
      %2190 = vst.msk [vmem:[#allocation3 + $0xf8] sm:$0xff] %vm1124, %v2126
      %v2191 = vld [vmem:[#allocation3] sm:$0xff]
      %v2192 = vld [vmem:[#allocation3 + $0x8] sm:$0xff]
      %v2193 = vld [vmem:[#allocation3 + $0x10] sm:$0xff]
      %v2194 = vld [vmem:[#allocation3 + $0x18] sm:$0xff]
      %v2195 = vld [vmem:[#allocation3 + $0x20] sm:$0xff]
      %v2196 = vld [vmem:[#allocation3 + $0x28] sm:$0xff]
      %v2197 = vld [vmem:[#allocation3 + $0x30] sm:$0xff]
      %v2198 = vld [vmem:[#allocation3 + $0x38] sm:$0xff]
      %v2199 = vld [vmem:[#allocation3 + $0x40] sm:$0xff]
      %v2200 = vld [vmem:[#allocation3 + $0x48] sm:$0xff]
      %v2201 = vld [vmem:[#allocation3 + $0x50] sm:$0xff]
      %v2202 = vld [vmem:[#allocation3 + $0x58] sm:$0xff]
      %v2203 = vld [vmem:[#allocation3 + $0x60] sm:$0xff]
      %v2204 = vld [vmem:[#allocation3 + $0x68] sm:$0xff]
      %v2205 = vld [vmem:[#allocation3 + $0x70] sm:$0xff]
      %v2206 = vld [vmem:[#allocation3 + $0x78] sm:$0xff]
      %v2207 = vld [vmem:[#allocation3 + $0x80] sm:$0xff]
      %v2208 = vld [vmem:[#allocation3 + $0x88] sm:$0xff]
      %v2209 = vld [vmem:[#allocation3 + $0x90] sm:$0xff]
      %v2210 = vld [vmem:[#allocation3 + $0x98] sm:$0xff]
      %v2211 = vld [vmem:[#allocation3 + $0xa0] sm:$0xff]
      %v2212 = vld [vmem:[#allocation3 + $0xa8] sm:$0xff]
      %v2213 = vld [vmem:[#allocation3 + $0xb0] sm:$0xff]
      %v2214 = vld [vmem:[#allocation3 + $0xb8] sm:$0xff]
      %v2215 = vld [vmem:[#allocation3 + $0xc0] sm:$0xff]
      %v2216 = vld [vmem:[#allocation3 + $0xc8] sm:$0xff]
      %v2217 = vld [vmem:[#allocation3 + $0xd0] sm:$0xff]
      %v2218 = vld [vmem:[#allocation3 + $0xd8] sm:$0xff]
      %v2219 = vld [vmem:[#allocation3 + $0xe0] sm:$0xff]
      %v2220 = vld [vmem:[#allocation3 + $0xe8] sm:$0xff]
      %v2221 = vld [vmem:[#allocation3 + $0xf0] sm:$0xff]
      %v2222 = vld [vmem:[#allocation3 + $0xf8] sm:$0xff]
      %s2223 = scalar_lea.vmem %s3, 16
      %v2224 = vld [vmem:[%s2223] sm:$0xff]
      %v2225 = vld [vmem:[%s2223 + $0x8] sm:$0xff]
      %v2227 = vsel %vm1197, %v2191, 0
      %v2230 = vsel %vm1197, %v2192, 0
      %v2233 = vsel %vm1197, %v2193, 0
      %v2236 = vsel %vm1197, %v2194, 0
      %v2239 = vsel %vm1197, %v2195, 0
      %v2242 = vsel %vm1197, %v2196, 0
      %v2245 = vsel %vm1197, %v2197, 0
      %v2248 = vsel %vm1197, %v2198, 0
      %v2251 = vsel %vm1197, %v2199, 0
      %v2254 = vsel %vm1197, %v2200, 0
      %v2257 = vsel %vm1197, %v2201, 0
      %v2260 = vsel %vm1197, %v2202, 0
      %v2263 = vsel %vm1197, %v2203, 0
      %v2266 = vsel %vm1197, %v2204, 0
      %v2269 = vsel %vm1197, %v2205, 0
      %v2272 = vsel %vm1197, %v2206, 0
      %v2275 = vsel %vm1197, %v2207, 0
      %v2278 = vsel %vm1197, %v2208, 0
      %v2281 = vsel %vm1197, %v2209, 0
      %v2284 = vsel %vm1197, %v2210, 0
      %v2287 = vsel %vm1197, %v2211, 0
      %v2290 = vsel %vm1197, %v2212, 0
      %v2293 = vsel %vm1197, %v2213, 0
      %v2296 = vsel %vm1197, %v2214, 0
      %v2299 = vsel %vm1197, %v2215, 0
      %v2302 = vsel %vm1197, %v2216, 0
      %v2305 = vsel %vm1197, %v2217, 0
      %v2308 = vsel %vm1197, %v2218, 0
      %v2311 = vsel %vm1197, %v2219, 0
      %v2314 = vsel %vm1197, %v2220, 0
      %v2317 = vsel %vm1197, %v2221, 0
      %v2320 = vsel %vm1197, %v2222, 0
      %2322 = vmatprep.subr.mxu0 0.0
      %2323 = vmatpush1.msra.mxu0 %v2224
      %2324 = vmatprep.subr.mxu0 0.0
      %2325 = vmatpush1.msra.mxu0 %v2225
      %2326 = vmatprep.subr.mxu0 0.0
      %2327 = vmatpush1.msra.mxu0 0.0
      %2328 = vmatprep.subr.mxu0 0.0
      %2329 = vmatpush1.msra.mxu0 0.0
      %2330 = vmatprep.subr.mxu0 0.0
      %2331 = vmatpush1.msra.mxu0 0.0
      %2332 = vmatprep.subr.mxu0 0.0
      %2333 = vmatpush1.msra.mxu0 0.0
      %2334 = vmatprep.subr.mxu0 0.0
      %2335 = vmatpush1.msra.mxu0 0.0
      %2336 = vmatprep.subr.mxu0 0.0
      %2337 = vmatpush1.msra.mxu0 0.0
      %2338 = vmatprep.subr.mxu0 0.0
      %2339 = vmatpush1.msra.mxu0 0.0
      %2340 = vmatprep.subr.mxu0 0.0
      %2341 = vmatpush1.msra.mxu0 0.0
      %2342 = vmatprep.subr.mxu0 0.0
      %2343 = vmatpush1.msra.mxu0 0.0
      %2344 = vmatprep.subr.mxu0 0.0
      %2345 = vmatpush1.msra.mxu0 0.0
      %2346 = vmatprep.subr.mxu0 0.0
      %2347 = vmatpush1.msra.mxu0 0.0
      %2348 = vmatprep.subr.mxu0 0.0
      %2349 = vmatpush1.msra.mxu0 0.0
      %2350 = vmatprep.subr.mxu0 0.0
      %2351 = vmatpush1.msra.mxu0 0.0
      %2352 = vmatprep.subr.mxu0 0.0
      %2353 = vmatpush1.msra.mxu0 0.0
      %2354 = vmatprep.subr.mxu0 0.0
      %2355 = vmatpush1.msra.mxu0 0.0
      %2356 = vmatprep.subr.mxu0 0.0
      %2357 = vmatpush1.msra.mxu0 0.0
      %2358 = vmatprep.subr.mxu0 0.0
      %2359 = vmatpush1.msra.mxu0 0.0
      %2360 = vmatprep.subr.mxu0 0.0
      %2361 = vmatpush1.msra.mxu0 0.0
      %2362 = vmatprep.subr.mxu0 0.0
      %2363 = vmatpush1.msra.mxu0 0.0
      %2364 = vmatprep.subr.mxu0 0.0
      %2365 = vmatpush1.msra.mxu0 0.0
      %2366 = vmatprep.subr.mxu0 0.0
      %2367 = vmatpush1.msra.mxu0 0.0
      %2368 = vmatprep.subr.mxu0 0.0
      %2369 = vmatpush1.msra.mxu0 0.0
      %2370 = vmatprep.subr.mxu0 0.0
      %2371 = vmatpush1.msra.mxu0 0.0
      %2372 = vmatprep.subr.mxu0 0.0
      %2373 = vmatpush1.msra.mxu0 0.0
      %2374 = vmatprep.subr.mxu0 0.0
      %2375 = vmatpush1.msra.mxu0 0.0
      %2376 = vmatprep.subr.mxu0 0.0
      %2377 = vmatpush1.msra.mxu0 0.0
      %2378 = vmatprep.subr.mxu0 0.0
      %2379 = vmatpush1.msra.mxu0 0.0
      %2380 = vmatprep.subr.mxu0 0.0
      %2381 = vmatpush1.msra.mxu0 0.0
      %2382 = vmatprep.subr.mxu0 0.0
      %2383 = vmatpush1.msra.mxu0 0.0
      %2384 = vmatprep.subr.mxu0 0.0
      %2385 = vmatpush1.msra.mxu0 0.0
      %2386 = vmatprep.mubr.f32.mxu0 0.0
      %2387 = vmatmul.mubr.f32.gmra.mrb[0].mxu0 %v2227
      %v2388 = vpop.f32.mrb[0].mxu0
      %v2389 = vadd.f32 %v1195, %v2388
      %v2390 = vpop.f32.mrb[0].mxu0
      %2391 = vmatprep.mubr.f32.mxu0 0.0
      %2392 = vmatmul.mubr.f32.gmra.mrb[0].mxu0 %v2230
      %v2393 = vpop.f32.mrb[0].mxu0
      %v2394 = vadd.f32 %v1195, %v2393
      %v2395 = vpop.f32.mrb[0].mxu0
      %2396 = vmatprep.mubr.f32.mxu0 0.0
      %2397 = vmatmul.mubr.f32.gmra.mrb[0].mxu0 %v2233
      %v2398 = vpop.f32.mrb[0].mxu0
      %v2399 = vadd.f32 %v1195, %v2398
      %v2400 = vpop.f32.mrb[0].mxu0
      %2401 = vmatprep.mubr.f32.mxu0 0.0
      %2402 = vmatmul.mubr.f32.gmra.mrb[0].mxu0 %v2236
      %v2403 = vpop.f32.mrb[0].mxu0
      %v2404 = vadd.f32 %v1195, %v2403
      %v2405 = vpop.f32.mrb[0].mxu0
      %2406 = vmatprep.mubr.f32.mxu0 0.0
      %2407 = vmatmul.mubr.f32.gmra.mrb[0].mxu0 %v2239
      %v2408 = vpop.f32.mrb[0].mxu0
      %v2409 = vadd.f32 %v1195, %v2408
      %v2410 = vpop.f32.mrb[0].mxu0
      %2411 = vmatprep.mubr.f32.mxu0 0.0
      %2412 = vmatmul.mubr.f32.gmra.mrb[0].mxu0 %v2242
      %v2413 = vpop.f32.mrb[0].mxu0
      %v2414 = vadd.f32 %v1195, %v2413
      %v2415 = vpop.f32.mrb[0].mxu0
      %2416 = vmatprep.mubr.f32.mxu0 0.0
      %2417 = vmatmul.mubr.f32.gmra.mrb[0].mxu0 %v2245
      %v2418 = vpop.f32.mrb[0].mxu0
      %v2419 = vadd.f32 %v1195, %v2418
      %v2420 = vpop.f32.mrb[0].mxu0
      %2421 = vmatprep.mubr.f32.mxu0 0.0
      %2422 = vmatmul.mubr.f32.gmra.mrb[0].mxu0 %v2248
      %v2423 = vpop.f32.mrb[0].mxu0
      %v2424 = vadd.f32 %v1195, %v2423
      %v2425 = vpop.f32.mrb[0].mxu0
      %2426 = vmatprep.mubr.f32.mxu0 0.0
      %2427 = vmatmul.mubr.f32.gmra.mrb[0].mxu0 %v2251
      %v2428 = vpop.f32.mrb[0].mxu0
      %v2429 = vadd.f32 %v1195, %v2428
      %v2430 = vpop.f32.mrb[0].mxu0
      %2431 = vmatprep.mubr.f32.mxu0 0.0
      %2432 = vmatmul.mubr.f32.gmra.mrb[0].mxu0 %v2254
      %v2433 = vpop.f32.mrb[0].mxu0
      %v2434 = vadd.f32 %v1195, %v2433
      %v2435 = vpop.f32.mrb[0].mxu0
      %2436 = vmatprep.mubr.f32.mxu0 0.0
      %2437 = vmatmul.mubr.f32.gmra.mrb[0].mxu0 %v2257
      %v2438 = vpop.f32.mrb[0].mxu0
      %v2439 = vadd.f32 %v1195, %v2438
      %v2440 = vpop.f32.mrb[0].mxu0
      %2441 = vmatprep.mubr.f32.mxu0 0.0
      %2442 = vmatmul.mubr.f32.gmra.mrb[0].mxu0 %v2260
      %v2443 = vpop.f32.mrb[0].mxu0
      %v2444 = vadd.f32 %v1195, %v2443
      %v2445 = vpop.f32.mrb[0].mxu0
      %2446 = vmatprep.mubr.f32.mxu0 0.0
      %2447 = vmatmul.mubr.f32.gmra.mrb[0].mxu0 %v2263
      %v2448 = vpop.f32.mrb[0].mxu0
      %v2449 = vadd.f32 %v1195, %v2448
      %v2450 = vpop.f32.mrb[0].mxu0
      %2451 = vmatprep.mubr.f32.mxu0 0.0
      %2452 = vmatmul.mubr.f32.gmra.mrb[0].mxu0 %v2266
      %v2453 = vpop.f32.mrb[0].mxu0
      %v2454 = vadd.f32 %v1195, %v2453
      %v2455 = vpop.f32.mrb[0].mxu0
      %2456 = vmatprep.mubr.f32.mxu0 0.0
      %2457 = vmatmul.mubr.f32.gmra.mrb[0].mxu0 %v2269
      %v2458 = vpop.f32.mrb[0].mxu0
      %v2459 = vadd.f32 %v1195, %v2458
      %v2460 = vpop.f32.mrb[0].mxu0
      %2461 = vmatprep.mubr.f32.mxu0 0.0
      %2462 = vmatmul.mubr.f32.gmra.mrb[0].mxu0 %v2272
      %v2463 = vpop.f32.mrb[0].mxu0
      %v2464 = vadd.f32 %v1195, %v2463
      %v2465 = vpop.f32.mrb[0].mxu0
      %2466 = vmatprep.mubr.f32.mxu0 0.0
      %2467 = vmatmul.mubr.f32.gmra.mrb[0].mxu0 %v2275
      %v2468 = vpop.f32.mrb[0].mxu0
      %v2469 = vadd.f32 %v1195, %v2468
      %v2470 = vpop.f32.mrb[0].mxu0
      %2471 = vmatprep.mubr.f32.mxu0 0.0
      %2472 = vmatmul.mubr.f32.gmra.mrb[0].mxu0 %v2278
      %v2473 = vpop.f32.mrb[0].mxu0
      %v2474 = vadd.f32 %v1195, %v2473
      %v2475 = vpop.f32.mrb[0].mxu0
      %2476 = vmatprep.mubr.f32.mxu0 0.0
      %2477 = vmatmul.mubr.f32.gmra.mrb[0].mxu0 %v2281
      %v2478 = vpop.f32.mrb[0].mxu0
      %v2479 = vadd.f32 %v1195, %v2478
      %v2480 = vpop.f32.mrb[0].mxu0
      %2481 = vmatprep.mubr.f32.mxu0 0.0
      %2482 = vmatmul.mubr.f32.gmra.mrb[0].mxu0 %v2284
      %v2483 = vpop.f32.mrb[0].mxu0
      %v2484 = vadd.f32 %v1195, %v2483
      %v2485 = vpop.f32.mrb[0].mxu0
      %2486 = vmatprep.mubr.f32.mxu0 0.0
      %2487 = vmatmul.mubr.f32.gmra.mrb[0].mxu0 %v2287
      %v2488 = vpop.f32.mrb[0].mxu0
      %v2489 = vadd.f32 %v1195, %v2488
      %v2490 = vpop.f32.mrb[0].mxu0
      %2491 = vmatprep.mubr.f32.mxu0 0.0
      %2492 = vmatmul.mubr.f32.gmra.mrb[0].mxu0 %v2290
      %v2493 = vpop.f32.mrb[0].mxu0
      %v2494 = vadd.f32 %v1195, %v2493
      %v2495 = vpop.f32.mrb[0].mxu0
      %2496 = vmatprep.mubr.f32.mxu0 0.0
      %2497 = vmatmul.mubr.f32.gmra.mrb[0].mxu0 %v2293
      %v2498 = vpop.f32.mrb[0].mxu0
      %v2499 = vadd.f32 %v1195, %v2498
      %v2500 = vpop.f32.mrb[0].mxu0
      %2501 = vmatprep.mubr.f32.mxu0 0.0
      %2502 = vmatmul.mubr.f32.gmra.mrb[0].mxu0 %v2296
      %v2503 = vpop.f32.mrb[0].mxu0
      %v2504 = vadd.f32 %v1195, %v2503
      %v2505 = vpop.f32.mrb[0].mxu0
      %2506 = vmatprep.mubr.f32.mxu0 0.0
      %2507 = vmatmul.mubr.f32.gmra.mrb[0].mxu0 %v2299
      %v2508 = vpop.f32.mrb[0].mxu0
      %v2509 = vadd.f32 %v1195, %v2508
      %v2510 = vpop.f32.mrb[0].mxu0
      %2511 = vmatprep.mubr.f32.mxu0 0.0
      %2512 = vmatmul.mubr.f32.gmra.mrb[0].mxu0 %v2302
      %v2513 = vpop.f32.mrb[0].mxu0
      %v2514 = vadd.f32 %v1195, %v2513
      %v2515 = vpop.f32.mrb[0].mxu0
      %2516 = vmatprep.mubr.f32.mxu0 0.0
      %2517 = vmatmul.mubr.f32.gmra.mrb[0].mxu0 %v2305
      %v2518 = vpop.f32.mrb[0].mxu0
      %v2519 = vadd.f32 %v1195, %v2518
      %v2520 = vpop.f32.mrb[0].mxu0
      %2521 = vmatprep.mubr.f32.mxu0 0.0
      %2522 = vmatmul.mubr.f32.gmra.mrb[0].mxu0 %v2308
      %v2523 = vpop.f32.mrb[0].mxu0
      %v2524 = vadd.f32 %v1195, %v2523
      %v2525 = vpop.f32.mrb[0].mxu0
      %2526 = vmatprep.mubr.f32.mxu0 0.0
      %2527 = vmatmul.mubr.f32.gmra.mrb[0].mxu0 %v2311
      %v2528 = vpop.f32.mrb[0].mxu0
      %v2529 = vadd.f32 %v1195, %v2528
      %v2530 = vpop.f32.mrb[0].mxu0
      %2531 = vmatprep.mubr.f32.mxu0 0.0
      %2532 = vmatmul.mubr.f32.gmra.mrb[0].mxu0 %v2314
      %v2533 = vpop.f32.mrb[0].mxu0
      %v2534 = vadd.f32 %v1195, %v2533
      %v2535 = vpop.f32.mrb[0].mxu0
      %2536 = vmatprep.mubr.f32.mxu0 0.0
      %2537 = vmatmul.mubr.f32.gmra.mrb[0].mxu0 %v2317
      %v2538 = vpop.f32.mrb[0].mxu0
      %v2539 = vadd.f32 %v1195, %v2538
      %v2540 = vpop.f32.mrb[0].mxu0
      %2541 = vmatprep.mubr.f32.mxu0 0.0
      %2542 = vmatmul.mubr.f32.gmra.mrb[0].mxu0 %v2320
      %v2543 = vpop.f32.mrb[0].mxu0
      %v2544 = vadd.f32 %v1195, %v2543
      %v2545 = vpop.f32.mrb[0].mxu0
      %2546 = vdwg.mxu0
      %2579 = vrot.lane.b32.xlu0 %v2389, 4
      %v2580 = vpop.permute.xlu0 %2579
      %2581 = vrot.lane.b32.xlu0 %v2394, 4
      %v2582 = vpop.permute.xlu0 %2581
      %2583 = vrot.lane.b32.xlu0 %v2399, 4
      %v2584 = vpop.permute.xlu0 %2583
      %2585 = vrot.lane.b32.xlu0 %v2404, 4
      %v2586 = vpop.permute.xlu0 %2585
      %2587 = vrot.lane.b32.xlu0 %v2409, 4
      %v2588 = vpop.permute.xlu0 %2587
      %2589 = vrot.lane.b32.xlu0 %v2414, 4
      %v2590 = vpop.permute.xlu0 %2589
      %2591 = vrot.lane.b32.xlu0 %v2419, 4
      %v2592 = vpop.permute.xlu0 %2591
      %2593 = vrot.lane.b32.xlu0 %v2424, 4
      %v2594 = vpop.permute.xlu0 %2593
      %2595 = vrot.lane.b32.xlu0 %v2429, 4
      %v2596 = vpop.permute.xlu0 %2595
      %2597 = vrot.lane.b32.xlu0 %v2434, 4
      %v2598 = vpop.permute.xlu0 %2597
      %2599 = vrot.lane.b32.xlu0 %v2439, 4
      %v2600 = vpop.permute.xlu0 %2599
      %2601 = vrot.lane.b32.xlu0 %v2444, 4
      %v2602 = vpop.permute.xlu0 %2601
      %2603 = vrot.lane.b32.xlu0 %v2449, 4
      %v2604 = vpop.permute.xlu0 %2603
      %2605 = vrot.lane.b32.xlu0 %v2454, 4
      %v2606 = vpop.permute.xlu0 %2605
      %2607 = vrot.lane.b32.xlu0 %v2459, 4
      %v2608 = vpop.permute.xlu0 %2607
      %2609 = vrot.lane.b32.xlu0 %v2464, 4
      %v2610 = vpop.permute.xlu0 %2609
      %2611 = vrot.lane.b32.xlu0 %v2469, 4
      %v2612 = vpop.permute.xlu0 %2611
      %2613 = vrot.lane.b32.xlu0 %v2474, 4
      %v2614 = vpop.permute.xlu0 %2613
      %2615 = vrot.lane.b32.xlu0 %v2479, 4
      %v2616 = vpop.permute.xlu0 %2615
      %2617 = vrot.lane.b32.xlu0 %v2484, 4
      %v2618 = vpop.permute.xlu0 %2617
      %2619 = vrot.lane.b32.xlu0 %v2489, 4
      %v2620 = vpop.permute.xlu0 %2619
      %2621 = vrot.lane.b32.xlu0 %v2494, 4
      %v2622 = vpop.permute.xlu0 %2621
      %2623 = vrot.lane.b32.xlu0 %v2499, 4
      %v2624 = vpop.permute.xlu0 %2623
      %2625 = vrot.lane.b32.xlu0 %v2504, 4
      %v2626 = vpop.permute.xlu0 %2625
      %2627 = vrot.lane.b32.xlu0 %v2509, 4
      %v2628 = vpop.permute.xlu0 %2627
      %2629 = vrot.lane.b32.xlu0 %v2514, 4
      %v2630 = vpop.permute.xlu0 %2629
      %2631 = vrot.lane.b32.xlu0 %v2519, 4
      %v2632 = vpop.permute.xlu0 %2631
      %2633 = vrot.lane.b32.xlu0 %v2524, 4
      %v2634 = vpop.permute.xlu0 %2633
      %2635 = vrot.lane.b32.xlu0 %v2529, 4
      %v2636 = vpop.permute.xlu0 %2635
      %2637 = vrot.lane.b32.xlu0 %v2534, 4
      %v2638 = vpop.permute.xlu0 %2637
      %2639 = vrot.lane.b32.xlu0 %v2539, 4
      %v2640 = vpop.permute.xlu0 %2639
      %2641 = vrot.lane.b32.xlu0 %v2544, 4
      %v2642 = vpop.permute.xlu0 %2641
      %2675 = vst.msk [vmem:[%s391] sm:$0xff] %vm738, %v2580
      %2676 = vst.msk [vmem:[%s391 + $0x8] sm:$0xff] %vm738, %v2582
      %2677 = vst.msk [vmem:[%s391 + $0x20] sm:$0xff] %vm738, %v2584
      %2678 = vst.msk [vmem:[%s391 + $0x28] sm:$0xff] %vm738, %v2586
      %2679 = vst.msk [vmem:[%s391 + $0x40] sm:$0xff] %vm738, %v2588
      %2680 = vst.msk [vmem:[%s391 + $0x48] sm:$0xff] %vm738, %v2590
      %2681 = vst.msk [vmem:[%s391 + $0x60] sm:$0xff] %vm738, %v2592
      %2682 = vst.msk [vmem:[%s391 + $0x68] sm:$0xff] %vm738, %v2594
      %2683 = vst.msk [vmem:[%s391 + $0x80] sm:$0xff] %vm738, %v2596
      %2684 = vst.msk [vmem:[%s391 + $0x88] sm:$0xff] %vm738, %v2598
      %2685 = vst.msk [vmem:[%s391 + $0xa0] sm:$0xff] %vm738, %v2600
      %2686 = vst.msk [vmem:[%s391 + $0xa8] sm:$0xff] %vm738, %v2602
      %2687 = vst.msk [vmem:[%s391 + $0xc0] sm:$0xff] %vm738, %v2604
      %2688 = vst.msk [vmem:[%s391 + $0xc8] sm:$0xff] %vm738, %v2606
      %2689 = vst.msk [vmem:[%s391 + $0xe0] sm:$0xff] %vm738, %v2608
      %2690 = vst.msk [vmem:[%s391 + $0xe8] sm:$0xff] %vm738, %v2610
      %2691 = vst.msk [vmem:[%s391 + $0x100] sm:$0xff] %vm738, %v2612
      %2692 = vst.msk [vmem:[%s391 + $0x108] sm:$0xff] %vm738, %v2614
      %2693 = vst.msk [vmem:[%s391 + $0x120] sm:$0xff] %vm738, %v2616
      %2694 = vst.msk [vmem:[%s391 + $0x128] sm:$0xff] %vm738, %v2618
      %2695 = vst.msk [vmem:[%s391 + $0x140] sm:$0xff] %vm738, %v2620
      %2696 = vst.msk [vmem:[%s391 + $0x148] sm:$0xff] %vm738, %v2622
      %2697 = vst.msk [vmem:[%s391 + $0x160] sm:$0xff] %vm738, %v2624
      %2698 = vst.msk [vmem:[%s391 + $0x168] sm:$0xff] %vm738, %v2626
      %2699 = vst.msk [vmem:[%s391 + $0x180] sm:$0xff] %vm738, %v2628
      %2700 = vst.msk [vmem:[%s391 + $0x188] sm:$0xff] %vm738, %v2630
      %2701 = vst.msk [vmem:[%s391 + $0x1a0] sm:$0xff] %vm738, %v2632
      %2702 = vst.msk [vmem:[%s391 + $0x1a8] sm:$0xff] %vm738, %v2634
      %2703 = vst.msk [vmem:[%s391 + $0x1c0] sm:$0xff] %vm738, %v2636
      %2704 = vst.msk [vmem:[%s391 + $0x1c8] sm:$0xff] %vm738, %v2638
      %2705 = vst.msk [vmem:[%s391 + $0x1e0] sm:$0xff] %vm738, %v2640
      %2706 = vst.msk [vmem:[%s391 + $0x1e8] sm:$0xff] %vm738, %v2642
      %v2707 = vld [vmem:[%s425] sm:$0xff]
      %v2708 = vld [vmem:[%s425 + $0x8] sm:$0xff]
      %v2709 = vld [vmem:[%s425 + $0x18] sm:$0xff]
      %v2710 = vld [vmem:[%s425 + $0x20] sm:$0xff]
      %v2711 = vld [vmem:[%s425 + $0x30] sm:$0xff]
      %v2712 = vld [vmem:[%s425 + $0x38] sm:$0xff]
      %v2713 = vld [vmem:[%s425 + $0x48] sm:$0xff]
      %v2714 = vld [vmem:[%s425 + $0x50] sm:$0xff]
      %v2715 = vld [vmem:[%s425 + $0x60] sm:$0xff]
      %v2716 = vld [vmem:[%s425 + $0x68] sm:$0xff]
      %v2717 = vld [vmem:[%s425 + $0x78] sm:$0xff]
      %v2718 = vld [vmem:[%s425 + $0x80] sm:$0xff]
      %v2719 = vld [vmem:[%s425 + $0x90] sm:$0xff]
      %v2720 = vld [vmem:[%s425 + $0x98] sm:$0xff]
      %v2721 = vld [vmem:[%s425 + $0xa8] sm:$0xff]
      %v2722 = vld [vmem:[%s425 + $0xb0] sm:$0xff]
      %v2723 = vld [vmem:[%s425 + $0xc0] sm:$0xff]
      %v2724 = vld [vmem:[%s425 + $0xc8] sm:$0xff]
      %v2725 = vld [vmem:[%s425 + $0xd8] sm:$0xff]
      %v2726 = vld [vmem:[%s425 + $0xe0] sm:$0xff]
      %v2727 = vld [vmem:[%s425 + $0xf0] sm:$0xff]
      %v2728 = vld [vmem:[%s425 + $0xf8] sm:$0xff]
      %v2729 = vld [vmem:[%s425 + $0x108] sm:$0xff]
      %v2730 = vld [vmem:[%s425 + $0x110] sm:$0xff]
      %v2731 = vld [vmem:[%s425 + $0x120] sm:$0xff]
      %v2732 = vld [vmem:[%s425 + $0x128] sm:$0xff]
      %v2733 = vld [vmem:[%s425 + $0x138] sm:$0xff]
      %v2734 = vld [vmem:[%s425 + $0x140] sm:$0xff]
      %v2735 = vld [vmem:[%s425 + $0x150] sm:$0xff]
      %v2736 = vld [vmem:[%s425 + $0x158] sm:$0xff]
      %v2737 = vld [vmem:[%s425 + $0x168] sm:$0xff]
      %v2738 = vld [vmem:[%s425 + $0x170] sm:$0xff]
      %2739 = vst.msk [vmem:[#allocation3] sm:$0xff] %vm426, %v2707
      %2740 = vst.msk [vmem:[#allocation3 + $0x8] sm:$0xff] %vm426, %v2708
      %2741 = vst.msk [vmem:[#allocation3 + $0x10] sm:$0xff] %vm426, %v2709
      %2742 = vst.msk [vmem:[#allocation3 + $0x18] sm:$0xff] %vm426, %v2710
      %2743 = vst.msk [vmem:[#allocation3 + $0x20] sm:$0xff] %vm426, %v2711
      %2744 = vst.msk [vmem:[#allocation3 + $0x28] sm:$0xff] %vm426, %v2712
      %2745 = vst.msk [vmem:[#allocation3 + $0x30] sm:$0xff] %vm426, %v2713
      %2746 = vst.msk [vmem:[#allocation3 + $0x38] sm:$0xff] %vm426, %v2714
      %2747 = vst.msk [vmem:[#allocation3 + $0x40] sm:$0xff] %vm426, %v2715
      %2748 = vst.msk [vmem:[#allocation3 + $0x48] sm:$0xff] %vm426, %v2716
      %2749 = vst.msk [vmem:[#allocation3 + $0x50] sm:$0xff] %vm426, %v2717
      %2750 = vst.msk [vmem:[#allocation3 + $0x58] sm:$0xff] %vm426, %v2718
      %2751 = vst.msk [vmem:[#allocation3 + $0x60] sm:$0xff] %vm426, %v2719
      %2752 = vst.msk [vmem:[#allocation3 + $0x68] sm:$0xff] %vm426, %v2720
      %2753 = vst.msk [vmem:[#allocation3 + $0x70] sm:$0xff] %vm426, %v2721
      %2754 = vst.msk [vmem:[#allocation3 + $0x78] sm:$0xff] %vm426, %v2722
      %2755 = vst.msk [vmem:[#allocation3 + $0x80] sm:$0xff] %vm426, %v2723
      %2756 = vst.msk [vmem:[#allocation3 + $0x88] sm:$0xff] %vm426, %v2724
      %2757 = vst.msk [vmem:[#allocation3 + $0x90] sm:$0xff] %vm426, %v2725
      %2758 = vst.msk [vmem:[#allocation3 + $0x98] sm:$0xff] %vm426, %v2726
      %2759 = vst.msk [vmem:[#allocation3 + $0xa0] sm:$0xff] %vm426, %v2727
      %2760 = vst.msk [vmem:[#allocation3 + $0xa8] sm:$0xff] %vm426, %v2728
      %2761 = vst.msk [vmem:[#allocation3 + $0xb0] sm:$0xff] %vm426, %v2729
      %2762 = vst.msk [vmem:[#allocation3 + $0xb8] sm:$0xff] %vm426, %v2730
      %2763 = vst.msk [vmem:[#allocation3 + $0xc0] sm:$0xff] %vm426, %v2731
      %2764 = vst.msk [vmem:[#allocation3 + $0xc8] sm:$0xff] %vm426, %v2732
      %2765 = vst.msk [vmem:[#allocation3 + $0xd0] sm:$0xff] %vm426, %v2733
      %2766 = vst.msk [vmem:[#allocation3 + $0xd8] sm:$0xff] %vm426, %v2734
      %2767 = vst.msk [vmem:[#allocation3 + $0xe0] sm:$0xff] %vm426, %v2735
      %2768 = vst.msk [vmem:[#allocation3 + $0xe8] sm:$0xff] %vm426, %v2736
      %2769 = vst.msk [vmem:[#allocation3 + $0xf0] sm:$0xff] %vm426, %v2737
      %2770 = vst.msk [vmem:[#allocation3 + $0xf8] sm:$0xff] %vm426, %v2738
      %v2771 = vld [vmem:[%s425 + $0x1] sm:$0xff]
      %v2772 = vld [vmem:[%s425 + $0x9] sm:$0xff]
      %v2773 = vld [vmem:[%s425 + $0x19] sm:$0xff]
      %v2774 = vld [vmem:[%s425 + $0x21] sm:$0xff]
      %v2775 = vld [vmem:[%s425 + $0x31] sm:$0xff]
      %v2776 = vld [vmem:[%s425 + $0x39] sm:$0xff]
      %v2777 = vld [vmem:[%s425 + $0x49] sm:$0xff]
      %v2778 = vld [vmem:[%s425 + $0x51] sm:$0xff]
      %v2779 = vld [vmem:[%s425 + $0x61] sm:$0xff]
      %v2780 = vld [vmem:[%s425 + $0x69] sm:$0xff]
      %v2781 = vld [vmem:[%s425 + $0x79] sm:$0xff]
      %v2782 = vld [vmem:[%s425 + $0x81] sm:$0xff]
      %v2783 = vld [vmem:[%s425 + $0x91] sm:$0xff]
      %v2784 = vld [vmem:[%s425 + $0x99] sm:$0xff]
      %v2785 = vld [vmem:[%s425 + $0xa9] sm:$0xff]
      %v2786 = vld [vmem:[%s425 + $0xb1] sm:$0xff]
      %v2787 = vld [vmem:[%s425 + $0xc1] sm:$0xff]
      %v2788 = vld [vmem:[%s425 + $0xc9] sm:$0xff]
      %v2789 = vld [vmem:[%s425 + $0xd9] sm:$0xff]
      %v2790 = vld [vmem:[%s425 + $0xe1] sm:$0xff]
      %v2791 = vld [vmem:[%s425 + $0xf1] sm:$0xff]
      %v2792 = vld [vmem:[%s425 + $0xf9] sm:$0xff]
      %v2793 = vld [vmem:[%s425 + $0x109] sm:$0xff]
      %v2794 = vld [vmem:[%s425 + $0x111] sm:$0xff]
      %v2795 = vld [vmem:[%s425 + $0x121] sm:$0xff]
      %v2796 = vld [vmem:[%s425 + $0x129] sm:$0xff]
      %v2797 = vld [vmem:[%s425 + $0x139] sm:$0xff]
      %v2798 = vld [vmem:[%s425 + $0x141] sm:$0xff]
      %v2799 = vld [vmem:[%s425 + $0x151] sm:$0xff]
      %v2800 = vld [vmem:[%s425 + $0x159] sm:$0xff]
      %v2801 = vld [vmem:[%s425 + $0x169] sm:$0xff]
      %v2802 = vld [vmem:[%s425 + $0x171] sm:$0xff]
      %2835 = vrot.lane.b32.xlu0 %v2771, 4
      %v2836 = vpop.permute.xlu0 %2835
      %2837 = vrot.lane.b32.xlu0 %v2772, 4
      %v2838 = vpop.permute.xlu0 %2837
      %2839 = vrot.lane.b32.xlu0 %v2773, 4
      %v2840 = vpop.permute.xlu0 %2839
      %2841 = vrot.lane.b32.xlu0 %v2774, 4
      %v2842 = vpop.permute.xlu0 %2841
      %2843 = vrot.lane.b32.xlu0 %v2775, 4
      %v2844 = vpop.permute.xlu0 %2843
      %2845 = vrot.lane.b32.xlu0 %v2776, 4
      %v2846 = vpop.permute.xlu0 %2845
      %2847 = vrot.lane.b32.xlu0 %v2777, 4
      %v2848 = vpop.permute.xlu0 %2847
      %2849 = vrot.lane.b32.xlu0 %v2778, 4
      %v2850 = vpop.permute.xlu0 %2849
      %2851 = vrot.lane.b32.xlu0 %v2779, 4
      %v2852 = vpop.permute.xlu0 %2851
      %2853 = vrot.lane.b32.xlu0 %v2780, 4
      %v2854 = vpop.permute.xlu0 %2853
      %2855 = vrot.lane.b32.xlu0 %v2781, 4
      %v2856 = vpop.permute.xlu0 %2855
      %2857 = vrot.lane.b32.xlu0 %v2782, 4
      %v2858 = vpop.permute.xlu0 %2857
      %2859 = vrot.lane.b32.xlu0 %v2783, 4
      %v2860 = vpop.permute.xlu0 %2859
      %2861 = vrot.lane.b32.xlu0 %v2784, 4
      %v2862 = vpop.permute.xlu0 %2861
      %2863 = vrot.lane.b32.xlu0 %v2785, 4
      %v2864 = vpop.permute.xlu0 %2863
      %2865 = vrot.lane.b32.xlu0 %v2786, 4
      %v2866 = vpop.permute.xlu0 %2865
      %2867 = vrot.lane.b32.xlu0 %v2787, 4
      %v2868 = vpop.permute.xlu0 %2867
      %2869 = vrot.lane.b32.xlu0 %v2788, 4
      %v2870 = vpop.permute.xlu0 %2869
      %2871 = vrot.lane.b32.xlu0 %v2789, 4
      %v2872 = vpop.permute.xlu0 %2871
      %2873 = vrot.lane.b32.xlu0 %v2790, 4
      %v2874 = vpop.permute.xlu0 %2873
      %2875 = vrot.lane.b32.xlu0 %v2791, 4
      %v2876 = vpop.permute.xlu0 %2875
      %2877 = vrot.lane.b32.xlu0 %v2792, 4
      %v2878 = vpop.permute.xlu0 %2877
      %2879 = vrot.lane.b32.xlu0 %v2793, 4
      %v2880 = vpop.permute.xlu0 %2879
      %2881 = vrot.lane.b32.xlu0 %v2794, 4
      %v2882 = vpop.permute.xlu0 %2881
      %2883 = vrot.lane.b32.xlu0 %v2795, 4
      %v2884 = vpop.permute.xlu0 %2883
      %2885 = vrot.lane.b32.xlu0 %v2796, 4
      %v2886 = vpop.permute.xlu0 %2885
      %2887 = vrot.lane.b32.xlu0 %v2797, 4
      %v2888 = vpop.permute.xlu0 %2887
      %2889 = vrot.lane.b32.xlu0 %v2798, 4
      %v2890 = vpop.permute.xlu0 %2889
      %2891 = vrot.lane.b32.xlu0 %v2799, 4
      %v2892 = vpop.permute.xlu0 %2891
      %2893 = vrot.lane.b32.xlu0 %v2800, 4
      %v2894 = vpop.permute.xlu0 %2893
      %2895 = vrot.lane.b32.xlu0 %v2801, 4
      %v2896 = vpop.permute.xlu0 %2895
      %2897 = vrot.lane.b32.xlu0 %v2802, 4
      %v2898 = vpop.permute.xlu0 %2897
      %2931 = vst.msk [vmem:[#allocation3] sm:$0xff] %vm738, %v2836
      %2932 = vst.msk [vmem:[#allocation3 + $0x8] sm:$0xff] %vm738, %v2838
      %2933 = vst.msk [vmem:[#allocation3 + $0x10] sm:$0xff] %vm738, %v2840
      %2934 = vst.msk [vmem:[#allocation3 + $0x18] sm:$0xff] %vm738, %v2842
      %2935 = vst.msk [vmem:[#allocation3 + $0x20] sm:$0xff] %vm738, %v2844
      %2936 = vst.msk [vmem:[#allocation3 + $0x28] sm:$0xff] %vm738, %v2846
      %2937 = vst.msk [vmem:[#allocation3 + $0x30] sm:$0xff] %vm738, %v2848
      %2938 = vst.msk [vmem:[#allocation3 + $0x38] sm:$0xff] %vm738, %v2850
      %2939 = vst.msk [vmem:[#allocation3 + $0x40] sm:$0xff] %vm738, %v2852
      %2940 = vst.msk [vmem:[#allocation3 + $0x48] sm:$0xff] %vm738, %v2854
      %2941 = vst.msk [vmem:[#allocation3 + $0x50] sm:$0xff] %vm738, %v2856
      %2942 = vst.msk [vmem:[#allocation3 + $0x58] sm:$0xff] %vm738, %v2858
      %2943 = vst.msk [vmem:[#allocation3 + $0x60] sm:$0xff] %vm738, %v2860
      %2944 = vst.msk [vmem:[#allocation3 + $0x68] sm:$0xff] %vm738, %v2862
      %2945 = vst.msk [vmem:[#allocation3 + $0x70] sm:$0xff] %vm738, %v2864
      %2946 = vst.msk [vmem:[#allocation3 + $0x78] sm:$0xff] %vm738, %v2866
      %2947 = vst.msk [vmem:[#allocation3 + $0x80] sm:$0xff] %vm738, %v2868
      %2948 = vst.msk [vmem:[#allocation3 + $0x88] sm:$0xff] %vm738, %v2870
      %2949 = vst.msk [vmem:[#allocation3 + $0x90] sm:$0xff] %vm738, %v2872
      %2950 = vst.msk [vmem:[#allocation3 + $0x98] sm:$0xff] %vm738, %v2874
      %2951 = vst.msk [vmem:[#allocation3 + $0xa0] sm:$0xff] %vm738, %v2876
      %2952 = vst.msk [vmem:[#allocation3 + $0xa8] sm:$0xff] %vm738, %v2878
      %2953 = vst.msk [vmem:[#allocation3 + $0xb0] sm:$0xff] %vm738, %v2880
      %2954 = vst.msk [vmem:[#allocation3 + $0xb8] sm:$0xff] %vm738, %v2882
      %2955 = vst.msk [vmem:[#allocation3 + $0xc0] sm:$0xff] %vm738, %v2884
      %2956 = vst.msk [vmem:[#allocation3 + $0xc8] sm:$0xff] %vm738, %v2886
      %2957 = vst.msk [vmem:[#allocation3 + $0xd0] sm:$0xff] %vm738, %v2888
      %2958 = vst.msk [vmem:[#allocation3 + $0xd8] sm:$0xff] %vm738, %v2890
      %2959 = vst.msk [vmem:[#allocation3 + $0xe0] sm:$0xff] %vm738, %v2892
      %2960 = vst.msk [vmem:[#allocation3 + $0xe8] sm:$0xff] %vm738, %v2894
      %2961 = vst.msk [vmem:[#allocation3 + $0xf0] sm:$0xff] %vm738, %v2896
      %2962 = vst.msk [vmem:[#allocation3 + $0xf8] sm:$0xff] %vm738, %v2898
      %s2963 = scalar_lea.vmem [#allocation2], 48
      %v2964 = vld [vmem:[%s2963] sm:$0xff]
      %v2965 = vld [vmem:[%s2963 + $0x8] sm:$0xff]
      %v2966 = vld [vmem:[%s2963 + $0x18] sm:$0xff]
      %v2967 = vld [vmem:[%s2963 + $0x20] sm:$0xff]
      %v2968 = vld [vmem:[%s2963 + $0x30] sm:$0xff]
      %v2969 = vld [vmem:[%s2963 + $0x38] sm:$0xff]
      %v2970 = vld [vmem:[%s2963 + $0x48] sm:$0xff]
      %v2971 = vld [vmem:[%s2963 + $0x50] sm:$0xff]
      %v2972 = vld [vmem:[%s2963 + $0x60] sm:$0xff]
      %v2973 = vld [vmem:[%s2963 + $0x68] sm:$0xff]
      %v2974 = vld [vmem:[%s2963 + $0x78] sm:$0xff]
      %v2975 = vld [vmem:[%s2963 + $0x80] sm:$0xff]
      %v2976 = vld [vmem:[%s2963 + $0x90] sm:$0xff]
      %v2977 = vld [vmem:[%s2963 + $0x98] sm:$0xff]
      %v2978 = vld [vmem:[%s2963 + $0xa8] sm:$0xff]
      %v2979 = vld [vmem:[%s2963 + $0xb0] sm:$0xff]
      %v2980 = vld [vmem:[%s2963 + $0xc0] sm:$0xff]
      %v2981 = vld [vmem:[%s2963 + $0xc8] sm:$0xff]
      %v2982 = vld [vmem:[%s2963 + $0xd8] sm:$0xff]
      %v2983 = vld [vmem:[%s2963 + $0xe0] sm:$0xff]
      %v2984 = vld [vmem:[%s2963 + $0xf0] sm:$0xff]
      %v2985 = vld [vmem:[%s2963 + $0xf8] sm:$0xff]
      %v2986 = vld [vmem:[%s2963 + $0x108] sm:$0xff]
      %v2987 = vld [vmem:[%s2963 + $0x110] sm:$0xff]
      %v2988 = vld [vmem:[%s2963 + $0x120] sm:$0xff]
      %v2989 = vld [vmem:[%s2963 + $0x128] sm:$0xff]
      %v2990 = vld [vmem:[%s2963 + $0x138] sm:$0xff]
      %v2991 = vld [vmem:[%s2963 + $0x140] sm:$0xff]
      %v2992 = vld [vmem:[%s2963 + $0x150] sm:$0xff]
      %v2993 = vld [vmem:[%s2963 + $0x158] sm:$0xff]
      %v2994 = vld [vmem:[%s2963 + $0x168] sm:$0xff]
      %v2995 = vld [vmem:[%s2963 + $0x170] sm:$0xff]
      %3028 = vrot.lane.b32.xlu0 %v2964, 8
      %v3029 = vpop.permute.xlu0 %3028
      %3030 = vrot.lane.b32.xlu0 %v2965, 8
      %v3031 = vpop.permute.xlu0 %3030
      %3032 = vrot.lane.b32.xlu0 %v2966, 8
      %v3033 = vpop.permute.xlu0 %3032
      %3034 = vrot.lane.b32.xlu0 %v2967, 8
      %v3035 = vpop.permute.xlu0 %3034
      %3036 = vrot.lane.b32.xlu0 %v2968, 8
      %v3037 = vpop.permute.xlu0 %3036
      %3038 = vrot.lane.b32.xlu0 %v2969, 8
      %v3039 = vpop.permute.xlu0 %3038
      %3040 = vrot.lane.b32.xlu0 %v2970, 8
      %v3041 = vpop.permute.xlu0 %3040
      %3042 = vrot.lane.b32.xlu0 %v2971, 8
      %v3043 = vpop.permute.xlu0 %3042
      %3044 = vrot.lane.b32.xlu0 %v2972, 8
      %v3045 = vpop.permute.xlu0 %3044
      %3046 = vrot.lane.b32.xlu0 %v2973, 8
      %v3047 = vpop.permute.xlu0 %3046
      %3048 = vrot.lane.b32.xlu0 %v2974, 8
      %v3049 = vpop.permute.xlu0 %3048
      %3050 = vrot.lane.b32.xlu0 %v2975, 8
      %v3051 = vpop.permute.xlu0 %3050
      %3052 = vrot.lane.b32.xlu0 %v2976, 8
      %v3053 = vpop.permute.xlu0 %3052
      %3054 = vrot.lane.b32.xlu0 %v2977, 8
      %v3055 = vpop.permute.xlu0 %3054
      %3056 = vrot.lane.b32.xlu0 %v2978, 8
      %v3057 = vpop.permute.xlu0 %3056
      %3058 = vrot.lane.b32.xlu0 %v2979, 8
      %v3059 = vpop.permute.xlu0 %3058
      %3060 = vrot.lane.b32.xlu0 %v2980, 8
      %v3061 = vpop.permute.xlu0 %3060
      %3062 = vrot.lane.b32.xlu0 %v2981, 8
      %v3063 = vpop.permute.xlu0 %3062
      %3064 = vrot.lane.b32.xlu0 %v2982, 8
      %v3065 = vpop.permute.xlu0 %3064
      %3066 = vrot.lane.b32.xlu0 %v2983, 8
      %v3067 = vpop.permute.xlu0 %3066
      %3068 = vrot.lane.b32.xlu0 %v2984, 8
      %v3069 = vpop.permute.xlu0 %3068
      %3070 = vrot.lane.b32.xlu0 %v2985, 8
      %v3071 = vpop.permute.xlu0 %3070
      %3072 = vrot.lane.b32.xlu0 %v2986, 8
      %v3073 = vpop.permute.xlu0 %3072
      %3074 = vrot.lane.b32.xlu0 %v2987, 8
      %v3075 = vpop.permute.xlu0 %3074
      %3076 = vrot.lane.b32.xlu0 %v2988, 8
      %v3077 = vpop.permute.xlu0 %3076
      %3078 = vrot.lane.b32.xlu0 %v2989, 8
      %v3079 = vpop.permute.xlu0 %3078
      %3080 = vrot.lane.b32.xlu0 %v2990, 8
      %v3081 = vpop.permute.xlu0 %3080
      %3082 = vrot.lane.b32.xlu0 %v2991, 8
      %v3083 = vpop.permute.xlu0 %3082
      %3084 = vrot.lane.b32.xlu0 %v2992, 8
      %v3085 = vpop.permute.xlu0 %3084
      %3086 = vrot.lane.b32.xlu0 %v2993, 8
      %v3087 = vpop.permute.xlu0 %3086
      %3088 = vrot.lane.b32.xlu0 %v2994, 8
      %v3089 = vpop.permute.xlu0 %3088
      %3090 = vrot.lane.b32.xlu0 %v2995, 8
      %v3091 = vpop.permute.xlu0 %3090
      %3124 = vst.msk [vmem:[#allocation3] sm:$0xff] %vm931, %v3029
      %3125 = vst.msk [vmem:[#allocation3 + $0x8] sm:$0xff] %vm931, %v3031
      %3126 = vst.msk [vmem:[#allocation3 + $0x10] sm:$0xff] %vm931, %v3033
      %3127 = vst.msk [vmem:[#allocation3 + $0x18] sm:$0xff] %vm931, %v3035
      %3128 = vst.msk [vmem:[#allocation3 + $0x20] sm:$0xff] %vm931, %v3037
      %3129 = vst.msk [vmem:[#allocation3 + $0x28] sm:$0xff] %vm931, %v3039
      %3130 = vst.msk [vmem:[#allocation3 + $0x30] sm:$0xff] %vm931, %v3041
      %3131 = vst.msk [vmem:[#allocation3 + $0x38] sm:$0xff] %vm931, %v3043
      %3132 = vst.msk [vmem:[#allocation3 + $0x40] sm:$0xff] %vm931, %v3045
      %3133 = vst.msk [vmem:[#allocation3 + $0x48] sm:$0xff] %vm931, %v3047
      %3134 = vst.msk [vmem:[#allocation3 + $0x50] sm:$0xff] %vm931, %v3049
      %3135 = vst.msk [vmem:[#allocation3 + $0x58] sm:$0xff] %vm931, %v3051
      %3136 = vst.msk [vmem:[#allocation3 + $0x60] sm:$0xff] %vm931, %v3053
      %3137 = vst.msk [vmem:[#allocation3 + $0x68] sm:$0xff] %vm931, %v3055
      %3138 = vst.msk [vmem:[#allocation3 + $0x70] sm:$0xff] %vm931, %v3057
      %3139 = vst.msk [vmem:[#allocation3 + $0x78] sm:$0xff] %vm931, %v3059
      %3140 = vst.msk [vmem:[#allocation3 + $0x80] sm:$0xff] %vm931, %v3061
      %3141 = vst.msk [vmem:[#allocation3 + $0x88] sm:$0xff] %vm931, %v3063
      %3142 = vst.msk [vmem:[#allocation3 + $0x90] sm:$0xff] %vm931, %v3065
      %3143 = vst.msk [vmem:[#allocation3 + $0x98] sm:$0xff] %vm931, %v3067
      %3144 = vst.msk [vmem:[#allocation3 + $0xa0] sm:$0xff] %vm931, %v3069
      %3145 = vst.msk [vmem:[#allocation3 + $0xa8] sm:$0xff] %vm931, %v3071
      %3146 = vst.msk [vmem:[#allocation3 + $0xb0] sm:$0xff] %vm931, %v3073
      %3147 = vst.msk [vmem:[#allocation3 + $0xb8] sm:$0xff] %vm931, %v3075
      %3148 = vst.msk [vmem:[#allocation3 + $0xc0] sm:$0xff] %vm931, %v3077
      %3149 = vst.msk [vmem:[#allocation3 + $0xc8] sm:$0xff] %vm931, %v3079
      %3150 = vst.msk [vmem:[#allocation3 + $0xd0] sm:$0xff] %vm931, %v3081
      %3151 = vst.msk [vmem:[#allocation3 + $0xd8] sm:$0xff] %vm931, %v3083
      %3152 = vst.msk [vmem:[#allocation3 + $0xe0] sm:$0xff] %vm931, %v3085
      %3153 = vst.msk [vmem:[#allocation3 + $0xe8] sm:$0xff] %vm931, %v3087
      %3154 = vst.msk [vmem:[#allocation3 + $0xf0] sm:$0xff] %vm931, %v3089
      %3155 = vst.msk [vmem:[#allocation3 + $0xf8] sm:$0xff] %vm931, %v3091
      %v3156 = vld [vmem:[%s2963 + $0x1] sm:$0xff]
      %v3157 = vld [vmem:[%s2963 + $0x9] sm:$0xff]
      %v3158 = vld [vmem:[%s2963 + $0x19] sm:$0xff]
      %v3159 = vld [vmem:[%s2963 + $0x21] sm:$0xff]
      %v3160 = vld [vmem:[%s2963 + $0x31] sm:$0xff]
      %v3161 = vld [vmem:[%s2963 + $0x39] sm:$0xff]
      %v3162 = vld [vmem:[%s2963 + $0x49] sm:$0xff]
      %v3163 = vld [vmem:[%s2963 + $0x51] sm:$0xff]
      %v3164 = vld [vmem:[%s2963 + $0x61] sm:$0xff]
      %v3165 = vld [vmem:[%s2963 + $0x69] sm:$0xff]
      %v3166 = vld [vmem:[%s2963 + $0x79] sm:$0xff]
      %v3167 = vld [vmem:[%s2963 + $0x81] sm:$0xff]
      %v3168 = vld [vmem:[%s2963 + $0x91] sm:$0xff]
      %v3169 = vld [vmem:[%s2963 + $0x99] sm:$0xff]
      %v3170 = vld [vmem:[%s2963 + $0xa9] sm:$0xff]
      %v3171 = vld [vmem:[%s2963 + $0xb1] sm:$0xff]
      %v3172 = vld [vmem:[%s2963 + $0xc1] sm:$0xff]
      %v3173 = vld [vmem:[%s2963 + $0xc9] sm:$0xff]
      %v3174 = vld [vmem:[%s2963 + $0xd9] sm:$0xff]
      %v3175 = vld [vmem:[%s2963 + $0xe1] sm:$0xff]
      %v3176 = vld [vmem:[%s2963 + $0xf1] sm:$0xff]
      %v3177 = vld [vmem:[%s2963 + $0xf9] sm:$0xff]
      %v3178 = vld [vmem:[%s2963 + $0x109] sm:$0xff]
      %v3179 = vld [vmem:[%s2963 + $0x111] sm:$0xff]
      %v3180 = vld [vmem:[%s2963 + $0x121] sm:$0xff]
      %v3181 = vld [vmem:[%s2963 + $0x129] sm:$0xff]
      %v3182 = vld [vmem:[%s2963 + $0x139] sm:$0xff]
      %v3183 = vld [vmem:[%s2963 + $0x141] sm:$0xff]
      %v3184 = vld [vmem:[%s2963 + $0x151] sm:$0xff]
      %v3185 = vld [vmem:[%s2963 + $0x159] sm:$0xff]
      %v3186 = vld [vmem:[%s2963 + $0x169] sm:$0xff]
      %v3187 = vld [vmem:[%s2963 + $0x171] sm:$0xff]
      %3220 = vrot.lane.b32.xlu0 %v3156, 12
      %v3221 = vpop.permute.xlu0 %3220
      %3222 = vrot.lane.b32.xlu0 %v3157, 12
      %v3223 = vpop.permute.xlu0 %3222
      %3224 = vrot.lane.b32.xlu0 %v3158, 12
      %v3225 = vpop.permute.xlu0 %3224
      %3226 = vrot.lane.b32.xlu0 %v3159, 12
      %v3227 = vpop.permute.xlu0 %3226
      %3228 = vrot.lane.b32.xlu0 %v3160, 12
      %v3229 = vpop.permute.xlu0 %3228
      %3230 = vrot.lane.b32.xlu0 %v3161, 12
      %v3231 = vpop.permute.xlu0 %3230
      %3232 = vrot.lane.b32.xlu0 %v3162, 12
      %v3233 = vpop.permute.xlu0 %3232
      %3234 = vrot.lane.b32.xlu0 %v3163, 12
      %v3235 = vpop.permute.xlu0 %3234
      %3236 = vrot.lane.b32.xlu0 %v3164, 12
      %v3237 = vpop.permute.xlu0 %3236
      %3238 = vrot.lane.b32.xlu0 %v3165, 12
      %v3239 = vpop.permute.xlu0 %3238
      %3240 = vrot.lane.b32.xlu0 %v3166, 12
      %v3241 = vpop.permute.xlu0 %3240
      %3242 = vrot.lane.b32.xlu0 %v3167, 12
      %v3243 = vpop.permute.xlu0 %3242
      %3244 = vrot.lane.b32.xlu0 %v3168, 12
      %v3245 = vpop.permute.xlu0 %3244
      %3246 = vrot.lane.b32.xlu0 %v3169, 12
      %v3247 = vpop.permute.xlu0 %3246
      %3248 = vrot.lane.b32.xlu0 %v3170, 12
      %v3249 = vpop.permute.xlu0 %3248
      %3250 = vrot.lane.b32.xlu0 %v3171, 12
      %v3251 = vpop.permute.xlu0 %3250
      %3252 = vrot.lane.b32.xlu0 %v3172, 12
      %v3253 = vpop.permute.xlu0 %3252
      %3254 = vrot.lane.b32.xlu0 %v3173, 12
      %v3255 = vpop.permute.xlu0 %3254
      %3256 = vrot.lane.b32.xlu0 %v3174, 12
      %v3257 = vpop.permute.xlu0 %3256
      %3258 = vrot.lane.b32.xlu0 %v3175, 12
      %v3259 = vpop.permute.xlu0 %3258
      %3260 = vrot.lane.b32.xlu0 %v3176, 12
      %v3261 = vpop.permute.xlu0 %3260
      %3262 = vrot.lane.b32.xlu0 %v3177, 12
      %v3263 = vpop.permute.xlu0 %3262
      %3264 = vrot.lane.b32.xlu0 %v3178, 12
      %v3265 = vpop.permute.xlu0 %3264
      %3266 = vrot.lane.b32.xlu0 %v3179, 12
      %v3267 = vpop.permute.xlu0 %3266
      %3268 = vrot.lane.b32.xlu0 %v3180, 12
      %v3269 = vpop.permute.xlu0 %3268
      %3270 = vrot.lane.b32.xlu0 %v3181, 12
      %v3271 = vpop.permute.xlu0 %3270
      %3272 = vrot.lane.b32.xlu0 %v3182, 12
      %v3273 = vpop.permute.xlu0 %3272
      %3274 = vrot.lane.b32.xlu0 %v3183, 12
      %v3275 = vpop.permute.xlu0 %3274
      %3276 = vrot.lane.b32.xlu0 %v3184, 12
      %v3277 = vpop.permute.xlu0 %3276
      %3278 = vrot.lane.b32.xlu0 %v3185, 12
      %v3279 = vpop.permute.xlu0 %3278
      %3280 = vrot.lane.b32.xlu0 %v3186, 12
      %v3281 = vpop.permute.xlu0 %3280
      %3282 = vrot.lane.b32.xlu0 %v3187, 12
      %v3283 = vpop.permute.xlu0 %3282
      %3316 = vst.msk [vmem:[#allocation3] sm:$0xff] %vm1124, %v3221
      %3317 = vst.msk [vmem:[#allocation3 + $0x8] sm:$0xff] %vm1124, %v3223
      %3318 = vst.msk [vmem:[#allocation3 + $0x10] sm:$0xff] %vm1124, %v3225
      %3319 = vst.msk [vmem:[#allocation3 + $0x18] sm:$0xff] %vm1124, %v3227
      %3320 = vst.msk [vmem:[#allocation3 + $0x20] sm:$0xff] %vm1124, %v3229
      %3321 = vst.msk [vmem:[#allocation3 + $0x28] sm:$0xff] %vm1124, %v3231
      %3322 = vst.msk [vmem:[#allocation3 + $0x30] sm:$0xff] %vm1124, %v3233
      %3323 = vst.msk [vmem:[#allocation3 + $0x38] sm:$0xff] %vm1124, %v3235
      %3324 = vst.msk [vmem:[#allocation3 + $0x40] sm:$0xff] %vm1124, %v3237
      %3325 = vst.msk [vmem:[#allocation3 + $0x48] sm:$0xff] %vm1124, %v3239
      %3326 = vst.msk [vmem:[#allocation3 + $0x50] sm:$0xff] %vm1124, %v3241
      %3327 = vst.msk [vmem:[#allocation3 + $0x58] sm:$0xff] %vm1124, %v3243
      %3328 = vst.msk [vmem:[#allocation3 + $0x60] sm:$0xff] %vm1124, %v3245
      %3329 = vst.msk [vmem:[#allocation3 + $0x68] sm:$0xff] %vm1124, %v3247
      %3330 = vst.msk [vmem:[#allocation3 + $0x70] sm:$0xff] %vm1124, %v3249
      %3331 = vst.msk [vmem:[#allocation3 + $0x78] sm:$0xff] %vm1124, %v3251
      %3332 = vst.msk [vmem:[#allocation3 + $0x80] sm:$0xff] %vm1124, %v3253
      %3333 = vst.msk [vmem:[#allocation3 + $0x88] sm:$0xff] %vm1124, %v3255
      %3334 = vst.msk [vmem:[#allocation3 + $0x90] sm:$0xff] %vm1124, %v3257
      %3335 = vst.msk [vmem:[#allocation3 + $0x98] sm:$0xff] %vm1124, %v3259
      %3336 = vst.msk [vmem:[#allocation3 + $0xa0] sm:$0xff] %vm1124, %v3261
      %3337 = vst.msk [vmem:[#allocation3 + $0xa8] sm:$0xff] %vm1124, %v3263
      %3338 = vst.msk [vmem:[#allocation3 + $0xb0] sm:$0xff] %vm1124, %v3265
      %3339 = vst.msk [vmem:[#allocation3 + $0xb8] sm:$0xff] %vm1124, %v3267
      %3340 = vst.msk [vmem:[#allocation3 + $0xc0] sm:$0xff] %vm1124, %v3269
      %3341 = vst.msk [vmem:[#allocation3 + $0xc8] sm:$0xff] %vm1124, %v3271
      %3342 = vst.msk [vmem:[#allocation3 + $0xd0] sm:$0xff] %vm1124, %v3273
      %3343 = vst.msk [vmem:[#allocation3 + $0xd8] sm:$0xff] %vm1124, %v3275
      %3344 = vst.msk [vmem:[#allocation3 + $0xe0] sm:$0xff] %vm1124, %v3277
      %3345 = vst.msk [vmem:[#allocation3 + $0xe8] sm:$0xff] %vm1124, %v3279
      %3346 = vst.msk [vmem:[#allocation3 + $0xf0] sm:$0xff] %vm1124, %v3281
      %3347 = vst.msk [vmem:[#allocation3 + $0xf8] sm:$0xff] %vm1124, %v3283
      %v3348 = vld [vmem:[#allocation3] sm:$0xff]
      %v3349 = vld [vmem:[#allocation3 + $0x8] sm:$0xff]
      %v3350 = vld [vmem:[#allocation3 + $0x10] sm:$0xff]
      %v3351 = vld [vmem:[#allocation3 + $0x18] sm:$0xff]
      %v3352 = vld [vmem:[#allocation3 + $0x20] sm:$0xff]
      %v3353 = vld [vmem:[#allocation3 + $0x28] sm:$0xff]
      %v3354 = vld [vmem:[#allocation3 + $0x30] sm:$0xff]
      %v3355 = vld [vmem:[#allocation3 + $0x38] sm:$0xff]
      %v3356 = vld [vmem:[#allocation3 + $0x40] sm:$0xff]
      %v3357 = vld [vmem:[#allocation3 + $0x48] sm:$0xff]
      %v3358 = vld [vmem:[#allocation3 + $0x50] sm:$0xff]
      %v3359 = vld [vmem:[#allocation3 + $0x58] sm:$0xff]
      %v3360 = vld [vmem:[#allocation3 + $0x60] sm:$0xff]
      %v3361 = vld [vmem:[#allocation3 + $0x68] sm:$0xff]
      %v3362 = vld [vmem:[#allocation3 + $0x70] sm:$0xff]
      %v3363 = vld [vmem:[#allocation3 + $0x78] sm:$0xff]
      %v3364 = vld [vmem:[#allocation3 + $0x80] sm:$0xff]
      %v3365 = vld [vmem:[#allocation3 + $0x88] sm:$0xff]
      %v3366 = vld [vmem:[#allocation3 + $0x90] sm:$0xff]
      %v3367 = vld [vmem:[#allocation3 + $0x98] sm:$0xff]
      %v3368 = vld [vmem:[#allocation3 + $0xa0] sm:$0xff]
      %v3369 = vld [vmem:[#allocation3 + $0xa8] sm:$0xff]
      %v3370 = vld [vmem:[#allocation3 + $0xb0] sm:$0xff]
      %v3371 = vld [vmem:[#allocation3 + $0xb8] sm:$0xff]
      %v3372 = vld [vmem:[#allocation3 + $0xc0] sm:$0xff]
      %v3373 = vld [vmem:[#allocation3 + $0xc8] sm:$0xff]
      %v3374 = vld [vmem:[#allocation3 + $0xd0] sm:$0xff]
      %v3375 = vld [vmem:[#allocation3 + $0xd8] sm:$0xff]
      %v3376 = vld [vmem:[#allocation3 + $0xe0] sm:$0xff]
      %v3377 = vld [vmem:[#allocation3 + $0xe8] sm:$0xff]
      %v3378 = vld [vmem:[#allocation3 + $0xf0] sm:$0xff]
      %v3379 = vld [vmem:[#allocation3 + $0xf8] sm:$0xff]
      %s3380 = scalar_lea.vmem %s3, 32
      %v3381 = vld [vmem:[%s3380] sm:$0xff]
      %v3382 = vld [vmem:[%s3380 + $0x8] sm:$0xff]
      %v3384 = vsel %vm1197, %v3348, 0
      %v3387 = vsel %vm1197, %v3349, 0
      %v3390 = vsel %vm1197, %v3350, 0
      %v3393 = vsel %vm1197, %v3351, 0
      %v3396 = vsel %vm1197, %v3352, 0
      %v3399 = vsel %vm1197, %v3353, 0
      %v3402 = vsel %vm1197, %v3354, 0
      %v3405 = vsel %vm1197, %v3355, 0
      %v3408 = vsel %vm1197, %v3356, 0
      %v3411 = vsel %vm1197, %v3357, 0
      %v3414 = vsel %vm1197, %v3358, 0
      %v3417 = vsel %vm1197, %v3359, 0
      %v3420 = vsel %vm1197, %v3360, 0
      %v3423 = vsel %vm1197, %v3361, 0
      %v3426 = vsel %vm1197, %v3362, 0
      %v3429 = vsel %vm1197, %v3363, 0
      %v3432 = vsel %vm1197, %v3364, 0
      %v3435 = vsel %vm1197, %v3365, 0
      %v3438 = vsel %vm1197, %v3366, 0
      %v3441 = vsel %vm1197, %v3367, 0
      %v3444 = vsel %vm1197, %v3368, 0
      %v3447 = vsel %vm1197, %v3369, 0
      %v3450 = vsel %vm1197, %v3370, 0
      %v3453 = vsel %vm1197, %v3371, 0
      %v3456 = vsel %vm1197, %v3372, 0
      %v3459 = vsel %vm1197, %v3373, 0
      %v3462 = vsel %vm1197, %v3374, 0
      %v3465 = vsel %vm1197, %v3375, 0
      %v3468 = vsel %vm1197, %v3376, 0
      %v3471 = vsel %vm1197, %v3377, 0
      %v3474 = vsel %vm1197, %v3378, 0
      %v3477 = vsel %vm1197, %v3379, 0
      %3479 = vmatprep.subr.mxu0 0.0
      %3480 = vmatpush1.msra.mxu0 %v3381
      %3481 = vmatprep.subr.mxu0 0.0
      %3482 = vmatpush1.msra.mxu0 %v3382
      %3483 = vmatprep.subr.mxu0 0.0
      %3484 = vmatpush1.msra.mxu0 0.0
      %3485 = vmatprep.subr.mxu0 0.0
      %3486 = vmatpush1.msra.mxu0 0.0
      %3487 = vmatprep.subr.mxu0 0.0
      %3488 = vmatpush1.msra.mxu0 0.0
      %3489 = vmatprep.subr.mxu0 0.0
      %3490 = vmatpush1.msra.mxu0 0.0
      %3491 = vmatprep.subr.mxu0 0.0
      %3492 = vmatpush1.msra.mxu0 0.0
      %3493 = vmatprep.subr.mxu0 0.0
      %3494 = vmatpush1.msra.mxu0 0.0
      %3495 = vmatprep.subr.mxu0 0.0
      %3496 = vmatpush1.msra.mxu0 0.0
      %3497 = vmatprep.subr.mxu0 0.0
      %3498 = vmatpush1.msra.mxu0 0.0
      %3499 = vmatprep.subr.mxu0 0.0
      %3500 = vmatpush1.msra.mxu0 0.0
      %3501 = vmatprep.subr.mxu0 0.0
      %3502 = vmatpush1.msra.mxu0 0.0
      %3503 = vmatprep.subr.mxu0 0.0
      %3504 = vmatpush1.msra.mxu0 0.0
      %3505 = vmatprep.subr.mxu0 0.0
      %3506 = vmatpush1.msra.mxu0 0.0
      %3507 = vmatprep.subr.mxu0 0.0
      %3508 = vmatpush1.msra.mxu0 0.0
      %3509 = vmatprep.subr.mxu0 0.0
      %3510 = vmatpush1.msra.mxu0 0.0
      %3511 = vmatprep.subr.mxu0 0.0
      %3512 = vmatpush1.msra.mxu0 0.0
      %3513 = vmatprep.subr.mxu0 0.0
      %3514 = vmatpush1.msra.mxu0 0.0
      %3515 = vmatprep.subr.mxu0 0.0
      %3516 = vmatpush1.msra.mxu0 0.0
      %3517 = vmatprep.subr.mxu0 0.0
      %3518 = vmatpush1.msra.mxu0 0.0
      %3519 = vmatprep.subr.mxu0 0.0
      %3520 = vmatpush1.msra.mxu0 0.0
      %3521 = vmatprep.subr.mxu0 0.0
      %3522 = vmatpush1.msra.mxu0 0.0
      %3523 = vmatprep.subr.mxu0 0.0
      %3524 = vmatpush1.msra.mxu0 0.0
      %3525 = vmatprep.subr.mxu0 0.0
      %3526 = vmatpush1.msra.mxu0 0.0
      %3527 = vmatprep.subr.mxu0 0.0
      %3528 = vmatpush1.msra.mxu0 0.0
      %3529 = vmatprep.subr.mxu0 0.0
      %3530 = vmatpush1.msra.mxu0 0.0
      %3531 = vmatprep.subr.mxu0 0.0
      %3532 = vmatpush1.msra.mxu0 0.0
      %3533 = vmatprep.subr.mxu0 0.0
      %3534 = vmatpush1.msra.mxu0 0.0
      %3535 = vmatprep.subr.mxu0 0.0
      %3536 = vmatpush1.msra.mxu0 0.0
      %3537 = vmatprep.subr.mxu0 0.0
      %3538 = vmatpush1.msra.mxu0 0.0
      %3539 = vmatprep.subr.mxu0 0.0
      %3540 = vmatpush1.msra.mxu0 0.0
      %3541 = vmatprep.subr.mxu0 0.0
      %3542 = vmatpush1.msra.mxu0 0.0
      %3543 = vmatprep.mubr.f32.mxu0 0.0
      %3544 = vmatmul.mubr.f32.gmra.mrb[0].mxu0 %v3384
      %v3545 = vpop.f32.mrb[0].mxu0
      %v3546 = vadd.f32 %v1195, %v3545
      %v3547 = vpop.f32.mrb[0].mxu0
      %3548 = vmatprep.mubr.f32.mxu0 0.0
      %3549 = vmatmul.mubr.f32.gmra.mrb[0].mxu0 %v3387
      %v3550 = vpop.f32.mrb[0].mxu0
      %v3551 = vadd.f32 %v1195, %v3550
      %v3552 = vpop.f32.mrb[0].mxu0
      %3553 = vmatprep.mubr.f32.mxu0 0.0
      %3554 = vmatmul.mubr.f32.gmra.mrb[0].mxu0 %v3390
      %v3555 = vpop.f32.mrb[0].mxu0
      %v3556 = vadd.f32 %v1195, %v3555
      %v3557 = vpop.f32.mrb[0].mxu0
      %3558 = vmatprep.mubr.f32.mxu0 0.0
      %3559 = vmatmul.mubr.f32.gmra.mrb[0].mxu0 %v3393
      %v3560 = vpop.f32.mrb[0].mxu0
      %v3561 = vadd.f32 %v1195, %v3560
      %v3562 = vpop.f32.mrb[0].mxu0
      %3563 = vmatprep.mubr.f32.mxu0 0.0
      %3564 = vmatmul.mubr.f32.gmra.mrb[0].mxu0 %v3396
      %v3565 = vpop.f32.mrb[0].mxu0
      %v3566 = vadd.f32 %v1195, %v3565
      %v3567 = vpop.f32.mrb[0].mxu0
      %3568 = vmatprep.mubr.f32.mxu0 0.0
      %3569 = vmatmul.mubr.f32.gmra.mrb[0].mxu0 %v3399
      %v3570 = vpop.f32.mrb[0].mxu0
      %v3571 = vadd.f32 %v1195, %v3570
      %v3572 = vpop.f32.mrb[0].mxu0
      %3573 = vmatprep.mubr.f32.mxu0 0.0
      %3574 = vmatmul.mubr.f32.gmra.mrb[0].mxu0 %v3402
      %v3575 = vpop.f32.mrb[0].mxu0
      %v3576 = vadd.f32 %v1195, %v3575
      %v3577 = vpop.f32.mrb[0].mxu0
      %3578 = vmatprep.mubr.f32.mxu0 0.0
      %3579 = vmatmul.mubr.f32.gmra.mrb[0].mxu0 %v3405
      %v3580 = vpop.f32.mrb[0].mxu0
      %v3581 = vadd.f32 %v1195, %v3580
      %v3582 = vpop.f32.mrb[0].mxu0
      %3583 = vmatprep.mubr.f32.mxu0 0.0
      %3584 = vmatmul.mubr.f32.gmra.mrb[0].mxu0 %v3408
      %v3585 = vpop.f32.mrb[0].mxu0
      %v3586 = vadd.f32 %v1195, %v3585
      %v3587 = vpop.f32.mrb[0].mxu0
      %3588 = vmatprep.mubr.f32.mxu0 0.0
      %3589 = vmatmul.mubr.f32.gmra.mrb[0].mxu0 %v3411
      %v3590 = vpop.f32.mrb[0].mxu0
      %v3591 = vadd.f32 %v1195, %v3590
      %v3592 = vpop.f32.mrb[0].mxu0
      %3593 = vmatprep.mubr.f32.mxu0 0.0
      %3594 = vmatmul.mubr.f32.gmra.mrb[0].mxu0 %v3414
      %v3595 = vpop.f32.mrb[0].mxu0
      %v3596 = vadd.f32 %v1195, %v3595
      %v3597 = vpop.f32.mrb[0].mxu0
      %3598 = vmatprep.mubr.f32.mxu0 0.0
      %3599 = vmatmul.mubr.f32.gmra.mrb[0].mxu0 %v3417
      %v3600 = vpop.f32.mrb[0].mxu0
      %v3601 = vadd.f32 %v1195, %v3600
      %v3602 = vpop.f32.mrb[0].mxu0
      %3603 = vmatprep.mubr.f32.mxu0 0.0
      %3604 = vmatmul.mubr.f32.gmra.mrb[0].mxu0 %v3420
      %v3605 = vpop.f32.mrb[0].mxu0
      %v3606 = vadd.f32 %v1195, %v3605
      %v3607 = vpop.f32.mrb[0].mxu0
      %3608 = vmatprep.mubr.f32.mxu0 0.0
      %3609 = vmatmul.mubr.f32.gmra.mrb[0].mxu0 %v3423
      %v3610 = vpop.f32.mrb[0].mxu0
      %v3611 = vadd.f32 %v1195, %v3610
      %v3612 = vpop.f32.mrb[0].mxu0
      %3613 = vmatprep.mubr.f32.mxu0 0.0
      %3614 = vmatmul.mubr.f32.gmra.mrb[0].mxu0 %v3426
      %v3615 = vpop.f32.mrb[0].mxu0
      %v3616 = vadd.f32 %v1195, %v3615
      %v3617 = vpop.f32.mrb[0].mxu0
      %3618 = vmatprep.mubr.f32.mxu0 0.0
      %3619 = vmatmul.mubr.f32.gmra.mrb[0].mxu0 %v3429
      %v3620 = vpop.f32.mrb[0].mxu0
      %v3621 = vadd.f32 %v1195, %v3620
      %v3622 = vpop.f32.mrb[0].mxu0
      %3623 = vmatprep.mubr.f32.mxu0 0.0
      %3624 = vmatmul.mubr.f32.gmra.mrb[0].mxu0 %v3432
      %v3625 = vpop.f32.mrb[0].mxu0
      %v3626 = vadd.f32 %v1195, %v3625
      %v3627 = vpop.f32.mrb[0].mxu0
      %3628 = vmatprep.mubr.f32.mxu0 0.0
      %3629 = vmatmul.mubr.f32.gmra.mrb[0].mxu0 %v3435
      %v3630 = vpop.f32.mrb[0].mxu0
      %v3631 = vadd.f32 %v1195, %v3630
      %v3632 = vpop.f32.mrb[0].mxu0
      %3633 = vmatprep.mubr.f32.mxu0 0.0
      %3634 = vmatmul.mubr.f32.gmra.mrb[0].mxu0 %v3438
      %v3635 = vpop.f32.mrb[0].mxu0
      %v3636 = vadd.f32 %v1195, %v3635
      %v3637 = vpop.f32.mrb[0].mxu0
      %3638 = vmatprep.mubr.f32.mxu0 0.0
      %3639 = vmatmul.mubr.f32.gmra.mrb[0].mxu0 %v3441
      %v3640 = vpop.f32.mrb[0].mxu0
      %v3641 = vadd.f32 %v1195, %v3640
      %v3642 = vpop.f32.mrb[0].mxu0
      %3643 = vmatprep.mubr.f32.mxu0 0.0
      %3644 = vmatmul.mubr.f32.gmra.mrb[0].mxu0 %v3444
      %v3645 = vpop.f32.mrb[0].mxu0
      %v3646 = vadd.f32 %v1195, %v3645
      %v3647 = vpop.f32.mrb[0].mxu0
      %3648 = vmatprep.mubr.f32.mxu0 0.0
      %3649 = vmatmul.mubr.f32.gmra.mrb[0].mxu0 %v3447
      %v3650 = vpop.f32.mrb[0].mxu0
      %v3651 = vadd.f32 %v1195, %v3650
      %v3652 = vpop.f32.mrb[0].mxu0
      %3653 = vmatprep.mubr.f32.mxu0 0.0
      %3654 = vmatmul.mubr.f32.gmra.mrb[0].mxu0 %v3450
      %v3655 = vpop.f32.mrb[0].mxu0
      %v3656 = vadd.f32 %v1195, %v3655
      %v3657 = vpop.f32.mrb[0].mxu0
      %3658 = vmatprep.mubr.f32.mxu0 0.0
      %3659 = vmatmul.mubr.f32.gmra.mrb[0].mxu0 %v3453
      %v3660 = vpop.f32.mrb[0].mxu0
      %v3661 = vadd.f32 %v1195, %v3660
      %v3662 = vpop.f32.mrb[0].mxu0
      %3663 = vmatprep.mubr.f32.mxu0 0.0
      %3664 = vmatmul.mubr.f32.gmra.mrb[0].mxu0 %v3456
      %v3665 = vpop.f32.mrb[0].mxu0
      %v3666 = vadd.f32 %v1195, %v3665
      %v3667 = vpop.f32.mrb[0].mxu0
      %3668 = vmatprep.mubr.f32.mxu0 0.0
      %3669 = vmatmul.mubr.f32.gmra.mrb[0].mxu0 %v3459
      %v3670 = vpop.f32.mrb[0].mxu0
      %v3671 = vadd.f32 %v1195, %v3670
      %v3672 = vpop.f32.mrb[0].mxu0
      %3673 = vmatprep.mubr.f32.mxu0 0.0
      %3674 = vmatmul.mubr.f32.gmra.mrb[0].mxu0 %v3462
      %v3675 = vpop.f32.mrb[0].mxu0
      %v3676 = vadd.f32 %v1195, %v3675
      %v3677 = vpop.f32.mrb[0].mxu0
      %3678 = vmatprep.mubr.f32.mxu0 0.0
      %3679 = vmatmul.mubr.f32.gmra.mrb[0].mxu0 %v3465
      %v3680 = vpop.f32.mrb[0].mxu0
      %v3681 = vadd.f32 %v1195, %v3680
      %v3682 = vpop.f32.mrb[0].mxu0
      %3683 = vmatprep.mubr.f32.mxu0 0.0
      %3684 = vmatmul.mubr.f32.gmra.mrb[0].mxu0 %v3468
      %v3685 = vpop.f32.mrb[0].mxu0
      %v3686 = vadd.f32 %v1195, %v3685
      %v3687 = vpop.f32.mrb[0].mxu0
      %3688 = vmatprep.mubr.f32.mxu0 0.0
      %3689 = vmatmul.mubr.f32.gmra.mrb[0].mxu0 %v3471
      %v3690 = vpop.f32.mrb[0].mxu0
      %v3691 = vadd.f32 %v1195, %v3690
      %v3692 = vpop.f32.mrb[0].mxu0
      %3693 = vmatprep.mubr.f32.mxu0 0.0
      %3694 = vmatmul.mubr.f32.gmra.mrb[0].mxu0 %v3474
      %v3695 = vpop.f32.mrb[0].mxu0
      %v3696 = vadd.f32 %v1195, %v3695
      %v3697 = vpop.f32.mrb[0].mxu0
      %3698 = vmatprep.mubr.f32.mxu0 0.0
      %3699 = vmatmul.mubr.f32.gmra.mrb[0].mxu0 %v3477
      %v3700 = vpop.f32.mrb[0].mxu0
      %v3701 = vadd.f32 %v1195, %v3700
      %v3702 = vpop.f32.mrb[0].mxu0
      %3703 = vdwg.mxu0
      %s3704 = scalar_lea.vmem %s391, 16
      %3705 = vst.msk [vmem:[%s3704] sm:$0xff] %vm426, %v3546
      %3706 = vst.msk [vmem:[%s3704 + $0x8] sm:$0xff] %vm426, %v3551
      %3707 = vst.msk [vmem:[%s3704 + $0x20] sm:$0xff] %vm426, %v3556
      %3708 = vst.msk [vmem:[%s3704 + $0x28] sm:$0xff] %vm426, %v3561
      %3709 = vst.msk [vmem:[%s3704 + $0x40] sm:$0xff] %vm426, %v3566
      %3710 = vst.msk [vmem:[%s3704 + $0x48] sm:$0xff] %vm426, %v3571
      %3711 = vst.msk [vmem:[%s3704 + $0x60] sm:$0xff] %vm426, %v3576
      %3712 = vst.msk [vmem:[%s3704 + $0x68] sm:$0xff] %vm426, %v3581
      %3713 = vst.msk [vmem:[%s3704 + $0x80] sm:$0xff] %vm426, %v3586
      %3714 = vst.msk [vmem:[%s3704 + $0x88] sm:$0xff] %vm426, %v3591
      %3715 = vst.msk [vmem:[%s3704 + $0xa0] sm:$0xff] %vm426, %v3596
      %3716 = vst.msk [vmem:[%s3704 + $0xa8] sm:$0xff] %vm426, %v3601
      %3717 = vst.msk [vmem:[%s3704 + $0xc0] sm:$0xff] %vm426, %v3606
      %3718 = vst.msk [vmem:[%s3704 + $0xc8] sm:$0xff] %vm426, %v3611
      %3719 = vst.msk [vmem:[%s3704 + $0xe0] sm:$0xff] %vm426, %v3616
      %3720 = vst.msk [vmem:[%s3704 + $0xe8] sm:$0xff] %vm426, %v3621
      %3721 = vst.msk [vmem:[%s3704 + $0x100] sm:$0xff] %vm426, %v3626
      %3722 = vst.msk [vmem:[%s3704 + $0x108] sm:$0xff] %vm426, %v3631
      %3723 = vst.msk [vmem:[%s3704 + $0x120] sm:$0xff] %vm426, %v3636
      %3724 = vst.msk [vmem:[%s3704 + $0x128] sm:$0xff] %vm426, %v3641
      %3725 = vst.msk [vmem:[%s3704 + $0x140] sm:$0xff] %vm426, %v3646
      %3726 = vst.msk [vmem:[%s3704 + $0x148] sm:$0xff] %vm426, %v3651
      %3727 = vst.msk [vmem:[%s3704 + $0x160] sm:$0xff] %vm426, %v3656
      %3728 = vst.msk [vmem:[%s3704 + $0x168] sm:$0xff] %vm426, %v3661
      %3729 = vst.msk [vmem:[%s3704 + $0x180] sm:$0xff] %vm426, %v3666
      %3730 = vst.msk [vmem:[%s3704 + $0x188] sm:$0xff] %vm426, %v3671
      %3731 = vst.msk [vmem:[%s3704 + $0x1a0] sm:$0xff] %vm426, %v3676
      %3732 = vst.msk [vmem:[%s3704 + $0x1a8] sm:$0xff] %vm426, %v3681
      %3733 = vst.msk [vmem:[%s3704 + $0x1c0] sm:$0xff] %vm426, %v3686
      %3734 = vst.msk [vmem:[%s3704 + $0x1c8] sm:$0xff] %vm426, %v3691
      %3735 = vst.msk [vmem:[%s3704 + $0x1e0] sm:$0xff] %vm426, %v3696
      %3736 = vst.msk [vmem:[%s3704 + $0x1e8] sm:$0xff] %vm426, %v3701
      %v3737 = vld [vmem:[%s425 + $0x1] sm:$0xff]
      %v3738 = vld [vmem:[%s425 + $0x9] sm:$0xff]
      %v3739 = vld [vmem:[%s425 + $0x19] sm:$0xff]
      %v3740 = vld [vmem:[%s425 + $0x21] sm:$0xff]
      %v3741 = vld [vmem:[%s425 + $0x31] sm:$0xff]
      %v3742 = vld [vmem:[%s425 + $0x39] sm:$0xff]
      %v3743 = vld [vmem:[%s425 + $0x49] sm:$0xff]
      %v3744 = vld [vmem:[%s425 + $0x51] sm:$0xff]
      %v3745 = vld [vmem:[%s425 + $0x61] sm:$0xff]
      %v3746 = vld [vmem:[%s425 + $0x69] sm:$0xff]
      %v3747 = vld [vmem:[%s425 + $0x79] sm:$0xff]
      %v3748 = vld [vmem:[%s425 + $0x81] sm:$0xff]
      %v3749 = vld [vmem:[%s425 + $0x91] sm:$0xff]
      %v3750 = vld [vmem:[%s425 + $0x99] sm:$0xff]
      %v3751 = vld [vmem:[%s425 + $0xa9] sm:$0xff]
      %v3752 = vld [vmem:[%s425 + $0xb1] sm:$0xff]
      %v3753 = vld [vmem:[%s425 + $0xc1] sm:$0xff]
      %v3754 = vld [vmem:[%s425 + $0xc9] sm:$0xff]
      %v3755 = vld [vmem:[%s425 + $0xd9] sm:$0xff]
      %v3756 = vld [vmem:[%s425 + $0xe1] sm:$0xff]
      %v3757 = vld [vmem:[%s425 + $0xf1] sm:$0xff]
      %v3758 = vld [vmem:[%s425 + $0xf9] sm:$0xff]
      %v3759 = vld [vmem:[%s425 + $0x109] sm:$0xff]
      %v3760 = vld [vmem:[%s425 + $0x111] sm:$0xff]
      %v3761 = vld [vmem:[%s425 + $0x121] sm:$0xff]
      %v3762 = vld [vmem:[%s425 + $0x129] sm:$0xff]
      %v3763 = vld [vmem:[%s425 + $0x139] sm:$0xff]
      %v3764 = vld [vmem:[%s425 + $0x141] sm:$0xff]
      %v3765 = vld [vmem:[%s425 + $0x151] sm:$0xff]
      %v3766 = vld [vmem:[%s425 + $0x159] sm:$0xff]
      %v3767 = vld [vmem:[%s425 + $0x169] sm:$0xff]
      %v3768 = vld [vmem:[%s425 + $0x171] sm:$0xff]
      %3769 = vst.msk [vmem:[#allocation3] sm:$0xff] %vm426, %v3737
      %3770 = vst.msk [vmem:[#allocation3 + $0x8] sm:$0xff] %vm426, %v3738
      %3771 = vst.msk [vmem:[#allocation3 + $0x10] sm:$0xff] %vm426, %v3739
      %3772 = vst.msk [vmem:[#allocation3 + $0x18] sm:$0xff] %vm426, %v3740
      %3773 = vst.msk [vmem:[#allocation3 + $0x20] sm:$0xff] %vm426, %v3741
      %3774 = vst.msk [vmem:[#allocation3 + $0x28] sm:$0xff] %vm426, %v3742
      %3775 = vst.msk [vmem:[#allocation3 + $0x30] sm:$0xff] %vm426, %v3743
      %3776 = vst.msk [vmem:[#allocation3 + $0x38] sm:$0xff] %vm426, %v3744
      %3777 = vst.msk [vmem:[#allocation3 + $0x40] sm:$0xff] %vm426, %v3745
      %3778 = vst.msk [vmem:[#allocation3 + $0x48] sm:$0xff] %vm426, %v3746
      %3779 = vst.msk [vmem:[#allocation3 + $0x50] sm:$0xff] %vm426, %v3747
      %3780 = vst.msk [vmem:[#allocation3 + $0x58] sm:$0xff] %vm426, %v3748
      %3781 = vst.msk [vmem:[#allocation3 + $0x60] sm:$0xff] %vm426, %v3749
      %3782 = vst.msk [vmem:[#allocation3 + $0x68] sm:$0xff] %vm426, %v3750
      %3783 = vst.msk [vmem:[#allocation3 + $0x70] sm:$0xff] %vm426, %v3751
      %3784 = vst.msk [vmem:[#allocation3 + $0x78] sm:$0xff] %vm426, %v3752
      %3785 = vst.msk [vmem:[#allocation3 + $0x80] sm:$0xff] %vm426, %v3753
      %3786 = vst.msk [vmem:[#allocation3 + $0x88] sm:$0xff] %vm426, %v3754
      %3787 = vst.msk [vmem:[#allocation3 + $0x90] sm:$0xff] %vm426, %v3755
      %3788 = vst.msk [vmem:[#allocation3 + $0x98] sm:$0xff] %vm426, %v3756
      %3789 = vst.msk [vmem:[#allocation3 + $0xa0] sm:$0xff] %vm426, %v3757
      %3790 = vst.msk [vmem:[#allocation3 + $0xa8] sm:$0xff] %vm426, %v3758
      %3791 = vst.msk [vmem:[#allocation3 + $0xb0] sm:$0xff] %vm426, %v3759
      %3792 = vst.msk [vmem:[#allocation3 + $0xb8] sm:$0xff] %vm426, %v3760
      %3793 = vst.msk [vmem:[#allocation3 + $0xc0] sm:$0xff] %vm426, %v3761
      %3794 = vst.msk [vmem:[#allocation3 + $0xc8] sm:$0xff] %vm426, %v3762
      %3795 = vst.msk [vmem:[#allocation3 + $0xd0] sm:$0xff] %vm426, %v3763
      %3796 = vst.msk [vmem:[#allocation3 + $0xd8] sm:$0xff] %vm426, %v3764
      %3797 = vst.msk [vmem:[#allocation3 + $0xe0] sm:$0xff] %vm426, %v3765
      %3798 = vst.msk [vmem:[#allocation3 + $0xe8] sm:$0xff] %vm426, %v3766
      %3799 = vst.msk [vmem:[#allocation3 + $0xf0] sm:$0xff] %vm426, %v3767
      %3800 = vst.msk [vmem:[#allocation3 + $0xf8] sm:$0xff] %vm426, %v3768
      %v3801 = vld [vmem:[%s425 + $0x2] sm:$0xff]
      %v3802 = vld [vmem:[%s425 + $0xa] sm:$0xff]
      %v3803 = vld [vmem:[%s425 + $0x1a] sm:$0xff]
      %v3804 = vld [vmem:[%s425 + $0x22] sm:$0xff]
      %v3805 = vld [vmem:[%s425 + $0x32] sm:$0xff]
      %v3806 = vld [vmem:[%s425 + $0x3a] sm:$0xff]
      %v3807 = vld [vmem:[%s425 + $0x4a] sm:$0xff]
      %v3808 = vld [vmem:[%s425 + $0x52] sm:$0xff]
      %v3809 = vld [vmem:[%s425 + $0x62] sm:$0xff]
      %v3810 = vld [vmem:[%s425 + $0x6a] sm:$0xff]
      %v3811 = vld [vmem:[%s425 + $0x7a] sm:$0xff]
      %v3812 = vld [vmem:[%s425 + $0x82] sm:$0xff]
      %v3813 = vld [vmem:[%s425 + $0x92] sm:$0xff]
      %v3814 = vld [vmem:[%s425 + $0x9a] sm:$0xff]
      %v3815 = vld [vmem:[%s425 + $0xaa] sm:$0xff]
      %v3816 = vld [vmem:[%s425 + $0xb2] sm:$0xff]
      %v3817 = vld [vmem:[%s425 + $0xc2] sm:$0xff]
      %v3818 = vld [vmem:[%s425 + $0xca] sm:$0xff]
      %v3819 = vld [vmem:[%s425 + $0xda] sm:$0xff]
      %v3820 = vld [vmem:[%s425 + $0xe2] sm:$0xff]
      %v3821 = vld [vmem:[%s425 + $0xf2] sm:$0xff]
      %v3822 = vld [vmem:[%s425 + $0xfa] sm:$0xff]
      %v3823 = vld [vmem:[%s425 + $0x10a] sm:$0xff]
      %v3824 = vld [vmem:[%s425 + $0x112] sm:$0xff]
      %v3825 = vld [vmem:[%s425 + $0x122] sm:$0xff]
      %v3826 = vld [vmem:[%s425 + $0x12a] sm:$0xff]
      %v3827 = vld [vmem:[%s425 + $0x13a] sm:$0xff]
      %v3828 = vld [vmem:[%s425 + $0x142] sm:$0xff]
      %v3829 = vld [vmem:[%s425 + $0x152] sm:$0xff]
      %v3830 = vld [vmem:[%s425 + $0x15a] sm:$0xff]
      %v3831 = vld [vmem:[%s425 + $0x16a] sm:$0xff]
      %v3832 = vld [vmem:[%s425 + $0x172] sm:$0xff]
      %3865 = vrot.lane.b32.xlu0 %v3801, 4
      %v3866 = vpop.permute.xlu0 %3865
      %3867 = vrot.lane.b32.xlu0 %v3802, 4
      %v3868 = vpop.permute.xlu0 %3867
      %3869 = vrot.lane.b32.xlu0 %v3803, 4
      %v3870 = vpop.permute.xlu0 %3869
      %3871 = vrot.lane.b32.xlu0 %v3804, 4
      %v3872 = vpop.permute.xlu0 %3871
      %3873 = vrot.lane.b32.xlu0 %v3805, 4
      %v3874 = vpop.permute.xlu0 %3873
      %3875 = vrot.lane.b32.xlu0 %v3806, 4
      %v3876 = vpop.permute.xlu0 %3875
      %3877 = vrot.lane.b32.xlu0 %v3807, 4
      %v3878 = vpop.permute.xlu0 %3877
      %3879 = vrot.lane.b32.xlu0 %v3808, 4
      %v3880 = vpop.permute.xlu0 %3879
      %3881 = vrot.lane.b32.xlu0 %v3809, 4
      %v3882 = vpop.permute.xlu0 %3881
      %3883 = vrot.lane.b32.xlu0 %v3810, 4
      %v3884 = vpop.permute.xlu0 %3883
      %3885 = vrot.lane.b32.xlu0 %v3811, 4
      %v3886 = vpop.permute.xlu0 %3885
      %3887 = vrot.lane.b32.xlu0 %v3812, 4
      %v3888 = vpop.permute.xlu0 %3887
      %3889 = vrot.lane.b32.xlu0 %v3813, 4
      %v3890 = vpop.permute.xlu0 %3889
      %3891 = vrot.lane.b32.xlu0 %v3814, 4
      %v3892 = vpop.permute.xlu0 %3891
      %3893 = vrot.lane.b32.xlu0 %v3815, 4
      %v3894 = vpop.permute.xlu0 %3893
      %3895 = vrot.lane.b32.xlu0 %v3816, 4
      %v3896 = vpop.permute.xlu0 %3895
      %3897 = vrot.lane.b32.xlu0 %v3817, 4
      %v3898 = vpop.permute.xlu0 %3897
      %3899 = vrot.lane.b32.xlu0 %v3818, 4
      %v3900 = vpop.permute.xlu0 %3899
      %3901 = vrot.lane.b32.xlu0 %v3819, 4
      %v3902 = vpop.permute.xlu0 %3901
      %3903 = vrot.lane.b32.xlu0 %v3820, 4
      %v3904 = vpop.permute.xlu0 %3903
      %3905 = vrot.lane.b32.xlu0 %v3821, 4
      %v3906 = vpop.permute.xlu0 %3905
      %3907 = vrot.lane.b32.xlu0 %v3822, 4
      %v3908 = vpop.permute.xlu0 %3907
      %3909 = vrot.lane.b32.xlu0 %v3823, 4
      %v3910 = vpop.permute.xlu0 %3909
      %3911 = vrot.lane.b32.xlu0 %v3824, 4
      %v3912 = vpop.permute.xlu0 %3911
      %3913 = vrot.lane.b32.xlu0 %v3825, 4
      %v3914 = vpop.permute.xlu0 %3913
      %3915 = vrot.lane.b32.xlu0 %v3826, 4
      %v3916 = vpop.permute.xlu0 %3915
      %3917 = vrot.lane.b32.xlu0 %v3827, 4
      %v3918 = vpop.permute.xlu0 %3917
      %3919 = vrot.lane.b32.xlu0 %v3828, 4
      %v3920 = vpop.permute.xlu0 %3919
      %3921 = vrot.lane.b32.xlu0 %v3829, 4
      %v3922 = vpop.permute.xlu0 %3921
      %3923 = vrot.lane.b32.xlu0 %v3830, 4
      %v3924 = vpop.permute.xlu0 %3923
      %3925 = vrot.lane.b32.xlu0 %v3831, 4
      %v3926 = vpop.permute.xlu0 %3925
      %3927 = vrot.lane.b32.xlu0 %v3832, 4
      %v3928 = vpop.permute.xlu0 %3927
      %3961 = vst.msk [vmem:[#allocation3] sm:$0xff] %vm738, %v3866
      %3962 = vst.msk [vmem:[#allocation3 + $0x8] sm:$0xff] %vm738, %v3868
      %3963 = vst.msk [vmem:[#allocation3 + $0x10] sm:$0xff] %vm738, %v3870
      %3964 = vst.msk [vmem:[#allocation3 + $0x18] sm:$0xff] %vm738, %v3872
      %3965 = vst.msk [vmem:[#allocation3 + $0x20] sm:$0xff] %vm738, %v3874
      %3966 = vst.msk [vmem:[#allocation3 + $0x28] sm:$0xff] %vm738, %v3876
      %3967 = vst.msk [vmem:[#allocation3 + $0x30] sm:$0xff] %vm738, %v3878
      %3968 = vst.msk [vmem:[#allocation3 + $0x38] sm:$0xff] %vm738, %v3880
      %3969 = vst.msk [vmem:[#allocation3 + $0x40] sm:$0xff] %vm738, %v3882
      %3970 = vst.msk [vmem:[#allocation3 + $0x48] sm:$0xff] %vm738, %v3884
      %3971 = vst.msk [vmem:[#allocation3 + $0x50] sm:$0xff] %vm738, %v3886
      %3972 = vst.msk [vmem:[#allocation3 + $0x58] sm:$0xff] %vm738, %v3888
      %3973 = vst.msk [vmem:[#allocation3 + $0x60] sm:$0xff] %vm738, %v3890
      %3974 = vst.msk [vmem:[#allocation3 + $0x68] sm:$0xff] %vm738, %v3892
      %3975 = vst.msk [vmem:[#allocation3 + $0x70] sm:$0xff] %vm738, %v3894
      %3976 = vst.msk [vmem:[#allocation3 + $0x78] sm:$0xff] %vm738, %v3896
      %3977 = vst.msk [vmem:[#allocation3 + $0x80] sm:$0xff] %vm738, %v3898
      %3978 = vst.msk [vmem:[#allocation3 + $0x88] sm:$0xff] %vm738, %v3900
      %3979 = vst.msk [vmem:[#allocation3 + $0x90] sm:$0xff] %vm738, %v3902
      %3980 = vst.msk [vmem:[#allocation3 + $0x98] sm:$0xff] %vm738, %v3904
      %3981 = vst.msk [vmem:[#allocation3 + $0xa0] sm:$0xff] %vm738, %v3906
      %3982 = vst.msk [vmem:[#allocation3 + $0xa8] sm:$0xff] %vm738, %v3908
      %3983 = vst.msk [vmem:[#allocation3 + $0xb0] sm:$0xff] %vm738, %v3910
      %3984 = vst.msk [vmem:[#allocation3 + $0xb8] sm:$0xff] %vm738, %v3912
      %3985 = vst.msk [vmem:[#allocation3 + $0xc0] sm:$0xff] %vm738, %v3914
      %3986 = vst.msk [vmem:[#allocation3 + $0xc8] sm:$0xff] %vm738, %v3916
      %3987 = vst.msk [vmem:[#allocation3 + $0xd0] sm:$0xff] %vm738, %v3918
      %3988 = vst.msk [vmem:[#allocation3 + $0xd8] sm:$0xff] %vm738, %v3920
      %3989 = vst.msk [vmem:[#allocation3 + $0xe0] sm:$0xff] %vm738, %v3922
      %3990 = vst.msk [vmem:[#allocation3 + $0xe8] sm:$0xff] %vm738, %v3924
      %3991 = vst.msk [vmem:[#allocation3 + $0xf0] sm:$0xff] %vm738, %v3926
      %3992 = vst.msk [vmem:[#allocation3 + $0xf8] sm:$0xff] %vm738, %v3928
      %v3993 = vld [vmem:[%s2963 + $0x1] sm:$0xff]
      %v3994 = vld [vmem:[%s2963 + $0x9] sm:$0xff]
      %v3995 = vld [vmem:[%s2963 + $0x19] sm:$0xff]
      %v3996 = vld [vmem:[%s2963 + $0x21] sm:$0xff]
      %v3997 = vld [vmem:[%s2963 + $0x31] sm:$0xff]
      %v3998 = vld [vmem:[%s2963 + $0x39] sm:$0xff]
      %v3999 = vld [vmem:[%s2963 + $0x49] sm:$0xff]
      %v4000 = vld [vmem:[%s2963 + $0x51] sm:$0xff]
      %v4001 = vld [vmem:[%s2963 + $0x61] sm:$0xff]
      %v4002 = vld [vmem:[%s2963 + $0x69] sm:$0xff]
      %v4003 = vld [vmem:[%s2963 + $0x79] sm:$0xff]
      %v4004 = vld [vmem:[%s2963 + $0x81] sm:$0xff]
      %v4005 = vld [vmem:[%s2963 + $0x91] sm:$0xff]
      %v4006 = vld [vmem:[%s2963 + $0x99] sm:$0xff]
      %v4007 = vld [vmem:[%s2963 + $0xa9] sm:$0xff]
      %v4008 = vld [vmem:[%s2963 + $0xb1] sm:$0xff]
      %v4009 = vld [vmem:[%s2963 + $0xc1] sm:$0xff]
      %v4010 = vld [vmem:[%s2963 + $0xc9] sm:$0xff]
      %v4011 = vld [vmem:[%s2963 + $0xd9] sm:$0xff]
      %v4012 = vld [vmem:[%s2963 + $0xe1] sm:$0xff]
      %v4013 = vld [vmem:[%s2963 + $0xf1] sm:$0xff]
      %v4014 = vld [vmem:[%s2963 + $0xf9] sm:$0xff]
      %v4015 = vld [vmem:[%s2963 + $0x109] sm:$0xff]
      %v4016 = vld [vmem:[%s2963 + $0x111] sm:$0xff]
      %v4017 = vld [vmem:[%s2963 + $0x121] sm:$0xff]
      %v4018 = vld [vmem:[%s2963 + $0x129] sm:$0xff]
      %v4019 = vld [vmem:[%s2963 + $0x139] sm:$0xff]
      %v4020 = vld [vmem:[%s2963 + $0x141] sm:$0xff]
      %v4021 = vld [vmem:[%s2963 + $0x151] sm:$0xff]
      %v4022 = vld [vmem:[%s2963 + $0x159] sm:$0xff]
      %v4023 = vld [vmem:[%s2963 + $0x169] sm:$0xff]
      %v4024 = vld [vmem:[%s2963 + $0x171] sm:$0xff]
      %4057 = vrot.lane.b32.xlu0 %v3993, 8
      %v4058 = vpop.permute.xlu0 %4057
      %4059 = vrot.lane.b32.xlu0 %v3994, 8
      %v4060 = vpop.permute.xlu0 %4059
      %4061 = vrot.lane.b32.xlu0 %v3995, 8
      %v4062 = vpop.permute.xlu0 %4061
      %4063 = vrot.lane.b32.xlu0 %v3996, 8
      %v4064 = vpop.permute.xlu0 %4063
      %4065 = vrot.lane.b32.xlu0 %v3997, 8
      %v4066 = vpop.permute.xlu0 %4065
      %4067 = vrot.lane.b32.xlu0 %v3998, 8
      %v4068 = vpop.permute.xlu0 %4067
      %4069 = vrot.lane.b32.xlu0 %v3999, 8
      %v4070 = vpop.permute.xlu0 %4069
      %4071 = vrot.lane.b32.xlu0 %v4000, 8
      %v4072 = vpop.permute.xlu0 %4071
      %4073 = vrot.lane.b32.xlu0 %v4001, 8
      %v4074 = vpop.permute.xlu0 %4073
      %4075 = vrot.lane.b32.xlu0 %v4002, 8
      %v4076 = vpop.permute.xlu0 %4075
      %4077 = vrot.lane.b32.xlu0 %v4003, 8
      %v4078 = vpop.permute.xlu0 %4077
      %4079 = vrot.lane.b32.xlu0 %v4004, 8
      %v4080 = vpop.permute.xlu0 %4079
      %4081 = vrot.lane.b32.xlu0 %v4005, 8
      %v4082 = vpop.permute.xlu0 %4081
      %4083 = vrot.lane.b32.xlu0 %v4006, 8
      %v4084 = vpop.permute.xlu0 %4083
      %4085 = vrot.lane.b32.xlu0 %v4007, 8
      %v4086 = vpop.permute.xlu0 %4085
      %4087 = vrot.lane.b32.xlu0 %v4008, 8
      %v4088 = vpop.permute.xlu0 %4087
      %4089 = vrot.lane.b32.xlu0 %v4009, 8
      %v4090 = vpop.permute.xlu0 %4089
      %4091 = vrot.lane.b32.xlu0 %v4010, 8
      %v4092 = vpop.permute.xlu0 %4091
      %4093 = vrot.lane.b32.xlu0 %v4011, 8
      %v4094 = vpop.permute.xlu0 %4093
      %4095 = vrot.lane.b32.xlu0 %v4012, 8
      %v4096 = vpop.permute.xlu0 %4095
      %4097 = vrot.lane.b32.xlu0 %v4013, 8
      %v4098 = vpop.permute.xlu0 %4097
      %4099 = vrot.lane.b32.xlu0 %v4014, 8
      %v4100 = vpop.permute.xlu0 %4099
      %4101 = vrot.lane.b32.xlu0 %v4015, 8
      %v4102 = vpop.permute.xlu0 %4101
      %4103 = vrot.lane.b32.xlu0 %v4016, 8
      %v4104 = vpop.permute.xlu0 %4103
      %4105 = vrot.lane.b32.xlu0 %v4017, 8
      %v4106 = vpop.permute.xlu0 %4105
      %4107 = vrot.lane.b32.xlu0 %v4018, 8
      %v4108 = vpop.permute.xlu0 %4107
      %4109 = vrot.lane.b32.xlu0 %v4019, 8
      %v4110 = vpop.permute.xlu0 %4109
      %4111 = vrot.lane.b32.xlu0 %v4020, 8
      %v4112 = vpop.permute.xlu0 %4111
      %4113 = vrot.lane.b32.xlu0 %v4021, 8
      %v4114 = vpop.permute.xlu0 %4113
      %4115 = vrot.lane.b32.xlu0 %v4022, 8
      %v4116 = vpop.permute.xlu0 %4115
      %4117 = vrot.lane.b32.xlu0 %v4023, 8
      %v4118 = vpop.permute.xlu0 %4117
      %4119 = vrot.lane.b32.xlu0 %v4024, 8
      %v4120 = vpop.permute.xlu0 %4119
      %4153 = vst.msk [vmem:[#allocation3] sm:$0xff] %vm931, %v4058
      %4154 = vst.msk [vmem:[#allocation3 + $0x8] sm:$0xff] %vm931, %v4060
      %4155 = vst.msk [vmem:[#allocation3 + $0x10] sm:$0xff] %vm931, %v4062
      %4156 = vst.msk [vmem:[#allocation3 + $0x18] sm:$0xff] %vm931, %v4064
      %4157 = vst.msk [vmem:[#allocation3 + $0x20] sm:$0xff] %vm931, %v4066
      %4158 = vst.msk [vmem:[#allocation3 + $0x28] sm:$0xff] %vm931, %v4068
      %4159 = vst.msk [vmem:[#allocation3 + $0x30] sm:$0xff] %vm931, %v4070
      %4160 = vst.msk [vmem:[#allocation3 + $0x38] sm:$0xff] %vm931, %v4072
      %4161 = vst.msk [vmem:[#allocation3 + $0x40] sm:$0xff] %vm931, %v4074
      %4162 = vst.msk [vmem:[#allocation3 + $0x48] sm:$0xff] %vm931, %v4076
      %4163 = vst.msk [vmem:[#allocation3 + $0x50] sm:$0xff] %vm931, %v4078
      %4164 = vst.msk [vmem:[#allocation3 + $0x58] sm:$0xff] %vm931, %v4080
      %4165 = vst.msk [vmem:[#allocation3 + $0x60] sm:$0xff] %vm931, %v4082
      %4166 = vst.msk [vmem:[#allocation3 + $0x68] sm:$0xff] %vm931, %v4084
      %4167 = vst.msk [vmem:[#allocation3 + $0x70] sm:$0xff] %vm931, %v4086
      %4168 = vst.msk [vmem:[#allocation3 + $0x78] sm:$0xff] %vm931, %v4088
      %4169 = vst.msk [vmem:[#allocation3 + $0x80] sm:$0xff] %vm931, %v4090
      %4170 = vst.msk [vmem:[#allocation3 + $0x88] sm:$0xff] %vm931, %v4092
      %4171 = vst.msk [vmem:[#allocation3 + $0x90] sm:$0xff] %vm931, %v4094
      %4172 = vst.msk [vmem:[#allocation3 + $0x98] sm:$0xff] %vm931, %v4096
      %4173 = vst.msk [vmem:[#allocation3 + $0xa0] sm:$0xff] %vm931, %v4098
      %4174 = vst.msk [vmem:[#allocation3 + $0xa8] sm:$0xff] %vm931, %v4100
      %4175 = vst.msk [vmem:[#allocation3 + $0xb0] sm:$0xff] %vm931, %v4102
      %4176 = vst.msk [vmem:[#allocation3 + $0xb8] sm:$0xff] %vm931, %v4104
      %4177 = vst.msk [vmem:[#allocation3 + $0xc0] sm:$0xff] %vm931, %v4106
      %4178 = vst.msk [vmem:[#allocation3 + $0xc8] sm:$0xff] %vm931, %v4108
      %4179 = vst.msk [vmem:[#allocation3 + $0xd0] sm:$0xff] %vm931, %v4110
      %4180 = vst.msk [vmem:[#allocation3 + $0xd8] sm:$0xff] %vm931, %v4112
      %4181 = vst.msk [vmem:[#allocation3 + $0xe0] sm:$0xff] %vm931, %v4114
      %4182 = vst.msk [vmem:[#allocation3 + $0xe8] sm:$0xff] %vm931, %v4116
      %4183 = vst.msk [vmem:[#allocation3 + $0xf0] sm:$0xff] %vm931, %v4118
      %4184 = vst.msk [vmem:[#allocation3 + $0xf8] sm:$0xff] %vm931, %v4120
      %v4185 = vld [vmem:[%s2963 + $0x2] sm:$0xff]
      %v4186 = vld [vmem:[%s2963 + $0xa] sm:$0xff]
      %v4187 = vld [vmem:[%s2963 + $0x1a] sm:$0xff]
      %v4188 = vld [vmem:[%s2963 + $0x22] sm:$0xff]
      %v4189 = vld [vmem:[%s2963 + $0x32] sm:$0xff]
      %v4190 = vld [vmem:[%s2963 + $0x3a] sm:$0xff]
      %v4191 = vld [vmem:[%s2963 + $0x4a] sm:$0xff]
      %v4192 = vld [vmem:[%s2963 + $0x52] sm:$0xff]
      %v4193 = vld [vmem:[%s2963 + $0x62] sm:$0xff]
      %v4194 = vld [vmem:[%s2963 + $0x6a] sm:$0xff]
      %v4195 = vld [vmem:[%s2963 + $0x7a] sm:$0xff]
      %v4196 = vld [vmem:[%s2963 + $0x82] sm:$0xff]
      %v4197 = vld [vmem:[%s2963 + $0x92] sm:$0xff]
      %v4198 = vld [vmem:[%s2963 + $0x9a] sm:$0xff]
      %v4199 = vld [vmem:[%s2963 + $0xaa] sm:$0xff]
      %v4200 = vld [vmem:[%s2963 + $0xb2] sm:$0xff]
      %v4201 = vld [vmem:[%s2963 + $0xc2] sm:$0xff]
      %v4202 = vld [vmem:[%s2963 + $0xca] sm:$0xff]
      %v4203 = vld [vmem:[%s2963 + $0xda] sm:$0xff]
      %v4204 = vld [vmem:[%s2963 + $0xe2] sm:$0xff]
      %v4205 = vld [vmem:[%s2963 + $0xf2] sm:$0xff]
      %v4206 = vld [vmem:[%s2963 + $0xfa] sm:$0xff]
      %v4207 = vld [vmem:[%s2963 + $0x10a] sm:$0xff]
      %v4208 = vld [vmem:[%s2963 + $0x112] sm:$0xff]
      %v4209 = vld [vmem:[%s2963 + $0x122] sm:$0xff]
      %v4210 = vld [vmem:[%s2963 + $0x12a] sm:$0xff]
      %v4211 = vld [vmem:[%s2963 + $0x13a] sm:$0xff]
      %v4212 = vld [vmem:[%s2963 + $0x142] sm:$0xff]
      %v4213 = vld [vmem:[%s2963 + $0x152] sm:$0xff]
      %v4214 = vld [vmem:[%s2963 + $0x15a] sm:$0xff]
      %v4215 = vld [vmem:[%s2963 + $0x16a] sm:$0xff]
      %v4216 = vld [vmem:[%s2963 + $0x172] sm:$0xff]
      %4249 = vrot.lane.b32.xlu0 %v4185, 12
      %v4250 = vpop.permute.xlu0 %4249
      %4251 = vrot.lane.b32.xlu0 %v4186, 12
      %v4252 = vpop.permute.xlu0 %4251
      %4253 = vrot.lane.b32.xlu0 %v4187, 12
      %v4254 = vpop.permute.xlu0 %4253
      %4255 = vrot.lane.b32.xlu0 %v4188, 12
      %v4256 = vpop.permute.xlu0 %4255
      %4257 = vrot.lane.b32.xlu0 %v4189, 12
      %v4258 = vpop.permute.xlu0 %4257
      %4259 = vrot.lane.b32.xlu0 %v4190, 12
      %v4260 = vpop.permute.xlu0 %4259
      %4261 = vrot.lane.b32.xlu0 %v4191, 12
      %v4262 = vpop.permute.xlu0 %4261
      %4263 = vrot.lane.b32.xlu0 %v4192, 12
      %v4264 = vpop.permute.xlu0 %4263
      %4265 = vrot.lane.b32.xlu0 %v4193, 12
      %v4266 = vpop.permute.xlu0 %4265
      %4267 = vrot.lane.b32.xlu0 %v4194, 12
      %v4268 = vpop.permute.xlu0 %4267
      %4269 = vrot.lane.b32.xlu0 %v4195, 12
      %v4270 = vpop.permute.xlu0 %4269
      %4271 = vrot.lane.b32.xlu0 %v4196, 12
      %v4272 = vpop.permute.xlu0 %4271
      %4273 = vrot.lane.b32.xlu0 %v4197, 12
      %v4274 = vpop.permute.xlu0 %4273
      %4275 = vrot.lane.b32.xlu0 %v4198, 12
      %v4276 = vpop.permute.xlu0 %4275
      %4277 = vrot.lane.b32.xlu0 %v4199, 12
      %v4278 = vpop.permute.xlu0 %4277
      %4279 = vrot.lane.b32.xlu0 %v4200, 12
      %v4280 = vpop.permute.xlu0 %4279
      %4281 = vrot.lane.b32.xlu0 %v4201, 12
      %v4282 = vpop.permute.xlu0 %4281
      %4283 = vrot.lane.b32.xlu0 %v4202, 12
      %v4284 = vpop.permute.xlu0 %4283
      %4285 = vrot.lane.b32.xlu0 %v4203, 12
      %v4286 = vpop.permute.xlu0 %4285
      %4287 = vrot.lane.b32.xlu0 %v4204, 12
      %v4288 = vpop.permute.xlu0 %4287
      %4289 = vrot.lane.b32.xlu0 %v4205, 12
      %v4290 = vpop.permute.xlu0 %4289
      %4291 = vrot.lane.b32.xlu0 %v4206, 12
      %v4292 = vpop.permute.xlu0 %4291
      %4293 = vrot.lane.b32.xlu0 %v4207, 12
      %v4294 = vpop.permute.xlu0 %4293
      %4295 = vrot.lane.b32.xlu0 %v4208, 12
      %v4296 = vpop.permute.xlu0 %4295
      %4297 = vrot.lane.b32.xlu0 %v4209, 12
      %v4298 = vpop.permute.xlu0 %4297
      %4299 = vrot.lane.b32.xlu0 %v4210, 12
      %v4300 = vpop.permute.xlu0 %4299
      %4301 = vrot.lane.b32.xlu0 %v4211, 12
      %v4302 = vpop.permute.xlu0 %4301
      %4303 = vrot.lane.b32.xlu0 %v4212, 12
      %v4304 = vpop.permute.xlu0 %4303
      %4305 = vrot.lane.b32.xlu0 %v4213, 12
      %v4306 = vpop.permute.xlu0 %4305
      %4307 = vrot.lane.b32.xlu0 %v4214, 12
      %v4308 = vpop.permute.xlu0 %4307
      %4309 = vrot.lane.b32.xlu0 %v4215, 12
      %v4310 = vpop.permute.xlu0 %4309
      %4311 = vrot.lane.b32.xlu0 %v4216, 12
      %v4312 = vpop.permute.xlu0 %4311
      %4345 = vst.msk [vmem:[#allocation3] sm:$0xff] %vm1124, %v4250
      %4346 = vst.msk [vmem:[#allocation3 + $0x8] sm:$0xff] %vm1124, %v4252
      %4347 = vst.msk [vmem:[#allocation3 + $0x10] sm:$0xff] %vm1124, %v4254
      %4348 = vst.msk [vmem:[#allocation3 + $0x18] sm:$0xff] %vm1124, %v4256
      %4349 = vst.msk [vmem:[#allocation3 + $0x20] sm:$0xff] %vm1124, %v4258
      %4350 = vst.msk [vmem:[#allocation3 + $0x28] sm:$0xff] %vm1124, %v4260
      %4351 = vst.msk [vmem:[#allocation3 + $0x30] sm:$0xff] %vm1124, %v4262
      %4352 = vst.msk [vmem:[#allocation3 + $0x38] sm:$0xff] %vm1124, %v4264
      %4353 = vst.msk [vmem:[#allocation3 + $0x40] sm:$0xff] %vm1124, %v4266
      %4354 = vst.msk [vmem:[#allocation3 + $0x48] sm:$0xff] %vm1124, %v4268
      %4355 = vst.msk [vmem:[#allocation3 + $0x50] sm:$0xff] %vm1124, %v4270
      %4356 = vst.msk [vmem:[#allocation3 + $0x58] sm:$0xff] %vm1124, %v4272
      %4357 = vst.msk [vmem:[#allocation3 + $0x60] sm:$0xff] %vm1124, %v4274
      %4358 = vst.msk [vmem:[#allocation3 + $0x68] sm:$0xff] %vm1124, %v4276
      %4359 = vst.msk [vmem:[#allocation3 + $0x70] sm:$0xff] %vm1124, %v4278
      %4360 = vst.msk [vmem:[#allocation3 + $0x78] sm:$0xff] %vm1124, %v4280
      %4361 = vst.msk [vmem:[#allocation3 + $0x80] sm:$0xff] %vm1124, %v4282
      %4362 = vst.msk [vmem:[#allocation3 + $0x88] sm:$0xff] %vm1124, %v4284
      %4363 = vst.msk [vmem:[#allocation3 + $0x90] sm:$0xff] %vm1124, %v4286
      %4364 = vst.msk [vmem:[#allocation3 + $0x98] sm:$0xff] %vm1124, %v4288
      %4365 = vst.msk [vmem:[#allocation3 + $0xa0] sm:$0xff] %vm1124, %v4290
      %4366 = vst.msk [vmem:[#allocation3 + $0xa8] sm:$0xff] %vm1124, %v4292
      %4367 = vst.msk [vmem:[#allocation3 + $0xb0] sm:$0xff] %vm1124, %v4294
      %4368 = vst.msk [vmem:[#allocation3 + $0xb8] sm:$0xff] %vm1124, %v4296
      %4369 = vst.msk [vmem:[#allocation3 + $0xc0] sm:$0xff] %vm1124, %v4298
      %4370 = vst.msk [vmem:[#allocation3 + $0xc8] sm:$0xff] %vm1124, %v4300
      %4371 = vst.msk [vmem:[#allocation3 + $0xd0] sm:$0xff] %vm1124, %v4302
      %4372 = vst.msk [vmem:[#allocation3 + $0xd8] sm:$0xff] %vm1124, %v4304
      %4373 = vst.msk [vmem:[#allocation3 + $0xe0] sm:$0xff] %vm1124, %v4306
      %4374 = vst.msk [vmem:[#allocation3 + $0xe8] sm:$0xff] %vm1124, %v4308
      %4375 = vst.msk [vmem:[#allocation3 + $0xf0] sm:$0xff] %vm1124, %v4310
      %4376 = vst.msk [vmem:[#allocation3 + $0xf8] sm:$0xff] %vm1124, %v4312
      %v4377 = vld [vmem:[#allocation3] sm:$0xff]
      %v4378 = vld [vmem:[#allocation3 + $0x8] sm:$0xff]
      %v4379 = vld [vmem:[#allocation3 + $0x10] sm:$0xff]
      %v4380 = vld [vmem:[#allocation3 + $0x18] sm:$0xff]
      %v4381 = vld [vmem:[#allocation3 + $0x20] sm:$0xff]
      %v4382 = vld [vmem:[#allocation3 + $0x28] sm:$0xff]
      %v4383 = vld [vmem:[#allocation3 + $0x30] sm:$0xff]
      %v4384 = vld [vmem:[#allocation3 + $0x38] sm:$0xff]
      %v4385 = vld [vmem:[#allocation3 + $0x40] sm:$0xff]
      %v4386 = vld [vmem:[#allocation3 + $0x48] sm:$0xff]
      %v4387 = vld [vmem:[#allocation3 + $0x50] sm:$0xff]
      %v4388 = vld [vmem:[#allocation3 + $0x58] sm:$0xff]
      %v4389 = vld [vmem:[#allocation3 + $0x60] sm:$0xff]
      %v4390 = vld [vmem:[#allocation3 + $0x68] sm:$0xff]
      %v4391 = vld [vmem:[#allocation3 + $0x70] sm:$0xff]
      %v4392 = vld [vmem:[#allocation3 + $0x78] sm:$0xff]
      %v4393 = vld [vmem:[#allocation3 + $0x80] sm:$0xff]
      %v4394 = vld [vmem:[#allocation3 + $0x88] sm:$0xff]
      %v4395 = vld [vmem:[#allocation3 + $0x90] sm:$0xff]
      %v4396 = vld [vmem:[#allocation3 + $0x98] sm:$0xff]
      %v4397 = vld [vmem:[#allocation3 + $0xa0] sm:$0xff]
      %v4398 = vld [vmem:[#allocation3 + $0xa8] sm:$0xff]
      %v4399 = vld [vmem:[#allocation3 + $0xb0] sm:$0xff]
      %v4400 = vld [vmem:[#allocation3 + $0xb8] sm:$0xff]
      %v4401 = vld [vmem:[#allocation3 + $0xc0] sm:$0xff]
      %v4402 = vld [vmem:[#allocation3 + $0xc8] sm:$0xff]
      %v4403 = vld [vmem:[#allocation3 + $0xd0] sm:$0xff]
      %v4404 = vld [vmem:[#allocation3 + $0xd8] sm:$0xff]
      %v4405 = vld [vmem:[#allocation3 + $0xe0] sm:$0xff]
      %v4406 = vld [vmem:[#allocation3 + $0xe8] sm:$0xff]
      %v4407 = vld [vmem:[#allocation3 + $0xf0] sm:$0xff]
      %v4408 = vld [vmem:[#allocation3 + $0xf8] sm:$0xff]
      %s4409 = scalar_lea.vmem %s3, 48
      %v4410 = vld [vmem:[%s4409] sm:$0xff]
      %v4411 = vld [vmem:[%s4409 + $0x8] sm:$0xff]
      %v4413 = vsel %vm1197, %v4377, 0
      %v4416 = vsel %vm1197, %v4378, 0
      %v4419 = vsel %vm1197, %v4379, 0
      %v4422 = vsel %vm1197, %v4380, 0
      %v4425 = vsel %vm1197, %v4381, 0
      %v4428 = vsel %vm1197, %v4382, 0
      %v4431 = vsel %vm1197, %v4383, 0
      %v4434 = vsel %vm1197, %v4384, 0
      %v4437 = vsel %vm1197, %v4385, 0
      %v4440 = vsel %vm1197, %v4386, 0
      %v4443 = vsel %vm1197, %v4387, 0
      %v4446 = vsel %vm1197, %v4388, 0
      %v4449 = vsel %vm1197, %v4389, 0
      %v4452 = vsel %vm1197, %v4390, 0
      %v4455 = vsel %vm1197, %v4391, 0
      %v4458 = vsel %vm1197, %v4392, 0
      %v4461 = vsel %vm1197, %v4393, 0
      %v4464 = vsel %vm1197, %v4394, 0
      %v4467 = vsel %vm1197, %v4395, 0
      %v4470 = vsel %vm1197, %v4396, 0
      %v4473 = vsel %vm1197, %v4397, 0
      %v4476 = vsel %vm1197, %v4398, 0
      %v4479 = vsel %vm1197, %v4399, 0
      %v4482 = vsel %vm1197, %v4400, 0
      %v4485 = vsel %vm1197, %v4401, 0
      %v4488 = vsel %vm1197, %v4402, 0
      %v4491 = vsel %vm1197, %v4403, 0
      %v4494 = vsel %vm1197, %v4404, 0
      %v4497 = vsel %vm1197, %v4405, 0
      %v4500 = vsel %vm1197, %v4406, 0
      %v4503 = vsel %vm1197, %v4407, 0
      %v4506 = vsel %vm1197, %v4408, 0
      %4508 = vmatprep.subr.mxu0 0.0
      %4509 = vmatpush1.msra.mxu0 %v4410
      %4510 = vmatprep.subr.mxu0 0.0
      %4511 = vmatpush1.msra.mxu0 %v4411
      %4512 = vmatprep.subr.mxu0 0.0
      %4513 = vmatpush1.msra.mxu0 0.0
      %4514 = vmatprep.subr.mxu0 0.0
      %4515 = vmatpush1.msra.mxu0 0.0
      %4516 = vmatprep.subr.mxu0 0.0
      %4517 = vmatpush1.msra.mxu0 0.0
      %4518 = vmatprep.subr.mxu0 0.0
      %4519 = vmatpush1.msra.mxu0 0.0
      %4520 = vmatprep.subr.mxu0 0.0
      %4521 = vmatpush1.msra.mxu0 0.0
      %4522 = vmatprep.subr.mxu0 0.0
      %4523 = vmatpush1.msra.mxu0 0.0
      %4524 = vmatprep.subr.mxu0 0.0
      %4525 = vmatpush1.msra.mxu0 0.0
      %4526 = vmatprep.subr.mxu0 0.0
      %4527 = vmatpush1.msra.mxu0 0.0
      %4528 = vmatprep.subr.mxu0 0.0
      %4529 = vmatpush1.msra.mxu0 0.0
      %4530 = vmatprep.subr.mxu0 0.0
      %4531 = vmatpush1.msra.mxu0 0.0
      %4532 = vmatprep.subr.mxu0 0.0
      %4533 = vmatpush1.msra.mxu0 0.0
      %4534 = vmatprep.subr.mxu0 0.0
      %4535 = vmatpush1.msra.mxu0 0.0
      %4536 = vmatprep.subr.mxu0 0.0
      %4537 = vmatpush1.msra.mxu0 0.0
      %4538 = vmatprep.subr.mxu0 0.0
      %4539 = vmatpush1.msra.mxu0 0.0
      %4540 = vmatprep.subr.mxu0 0.0
      %4541 = vmatpush1.msra.mxu0 0.0
      %4542 = vmatprep.subr.mxu0 0.0
      %4543 = vmatpush1.msra.mxu0 0.0
      %4544 = vmatprep.subr.mxu0 0.0
      %4545 = vmatpush1.msra.mxu0 0.0
      %4546 = vmatprep.subr.mxu0 0.0
      %4547 = vmatpush1.msra.mxu0 0.0
      %4548 = vmatprep.subr.mxu0 0.0
      %4549 = vmatpush1.msra.mxu0 0.0
      %4550 = vmatprep.subr.mxu0 0.0
      %4551 = vmatpush1.msra.mxu0 0.0
      %4552 = vmatprep.subr.mxu0 0.0
      %4553 = vmatpush1.msra.mxu0 0.0
      %4554 = vmatprep.subr.mxu0 0.0
      %4555 = vmatpush1.msra.mxu0 0.0
      %4556 = vmatprep.subr.mxu0 0.0
      %4557 = vmatpush1.msra.mxu0 0.0
      %4558 = vmatprep.subr.mxu0 0.0
      %4559 = vmatpush1.msra.mxu0 0.0
      %4560 = vmatprep.subr.mxu0 0.0
      %4561 = vmatpush1.msra.mxu0 0.0
      %4562 = vmatprep.subr.mxu0 0.0
      %4563 = vmatpush1.msra.mxu0 0.0
      %4564 = vmatprep.subr.mxu0 0.0
      %4565 = vmatpush1.msra.mxu0 0.0
      %4566 = vmatprep.subr.mxu0 0.0
      %4567 = vmatpush1.msra.mxu0 0.0
      %4568 = vmatprep.subr.mxu0 0.0
      %4569 = vmatpush1.msra.mxu0 0.0
      %4570 = vmatprep.subr.mxu0 0.0
      %4571 = vmatpush1.msra.mxu0 0.0
      %4572 = vmatprep.mubr.f32.mxu0 0.0
      %4573 = vmatmul.mubr.f32.gmra.mrb[0].mxu0 %v4413
      %v4574 = vpop.f32.mrb[0].mxu0
      %v4575 = vadd.f32 %v1195, %v4574
      %v4576 = vpop.f32.mrb[0].mxu0
      %4577 = vmatprep.mubr.f32.mxu0 0.0
      %4578 = vmatmul.mubr.f32.gmra.mrb[0].mxu0 %v4416
      %v4579 = vpop.f32.mrb[0].mxu0
      %v4580 = vadd.f32 %v1195, %v4579
      %v4581 = vpop.f32.mrb[0].mxu0
      %4582 = vmatprep.mubr.f32.mxu0 0.0
      %4583 = vmatmul.mubr.f32.gmra.mrb[0].mxu0 %v4419
      %v4584 = vpop.f32.mrb[0].mxu0
      %v4585 = vadd.f32 %v1195, %v4584
      %v4586 = vpop.f32.mrb[0].mxu0
      %4587 = vmatprep.mubr.f32.mxu0 0.0
      %4588 = vmatmul.mubr.f32.gmra.mrb[0].mxu0 %v4422
      %v4589 = vpop.f32.mrb[0].mxu0
      %v4590 = vadd.f32 %v1195, %v4589
      %v4591 = vpop.f32.mrb[0].mxu0
      %4592 = vmatprep.mubr.f32.mxu0 0.0
      %4593 = vmatmul.mubr.f32.gmra.mrb[0].mxu0 %v4425
      %v4594 = vpop.f32.mrb[0].mxu0
      %v4595 = vadd.f32 %v1195, %v4594
      %v4596 = vpop.f32.mrb[0].mxu0
      %4597 = vmatprep.mubr.f32.mxu0 0.0
      %4598 = vmatmul.mubr.f32.gmra.mrb[0].mxu0 %v4428
      %v4599 = vpop.f32.mrb[0].mxu0
      %v4600 = vadd.f32 %v1195, %v4599
      %v4601 = vpop.f32.mrb[0].mxu0
      %4602 = vmatprep.mubr.f32.mxu0 0.0
      %4603 = vmatmul.mubr.f32.gmra.mrb[0].mxu0 %v4431
      %v4604 = vpop.f32.mrb[0].mxu0
      %v4605 = vadd.f32 %v1195, %v4604
      %v4606 = vpop.f32.mrb[0].mxu0
      %4607 = vmatprep.mubr.f32.mxu0 0.0
      %4608 = vmatmul.mubr.f32.gmra.mrb[0].mxu0 %v4434
      %v4609 = vpop.f32.mrb[0].mxu0
      %v4610 = vadd.f32 %v1195, %v4609
      %v4611 = vpop.f32.mrb[0].mxu0
      %4612 = vmatprep.mubr.f32.mxu0 0.0
      %4613 = vmatmul.mubr.f32.gmra.mrb[0].mxu0 %v4437
      %v4614 = vpop.f32.mrb[0].mxu0
      %v4615 = vadd.f32 %v1195, %v4614
      %v4616 = vpop.f32.mrb[0].mxu0
      %4617 = vmatprep.mubr.f32.mxu0 0.0
      %4618 = vmatmul.mubr.f32.gmra.mrb[0].mxu0 %v4440
      %v4619 = vpop.f32.mrb[0].mxu0
      %v4620 = vadd.f32 %v1195, %v4619
      %v4621 = vpop.f32.mrb[0].mxu0
      %4622 = vmatprep.mubr.f32.mxu0 0.0
      %4623 = vmatmul.mubr.f32.gmra.mrb[0].mxu0 %v4443
      %v4624 = vpop.f32.mrb[0].mxu0
      %v4625 = vadd.f32 %v1195, %v4624
      %v4626 = vpop.f32.mrb[0].mxu0
      %4627 = vmatprep.mubr.f32.mxu0 0.0
      %4628 = vmatmul.mubr.f32.gmra.mrb[0].mxu0 %v4446
      %v4629 = vpop.f32.mrb[0].mxu0
      %v4630 = vadd.f32 %v1195, %v4629
      %v4631 = vpop.f32.mrb[0].mxu0
      %4632 = vmatprep.mubr.f32.mxu0 0.0
      %4633 = vmatmul.mubr.f32.gmra.mrb[0].mxu0 %v4449
      %v4634 = vpop.f32.mrb[0].mxu0
      %v4635 = vadd.f32 %v1195, %v4634
      %v4636 = vpop.f32.mrb[0].mxu0
      %4637 = vmatprep.mubr.f32.mxu0 0.0
      %4638 = vmatmul.mubr.f32.gmra.mrb[0].mxu0 %v4452
      %v4639 = vpop.f32.mrb[0].mxu0
      %v4640 = vadd.f32 %v1195, %v4639
      %v4641 = vpop.f32.mrb[0].mxu0
      %4642 = vmatprep.mubr.f32.mxu0 0.0
      %4643 = vmatmul.mubr.f32.gmra.mrb[0].mxu0 %v4455
      %v4644 = vpop.f32.mrb[0].mxu0
      %v4645 = vadd.f32 %v1195, %v4644
      %v4646 = vpop.f32.mrb[0].mxu0
      %4647 = vmatprep.mubr.f32.mxu0 0.0
      %4648 = vmatmul.mubr.f32.gmra.mrb[0].mxu0 %v4458
      %v4649 = vpop.f32.mrb[0].mxu0
      %v4650 = vadd.f32 %v1195, %v4649
      %v4651 = vpop.f32.mrb[0].mxu0
      %4652 = vmatprep.mubr.f32.mxu0 0.0
      %4653 = vmatmul.mubr.f32.gmra.mrb[0].mxu0 %v4461
      %v4654 = vpop.f32.mrb[0].mxu0
      %v4655 = vadd.f32 %v1195, %v4654
      %v4656 = vpop.f32.mrb[0].mxu0
      %4657 = vmatprep.mubr.f32.mxu0 0.0
      %4658 = vmatmul.mubr.f32.gmra.mrb[0].mxu0 %v4464
      %v4659 = vpop.f32.mrb[0].mxu0
      %v4660 = vadd.f32 %v1195, %v4659
      %v4661 = vpop.f32.mrb[0].mxu0
      %4662 = vmatprep.mubr.f32.mxu0 0.0
      %4663 = vmatmul.mubr.f32.gmra.mrb[0].mxu0 %v4467
      %v4664 = vpop.f32.mrb[0].mxu0
      %v4665 = vadd.f32 %v1195, %v4664
      %v4666 = vpop.f32.mrb[0].mxu0
      %4667 = vmatprep.mubr.f32.mxu0 0.0
      %4668 = vmatmul.mubr.f32.gmra.mrb[0].mxu0 %v4470
      %v4669 = vpop.f32.mrb[0].mxu0
      %v4670 = vadd.f32 %v1195, %v4669
      %v4671 = vpop.f32.mrb[0].mxu0
      %4672 = vmatprep.mubr.f32.mxu0 0.0
      %4673 = vmatmul.mubr.f32.gmra.mrb[0].mxu0 %v4473
      %v4674 = vpop.f32.mrb[0].mxu0
      %v4675 = vadd.f32 %v1195, %v4674
      %v4676 = vpop.f32.mrb[0].mxu0
      %4677 = vmatprep.mubr.f32.mxu0 0.0
      %4678 = vmatmul.mubr.f32.gmra.mrb[0].mxu0 %v4476
      %v4679 = vpop.f32.mrb[0].mxu0
      %v4680 = vadd.f32 %v1195, %v4679
      %v4681 = vpop.f32.mrb[0].mxu0
      %4682 = vmatprep.mubr.f32.mxu0 0.0
      %4683 = vmatmul.mubr.f32.gmra.mrb[0].mxu0 %v4479
      %v4684 = vpop.f32.mrb[0].mxu0
      %v4685 = vadd.f32 %v1195, %v4684
      %v4686 = vpop.f32.mrb[0].mxu0
      %4687 = vmatprep.mubr.f32.mxu0 0.0
      %4688 = vmatmul.mubr.f32.gmra.mrb[0].mxu0 %v4482
      %v4689 = vpop.f32.mrb[0].mxu0
      %v4690 = vadd.f32 %v1195, %v4689
      %v4691 = vpop.f32.mrb[0].mxu0
      %4692 = vmatprep.mubr.f32.mxu0 0.0
      %4693 = vmatmul.mubr.f32.gmra.mrb[0].mxu0 %v4485
      %v4694 = vpop.f32.mrb[0].mxu0
      %v4695 = vadd.f32 %v1195, %v4694
      %v4696 = vpop.f32.mrb[0].mxu0
      %4697 = vmatprep.mubr.f32.mxu0 0.0
      %4698 = vmatmul.mubr.f32.gmra.mrb[0].mxu0 %v4488
      %v4699 = vpop.f32.mrb[0].mxu0
      %v4700 = vadd.f32 %v1195, %v4699
      %v4701 = vpop.f32.mrb[0].mxu0
      %4702 = vmatprep.mubr.f32.mxu0 0.0
      %4703 = vmatmul.mubr.f32.gmra.mrb[0].mxu0 %v4491
      %v4704 = vpop.f32.mrb[0].mxu0
      %v4705 = vadd.f32 %v1195, %v4704
      %v4706 = vpop.f32.mrb[0].mxu0
      %4707 = vmatprep.mubr.f32.mxu0 0.0
      %4708 = vmatmul.mubr.f32.gmra.mrb[0].mxu0 %v4494
      %v4709 = vpop.f32.mrb[0].mxu0
      %v4710 = vadd.f32 %v1195, %v4709
      %v4711 = vpop.f32.mrb[0].mxu0
      %4712 = vmatprep.mubr.f32.mxu0 0.0
      %4713 = vmatmul.mubr.f32.gmra.mrb[0].mxu0 %v4497
      %v4714 = vpop.f32.mrb[0].mxu0
      %v4715 = vadd.f32 %v1195, %v4714
      %v4716 = vpop.f32.mrb[0].mxu0
      %4717 = vmatprep.mubr.f32.mxu0 0.0
      %4718 = vmatmul.mubr.f32.gmra.mrb[0].mxu0 %v4500
      %v4719 = vpop.f32.mrb[0].mxu0
      %v4720 = vadd.f32 %v1195, %v4719
      %v4721 = vpop.f32.mrb[0].mxu0
      %4722 = vmatprep.mubr.f32.mxu0 0.0
      %4723 = vmatmul.mubr.f32.gmra.mrb[0].mxu0 %v4503
      %v4724 = vpop.f32.mrb[0].mxu0
      %v4725 = vadd.f32 %v1195, %v4724
      %v4726 = vpop.f32.mrb[0].mxu0
      %4727 = vmatprep.mubr.f32.mxu0 0.0
      %4728 = vmatmul.mubr.f32.gmra.mrb[0].mxu0 %v4506
      %v4729 = vpop.f32.mrb[0].mxu0
      %v4730 = vadd.f32 %v1195, %v4729
      %v4731 = vpop.f32.mrb[0].mxu0
      %4732 = vdwg.mxu0
      %4765 = vrot.lane.b32.xlu0 %v4575, 4
      %v4766 = vpop.permute.xlu0 %4765
      %4767 = vrot.lane.b32.xlu0 %v4580, 4
      %v4768 = vpop.permute.xlu0 %4767
      %4769 = vrot.lane.b32.xlu0 %v4585, 4
      %v4770 = vpop.permute.xlu0 %4769
      %4771 = vrot.lane.b32.xlu0 %v4590, 4
      %v4772 = vpop.permute.xlu0 %4771
      %4773 = vrot.lane.b32.xlu0 %v4595, 4
      %v4774 = vpop.permute.xlu0 %4773
      %4775 = vrot.lane.b32.xlu0 %v4600, 4
      %v4776 = vpop.permute.xlu0 %4775
      %4777 = vrot.lane.b32.xlu0 %v4605, 4
      %v4778 = vpop.permute.xlu0 %4777
      %4779 = vrot.lane.b32.xlu0 %v4610, 4
      %v4780 = vpop.permute.xlu0 %4779
      %4781 = vrot.lane.b32.xlu0 %v4615, 4
      %v4782 = vpop.permute.xlu0 %4781
      %4783 = vrot.lane.b32.xlu0 %v4620, 4
      %v4784 = vpop.permute.xlu0 %4783
      %4785 = vrot.lane.b32.xlu0 %v4625, 4
      %v4786 = vpop.permute.xlu0 %4785
      %4787 = vrot.lane.b32.xlu0 %v4630, 4
      %v4788 = vpop.permute.xlu0 %4787
      %4789 = vrot.lane.b32.xlu0 %v4635, 4
      %v4790 = vpop.permute.xlu0 %4789
      %4791 = vrot.lane.b32.xlu0 %v4640, 4
      %v4792 = vpop.permute.xlu0 %4791
      %4793 = vrot.lane.b32.xlu0 %v4645, 4
      %v4794 = vpop.permute.xlu0 %4793
      %4795 = vrot.lane.b32.xlu0 %v4650, 4
      %v4796 = vpop.permute.xlu0 %4795
      %4797 = vrot.lane.b32.xlu0 %v4655, 4
      %v4798 = vpop.permute.xlu0 %4797
      %4799 = vrot.lane.b32.xlu0 %v4660, 4
      %v4800 = vpop.permute.xlu0 %4799
      %4801 = vrot.lane.b32.xlu0 %v4665, 4
      %v4802 = vpop.permute.xlu0 %4801
      %4803 = vrot.lane.b32.xlu0 %v4670, 4
      %v4804 = vpop.permute.xlu0 %4803
      %4805 = vrot.lane.b32.xlu0 %v4675, 4
      %v4806 = vpop.permute.xlu0 %4805
      %4807 = vrot.lane.b32.xlu0 %v4680, 4
      %v4808 = vpop.permute.xlu0 %4807
      %4809 = vrot.lane.b32.xlu0 %v4685, 4
      %v4810 = vpop.permute.xlu0 %4809
      %4811 = vrot.lane.b32.xlu0 %v4690, 4
      %v4812 = vpop.permute.xlu0 %4811
      %4813 = vrot.lane.b32.xlu0 %v4695, 4
      %v4814 = vpop.permute.xlu0 %4813
      %4815 = vrot.lane.b32.xlu0 %v4700, 4
      %v4816 = vpop.permute.xlu0 %4815
      %4817 = vrot.lane.b32.xlu0 %v4705, 4
      %v4818 = vpop.permute.xlu0 %4817
      %4819 = vrot.lane.b32.xlu0 %v4710, 4
      %v4820 = vpop.permute.xlu0 %4819
      %4821 = vrot.lane.b32.xlu0 %v4715, 4
      %v4822 = vpop.permute.xlu0 %4821
      %4823 = vrot.lane.b32.xlu0 %v4720, 4
      %v4824 = vpop.permute.xlu0 %4823
      %4825 = vrot.lane.b32.xlu0 %v4725, 4
      %v4826 = vpop.permute.xlu0 %4825
      %4827 = vrot.lane.b32.xlu0 %v4730, 4
      %v4828 = vpop.permute.xlu0 %4827
      %4861 = vst.msk [vmem:[%s3704] sm:$0xff] %vm738, %v4766
      %4862 = vst.msk [vmem:[%s3704 + $0x8] sm:$0xff] %vm738, %v4768
      %4863 = vst.msk [vmem:[%s3704 + $0x20] sm:$0xff] %vm738, %v4770
      %4864 = vst.msk [vmem:[%s3704 + $0x28] sm:$0xff] %vm738, %v4772
      %4865 = vst.msk [vmem:[%s3704 + $0x40] sm:$0xff] %vm738, %v4774
      %4866 = vst.msk [vmem:[%s3704 + $0x48] sm:$0xff] %vm738, %v4776
      %4867 = vst.msk [vmem:[%s3704 + $0x60] sm:$0xff] %vm738, %v4778
      %4868 = vst.msk [vmem:[%s3704 + $0x68] sm:$0xff] %vm738, %v4780
      %4869 = vst.msk [vmem:[%s3704 + $0x80] sm:$0xff] %vm738, %v4782
      %4870 = vst.msk [vmem:[%s3704 + $0x88] sm:$0xff] %vm738, %v4784
      %4871 = vst.msk [vmem:[%s3704 + $0xa0] sm:$0xff] %vm738, %v4786
      %4872 = vst.msk [vmem:[%s3704 + $0xa8] sm:$0xff] %vm738, %v4788
      %4873 = vst.msk [vmem:[%s3704 + $0xc0] sm:$0xff] %vm738, %v4790
      %4874 = vst.msk [vmem:[%s3704 + $0xc8] sm:$0xff] %vm738, %v4792
      %4875 = vst.msk [vmem:[%s3704 + $0xe0] sm:$0xff] %vm738, %v4794
      %4876 = vst.msk [vmem:[%s3704 + $0xe8] sm:$0xff] %vm738, %v4796
      %4877 = vst.msk [vmem:[%s3704 + $0x100] sm:$0xff] %vm738, %v4798
      %4878 = vst.msk [vmem:[%s3704 + $0x108] sm:$0xff] %vm738, %v4800
      %4879 = vst.msk [vmem:[%s3704 + $0x120] sm:$0xff] %vm738, %v4802
      %4880 = vst.msk [vmem:[%s3704 + $0x128] sm:$0xff] %vm738, %v4804
      %4881 = vst.msk [vmem:[%s3704 + $0x140] sm:$0xff] %vm738, %v4806
      %4882 = vst.msk [vmem:[%s3704 + $0x148] sm:$0xff] %vm738, %v4808
      %4883 = vst.msk [vmem:[%s3704 + $0x160] sm:$0xff] %vm738, %v4810
      %4884 = vst.msk [vmem:[%s3704 + $0x168] sm:$0xff] %vm738, %v4812
      %4885 = vst.msk [vmem:[%s3704 + $0x180] sm:$0xff] %vm738, %v4814
      %4886 = vst.msk [vmem:[%s3704 + $0x188] sm:$0xff] %vm738, %v4816
      %4887 = vst.msk [vmem:[%s3704 + $0x1a0] sm:$0xff] %vm738, %v4818
      %4888 = vst.msk [vmem:[%s3704 + $0x1a8] sm:$0xff] %vm738, %v4820
      %4889 = vst.msk [vmem:[%s3704 + $0x1c0] sm:$0xff] %vm738, %v4822
      %4890 = vst.msk [vmem:[%s3704 + $0x1c8] sm:$0xff] %vm738, %v4824
      %4891 = vst.msk [vmem:[%s3704 + $0x1e0] sm:$0xff] %vm738, %v4826
      %4892 = vst.msk [vmem:[%s3704 + $0x1e8] sm:$0xff] %vm738, %v4828
      %s4893 = smul.u32 16, %s21
      %p4894 = scmp.lt.s32.totalorder %s20, 1
      %s4895 = scalar_select %p4894, %s20, 1
      %p4896 = scmp.lt.s32.totalorder %s4893, 15
      %s4897 = scalar_select %p4896, %s4893, 15
      %s4898 = smul.addr %s4897, 4
      %s4899 = smul.addr %s4895, 64
      %s4900 = sadd.s32 %s4898, %s4899
      %s4901 = smul.addr %s4900, 8
      %s4902 = scalar_lea.vmem %s5, %s4901
      // Predicated region
      $region41: #{tpu_custom_call.1} parent=39 // pred_check
        %p4903 = pneg %p190
      $region42: #{tpu_custom_call.1} parent=39 // pred_check_branch
        %4905 = sbr.rel (%p4903) target = $region44
      $region43: #{tpu_custom_call.1} parent=39 // pred_region
        %s4906 = smul.u32 16, %s21
      $region44: #{tpu_custom_call.1} parent=39 // pred_fallthru
        _
    $region40: #{tpu_custom_call.1} parent=5 // pred_fallthru
      _
    %p4907 = scmp.le.s32.totalorder 2, %s11
    // Predicated region
    $region45: #{tpu_custom_call.1} parent=5 // pred_check
      %p4908 = pneg %p4907
    $region46: #{tpu_custom_call.1} parent=5 // pred_check_branch
      %4910 = sbr.rel (%p4908) target = $region48
    $region47: #{tpu_custom_call.1} parent=5 // pred_region
      %s4911 = ssub.s32 %s11, 2
      // Predicated region
      $region49: #{tpu_custom_call.1} parent=47 // pred_check
        %p4912 = pneg %p196
      $region50: #{tpu_custom_call.1} parent=47 // pred_check_branch
        %4914 = sbr.rel (%p4912) target = $region52
      $region51: #{tpu_custom_call.1} parent=47 // pred_region
        %s4915 = smul.u32 16, %s23
        %p4916 = scmp.lt.s32.totalorder %s22, 1
        %s4917 = scalar_select %p4916, %s22, 1
        %p4918 = scmp.lt.s32.totalorder %s4915, 15
        %s4919 = scalar_select %p4918, %s4915, 15
        %s4920 = smul.addr %s4919, 4
        %s4921 = smul.addr %s4917, 64
        %s4922 = sadd.s32 %s4920, %s4921
        %s4923 = smul.addr %s4922, 8
        %s4924 = scalar_lea.vmem %s5, %s4923
      $region52: #{tpu_custom_call.1} parent=47 // pred_fallthru
        _
    $region48: #{tpu_custom_call.1} parent=5 // pred_fallthru
      _
  $region6: #{tpu_custom_call.1} parent=0 // loop_footer
    %s15 = sadd.s32 1, %s11
  $region7: #{tpu_custom_call.1} parent=0 // loop_footer_branch
    %10 = sbr.rel target = $region3
  $region8: #{tpu_custom_call.1} parent=0 // loop_exit
    _

</llo_original>
